<compile_context>
chip_gen: v7x
topology: tpu7x:2x2x1
jax: 0.10.0
libtpu: 0.0.40
codegen_flags: <defaults>
</compile_context>

<pallas_src>
import functools

import jax
import jax.numpy as jnp
from jax.experimental import pallas as pl
from jax.experimental.pallas import tpu as pltpu

_LANE = 128   # TPU lane width
_SUB = 8      # TPU sublane width


def _round_up(v, m):
    return (v + m - 1) // m * m


def _pick_graphs_per_step(batch, rows_per_graph, target_rows=256):
    """Largest divisor G of `batch` packing ~target_rows MXU rows per grid step,
    while keeping >= 2 grid steps when possible (v7x megacore = 2 TensorCores)."""
    want = max(1, -(-target_rows // rows_per_graph))           # ceil
    divisors = [d for d in range(1, batch + 1) if batch % d == 0]
    g = max([d for d in divisors if d <= want], default=1)
    if batch // g < 2:
        two_step = [d for d in divisors if batch // d >= 2]
        if two_step:
            g = max(two_step)
    return g


def _pad_cast(arr, shape, dtype):
    """Zero-pad `arr` up to `shape` and cast (pure cast when shapes already match)."""
    arr = arr.astype(dtype)
    if tuple(arr.shape) == tuple(shape):
        return arr
    out = jnp.zeros(shape, dtype)
    return out.at[tuple(slice(0, s) for s in arr.shape)].set(arr)


def _edge_gcn_v2_kernel(x_ref, adj_ref, hinc_ref,
                        wg_ref, adst_ref, asrc_ref, bg_ref,
                        we_ref, be_ref, wl_ref,
                        out_ref):
    """One grid step = G packed graphs, fully resident in VMEM.

    x_ref    : (G, Ep, F)    bf16   edge-attribute features
    adj_ref  : (G, Ep, Ep)   bf16   0/1 adjacency (dst, src) incl. self-loops
    hinc_ref : (G, Np, Ep)   bf16   node <- edge incidence matrix
    weights  : bf16 (biases f32), Hd / O padded to 128 lanes
    out_ref  : (G, Np, Op)   f32
    """
    f32, bf16 = jnp.float32, jnp.bfloat16
    G, Ep, F = x_ref.shape
    Np = hinc_ref.shape[1]
    Hd = wg_ref.shape[1]
    Op = wl_ref.shape[1]

    # ---- GATConv projection: all G graphs flattened -> one row-dense MXU pass.
    # (G,Ep,*) <-> (G*Ep,*) reshapes are layout no-ops because Ep % 8 == 0.
    x2 = x_ref[...].reshape(G * Ep, F)
    h2 = jnp.dot(x2, wg_ref[...], preferred_element_type=f32)        # (G*Ep, Hd) f32
    h2b = h2.astype(bf16)
    h3b = h2b.reshape(G, Ep, Hd)

    # Destination scores: small-N MXU pass (column 0 = a_dst), kept as a column.
    sc = jnp.dot(h2b, adst_ref[...], preferred_element_type=f32)     # (G*Ep, 8)
    d_col = sc[:, 0:1].reshape(G, Ep, 1)                             # (G, Ep, 1)

    # Source scores produced directly in lane layout (flash-style batched einsum;
    # the 8 q-rows are identical broadcast copies of a_src, so the MXU M-tile is
    # full and no per-graph transpose is needed -> XLU stays free for the softmax
    # row reductions below).
    asrc_b = jnp.broadcast_to(asrc_ref[...], (G,) + asrc_ref.shape)   # (G, 8, Hd)
    s_all = jnp.einsum('gqd,gkd->gqk', asrc_b, h3b,
                       preferred_element_type=f32)                    # (G, 8, Ep)
    s_row = s_all[:, 0:1, :]                                          # (G, 1, Ep)

    scores = d_col + s_row                                            # (G, Ep, Ep)
    scores = jnp.where(scores >= 0.0, scores, 0.2 * scores)           # leaky_relu(0.2)

    # Masked softmax over sources — kept entirely in f32. adj itself is the mask:
    # exp(-1e30 - m) underflows to exactly 0, so no post-exp mask multiply.
    # NOTE: padded entity rows (E..Ep-1) are fully masked -> p == 1 everywhere and
    # denom == Ep; their (finite, garbage) gat rows are zeroed out by the padded
    # columns of H below and never reach the output.
    # TODO(synk): for large E (v7x: 64 MiB VMEM) switch to flash-style online
    # softmax over (Ep, tk) src tiles instead of materializing (Ep, Ep) here.
    adj = adj_ref[...]
    masked = jnp.where(adj > 0, scores, jnp.full_like(scores, -1e30))
    m = jnp.max(masked, axis=2, keepdims=True)
    p = jnp.exp(masked - m)
    denom = jnp.sum(p, axis=2, keepdims=True)                         # > 0 (self-loops)

    # Un-normalized weighted sum on the MXU (bf16 operands); normalization folded
    # AFTER the matmul: one (Ep, Hd) VPU multiply instead of an (Ep, Ep) one.
    ph = jnp.einsum('gek,gkd->ged', p.astype(bf16), h3b,
                    preferred_element_type=f32)                       # (G, Ep, Hd)
    gat = ph * pl.reciprocal(denom, approx=True) + bg_ref[...].reshape(1, 1, Hd)

    # ---- EdgeToNodeConv computed as (H @ gat) @ We + be (associativity; N <= E).
    # TODO(synk): EdgeToNodeConv source not provided; assumed out = H @ (x @ W) + b.
    hg = jnp.einsum('gne,ged->gnd', hinc_ref[...], gat.astype(bf16),
                    preferred_element_type=f32)                       # (G, Np, Hd)

    # ---- Flatten graphs again for the shared-weight matmuls.
    hg2 = hg.reshape(G * Np, Hd).astype(bf16)
    etn = jnp.dot(hg2, we_ref[...], preferred_element_type=f32) + be_ref[...]
    act = jnp.where(etn >= 0.0, etn, 0.2 * etn).astype(bf16)          # leaky_relu(0.2)
    out2 = jnp.dot(act, wl_ref[...], preferred_element_type=f32)      # (G*Np, Op)
    out_ref[...] = out2.reshape(G, Np, Op)                            # lane-dense store


def prepare_params(params):
    """Pad / bf16-cast the weights ONCE (hoisted out of the per-forward jit)."""
    f32, bf16 = jnp.float32, jnp.bfloat16
    F, Hd = params["Wg"].shape
    O = params["Wl"].shape[1]
    Hdp = _round_up(Hd, _LANE)
    Op = _round_up(O, _LANE)

    a_src_rows = jnp.broadcast_to(params["a_src"][:, 0][None, :], (_SUB, Hd))
    return {
        "Wg": _pad_cast(params["Wg"], (F, Hdp), bf16),
        "a_dst": _pad_cast(params["a_dst"], (Hdp, _SUB), bf16),   # column 0 = a_dst
        "a_src": _pad_cast(a_src_rows, (_SUB, Hdp), bf16),        # 8 identical rows
        "bg": _pad_cast(params["bg"], (1, Hdp), f32),
        "We": _pad_cast(params["We"], (Hdp, Hdp), bf16),
        "be": _pad_cast(params["be"], (1, Hdp), f32),
        "Wl": _pad_cast(params["Wl"], (Hdp, Op), bf16),
    }


@functools.partial(jax.jit, static_argnums=(4,))
def edge_gcn_v2(x, adj, H, prepared, out_size):
    """Batched forward. x: (B,E,F), adj: (B,E,E), H: (B,N,E) -> (B,N,out_size)."""
    f32, bf16 = jnp.float32, jnp.bfloat16
    B, E, F = x.shape
    N = H.shape[1]
    Hdp = prepared["We"].shape[0]
    Op = prepared["Wl"].shape[1]

    Ep = _round_up(E, _SUB)
    Np = _round_up(N, _SUB)
    G = _pick_graphs_per_step(B, Ep)
    assert B % G == 0

    # Row-only padding of per-call data (feature / E-as-last dims stay at full
    # array size -> satisfies the (8,128) BlockSpec rule without 128-padding).
    # adj / H are 0/1 masks -> carried bf16 to halve the dominant DMA stream.
    xp = _pad_cast(x, (B, Ep, F), bf16)
    adjp = _pad_cast(adj, (B, Ep, Ep), bf16)
    hincp = _pad_cast(H, (B, Np, Ep), bf16)

    def per_step(shape):    # G packed graphs per grid step
        return pl.BlockSpec((G,) + shape, lambda b: (b,) + (0,) * len(shape))

    def shared(shape):      # weights: same full block every step
        return pl.BlockSpec(shape, lambda b: (0,) * len(shape))

    out_p = pl.pallas_call(
        _edge_gcn_v2_kernel,
        out_shape=jax.ShapeDtypeStruct((B, Np, Op), f32),
        grid=(B // G,),
        in_specs=[
            per_step((Ep, F)),        # x
            per_step((Ep, Ep)),       # adj
            per_step((Np, Ep)),       # H (incidence)
            shared((F, Hdp)),         # Wg
            shared((Hdp, _SUB)),      # a_dst (column 0)
            shared((_SUB, Hdp)),      # a_src (broadcast rows)
            shared((1, Hdp)),         # bg
            shared((Hdp, Hdp)),       # We
            shared((1, Hdp)),         # be
            shared((Hdp, Op)),        # Wl
        ],
        out_specs=per_step((Np, Op)),
        compiler_params=pltpu.CompilerParams(
            dimension_semantics=("parallel",),   # v7x megacore splits the 2 steps
        ),
    )(xp, adjp, hincp, prepared["Wg"], prepared["a_dst"], prepared["a_src"],
      prepared["bg"], prepared["We"], prepared["be"], prepared["Wl"])

    return out_p[:, :N, :out_size]


def _glorot(key, shape):
    fan_in, fan_out = shape[0], shape[1]
    limit = jnp.sqrt(6.0 / (fan_in + fan_out))
    return jax.random.uniform(key, shape, jnp.float32, -limit, limit)


def init_params(key, num_features, hidden_size, out_size):
    ks = jax.random.split(key, 6)
    return {
        # GATConv(num_features, hidden_size), heads=1
        "Wg": _glorot(ks[0], (num_features, hidden_size)),
        "a_src": _glorot(ks[1], (hidden_size, 1)),
        "a_dst": _glorot(ks[2], (hidden_size, 1)),
        "bg": jnp.zeros((1, hidden_size), jnp.float32),
        # EdgeToNodeConv(hidden_size, hidden_size)
        "We": _glorot(ks[3], (hidden_size, hidden_size)),
        "be": jnp.zeros((1, hidden_size), jnp.float32),
        # Linear(hidden_size, out_size, bias=False, glorot)
        "Wl": _glorot(ks[4], (hidden_size, out_size)),
    }


def build_adjacency(edge_index, num_entities):
    """Dense adjacency from edge_index [2, num_edges]; adj[dst, src]=1, +self-loops."""
    src, dst = edge_index[0], edge_index[1]
    adj = jnp.zeros((num_entities, num_entities), jnp.float32)
    adj = adj.at[dst, src].set(1.0)
    adj = jnp.maximum(adj, jnp.eye(num_entities, dtype=jnp.float32))
    return adj


def _reference_forward(x, adj, H, params):
    """Plain-JAX f32 reference of the same dense-GAT formulation (single graph)."""
    h = x @ params["Wg"]
    d = h @ params["a_dst"]
    s = h @ params["a_src"]
    scores = d + s.T
    scores = jnp.where(scores >= 0, scores, 0.2 * scores)
    masked = jnp.where(adj > 0, scores, -1e30)
    m = jnp.max(masked, axis=1, keepdims=True)
    p = jnp.exp(masked - m)
    att = p / jnp.sum(p, axis=1, keepdims=True)
    gat = att @ h + params["bg"]
    etn = H @ (gat @ params["We"]) + params["be"]
    act = jnp.where(etn >= 0, etn, 0.2 * etn)
    return act @ params["Wl"]


if __name__ == "__main__":
    key = jax.random.PRNGKey(0)
    k_x, k_ei, k_h, k_p = jax.random.split(key, 4)

    num_features = 8     # F
    hidden_size = 32     # Hd
    out_size = 16        # O
    num_entities = 16    # E  (rows of x; "edges" encoded by the GAT)
    num_nodes = 8        # N  (rows of H)
    num_graph_edges = 32
    batch = 32           # -> G=16 graphs packed per step, grid=(2,) parallel

    x = jax.random.normal(k_x, (batch, num_entities, num_features), jnp.float32)
    edge_index = jax.random.randint(k_ei, (batch, 2, num_graph_edges), 0, num_entities)
    adj = jax.vmap(lambda ei: build_adjacency(ei, num_entities))(edge_index)
    H = (jax.random.uniform(k_h, (batch, num_nodes, num_entities)) < 0.3).astype(jnp.float32)

    params = init_params(k_p, num_features, hidden_size, out_size)
    prepared = prepare_params(params)   # padding / bf16 cast hoisted, done once

    out = edge_gcn_v2(x, adj, H, prepared, out_size)
    jax.block_until_ready(out)

    assert out.shape == (batch, num_nodes, out_size)
    assert bool(jnp.all(jnp.isfinite(out)))

    ref = jax.vmap(_reference_forward, in_axes=(0, 0, 0, None))(x, adj, H, params)
    err = jnp.abs(out - ref)
    # bf16 matmul operands (f32 accumulation) + approx softmax reciprocal vs the
    # all-f32 reference: expect ~1e-2-level mean error, loose elementwise bound.
    assert float(jnp.mean(err)) < 2e-2, float(jnp.mean(err))
    assert bool(jnp.allclose(out, ref, rtol=1e-1, atol=1e-1)), float(jnp.max(err))

    print("KERNEL_OK")
</pallas_src>

<mosaic_0001>
module attributes {stable_mosaic.version = 11 : i64} {
  func.func @_edge_gcn_v2_kernel(%arg0: i32, %arg1: memref<16x16x8xbf16, #tpu.memory_space<vmem>>, %arg2: memref<16x16x16xbf16, #tpu.memory_space<vmem>>, %arg3: memref<16x8x16xbf16, #tpu.memory_space<vmem>>, %arg4: memref<8x128xbf16, #tpu.memory_space<vmem>>, %arg5: memref<128x8xbf16, #tpu.memory_space<vmem>>, %arg6: memref<8x128xbf16, #tpu.memory_space<vmem>>, %arg7: memref<1x128xf32, #tpu.memory_space<vmem>>, %arg8: memref<128x128xbf16, #tpu.memory_space<vmem>>, %arg9: memref<1x128xf32, #tpu.memory_space<vmem>>, %arg10: memref<128x128xbf16, #tpu.memory_space<vmem>>, %arg11: memref<16x8x128xf32, #tpu.memory_space<vmem>>) attributes {dimension_semantics = [#tpu.dimension_semantics<parallel>], iteration_bounds = array<i64: 2>, scalar_prefetch = 0 : i64, scratch_operands = 0 : i64, tpu.core_type = #tpu.core_type<tc>, window_params = [{transform_indices = @transform_0, window_bounds = array<i64: 16, 16, 8>}, {transform_indices = @transform_1, window_bounds = array<i64: 16, 16, 16>}, {transform_indices = @transform_2, window_bounds = array<i64: 16, 8, 16>}, {pipeline_mode = #tpu.pipeline_mode<synchronous>, transform_indices = @transform_3, window_bounds = array<i64: 8, 128>}, {pipeline_mode = #tpu.pipeline_mode<synchronous>, transform_indices = @transform_4, window_bounds = array<i64: 128, 8>}, {pipeline_mode = #tpu.pipeline_mode<synchronous>, transform_indices = @transform_5, window_bounds = array<i64: 8, 128>}, {pipeline_mode = #tpu.pipeline_mode<synchronous>, transform_indices = @transform_6, window_bounds = array<i64: 1, 128>}, {pipeline_mode = #tpu.pipeline_mode<synchronous>, transform_indices = @transform_7, window_bounds = array<i64: 128, 128>}, {pipeline_mode = #tpu.pipeline_mode<synchronous>, transform_indices = @transform_8, window_bounds = array<i64: 1, 128>}, {pipeline_mode = #tpu.pipeline_mode<synchronous>, transform_indices = @transform_9, window_bounds = array<i64: 128, 128>}, {transform_indices = @transform_10, window_bounds = array<i64: 16, 8, 128>}]} {
    %c0 = arith.constant 0 : index
    %c0_0 = arith.constant 0 : index
    %c0_1 = arith.constant 0 : index
    %0 = vector.load %arg1[%c0, %c0_0, %c0_1] : memref<16x16x8xbf16, #tpu.memory_space<vmem>>, vector<16x16x8xbf16>
    %1 = vector.shape_cast %0 : vector<16x16x8xbf16> to vector<256x8xbf16>
    %c0_2 = arith.constant 0 : index
    %c0_3 = arith.constant 0 : index
    %2 = vector.load %arg4[%c0_2, %c0_3] : memref<8x128xbf16, #tpu.memory_space<vmem>>, vector<8x128xbf16>
    %cst = arith.constant dense<0.000000e+00> : vector<256x128xf32>
    %3 = tpu.matmul %1, %2, %cst {dimension_numbers = #tpu.dot_dimension_numbers<[1], [0], [0], [1], [0, 0, 1, 1], [], []>} : vector<256x8xbf16>, vector<8x128xbf16>, vector<256x128xf32> -> vector<256x128xf32>
    %4 = arith.truncf %3 : vector<256x128xf32> to vector<256x128xbf16>
    %5 = vector.shape_cast %4 : vector<256x128xbf16> to vector<16x16x128xbf16>
    %c0_4 = arith.constant 0 : index
    %c0_5 = arith.constant 0 : index
    %6 = vector.load %arg5[%c0_4, %c0_5] : memref<128x8xbf16, #tpu.memory_space<vmem>>, vector<128x8xbf16>
    %cst_6 = arith.constant dense<0.000000e+00> : vector<256x8xf32>
    %7 = tpu.matmul %4, %6, %cst_6 {dimension_numbers = #tpu.dot_dimension_numbers<[1], [0], [0], [1], [0, 0, 1, 1], [], []>} : vector<256x128xbf16>, vector<128x8xbf16>, vector<256x8xf32> -> vector<256x8xf32>
    %8 = vector.extract_strided_slice %7 {offsets = [0, 0], sizes = [256, 1], strides = [1, 1]} : vector<256x8xf32> to vector<256x1xf32>
    %9 = vector.shape_cast %8 : vector<256x1xf32> to vector<16x16x1xf32>
    %c0_7 = arith.constant 0 : index
    %c0_8 = arith.constant 0 : index
    %10 = vector.load %arg6[%c0_7, %c0_8] : memref<8x128xbf16, #tpu.memory_space<vmem>>, vector<8x128xbf16>
    %11 = vector.shape_cast %10 : vector<8x128xbf16> to vector<1x8x128xbf16>
    %12 = vector.broadcast %11 : vector<1x8x128xbf16> to vector<16x8x128xbf16>
    "tpu.trace_start"() <{level = 10 : i32, message = "gqd,gkd->gqk"}> : () -> ()
    %cst_9 = arith.constant dense<0.000000e+00> : vector<16x8x16xf32>
    %13 = tpu.matmul %12, %5, %cst_9 {dimension_numbers = #tpu.dot_dimension_numbers<[2], [2], [1], [1], [0, 0, 0, 1, 1, 1], [0], [0]>} : vector<16x8x128xbf16>, vector<16x16x128xbf16>, vector<16x8x16xf32> -> vector<16x8x16xf32>
    "tpu.trace_stop"() : () -> ()
    %14 = vector.extract_strided_slice %13 {offsets = [0, 0, 0], sizes = [16, 1, 16], strides = [1, 1, 1]} : vector<16x8x16xf32> to vector<16x1x16xf32>
    %15 = vector.broadcast %9 : vector<16x16x1xf32> to vector<16x16x16xf32>
    %16 = vector.broadcast %14 : vector<16x1x16xf32> to vector<16x16x16xf32>
    %17 = arith.addf %15, %16 : vector<16x16x16xf32>
    %cst_10 = arith.constant 0.000000e+00 : f32
    %18 = vector.broadcast %cst_10 : f32 to vector<16x16x16xf32>
    %19 = arith.cmpf oge, %17, %18 : vector<16x16x16xf32>
    %cst_11 = arith.constant 2.000000e-01 : f32
    %20 = vector.broadcast %cst_11 : f32 to vector<16x16x16xf32>
    %21 = arith.mulf %20, %17 : vector<16x16x16xf32>
    %22 = arith.select %19, %17, %21 : vector<16x16x16xi1>, vector<16x16x16xf32>
    %c0_12 = arith.constant 0 : index
    %c0_13 = arith.constant 0 : index
    %c0_14 = arith.constant 0 : index
    %23 = vector.load %arg2[%c0_12, %c0_13, %c0_14] : memref<16x16x16xbf16, #tpu.memory_space<vmem>>, vector<16x16x16xbf16>
    %cst_15 = arith.constant 0.000000e+00 : bf16
    %24 = vector.broadcast %cst_15 : bf16 to vector<16x16x16xbf16>
    %25 = arith.cmpf ogt, %23, %24 : vector<16x16x16xbf16>
    %cst_16 = arith.constant -1.000000e+30 : f32
    %26 = vector.broadcast %cst_16 : f32 to vector<16x16x16xf32>
    %27 = arith.select %25, %22, %26 : vector<16x16x16xi1>, vector<16x16x16xf32>
    %cst_17 = arith.constant dense<0xFF800000> : vector<16x16xf32>
    %28 = vector.multi_reduction <maximumf>, %27, %cst_17 [2] : vector<16x16x16xf32> to vector<16x16xf32>
    %29 = vector.shape_cast %28 : vector<16x16xf32> to vector<16x16x1xf32>
    %30 = vector.broadcast %29 : vector<16x16x1xf32> to vector<16x16x16xf32>
    %31 = arith.subf %27, %30 : vector<16x16x16xf32>
    %32 = math.exp %31 : vector<16x16x16xf32>
    %cst_18 = arith.constant dense<0.000000e+00> : vector<16x16xf32>
    %33 = vector.multi_reduction <add>, %32, %cst_18 [2] : vector<16x16x16xf32> to vector<16x16xf32>
    %34 = vector.shape_cast %33 : vector<16x16xf32> to vector<16x16x1xf32>
    %35 = arith.truncf %32 : vector<16x16x16xf32> to vector<16x16x16xbf16>
    "tpu.trace_start"() <{level = 10 : i32, message = "gek,gkd->ged"}> : () -> ()
    %cst_19 = arith.constant dense<0.000000e+00> : vector<16x16x128xf32>
    %36 = tpu.matmul %35, %5, %cst_19 {dimension_numbers = #tpu.dot_dimension_numbers<[2], [1], [1], [2], [0, 0, 0, 1, 1, 2], [0], [0]>} : vector<16x16x16xbf16>, vector<16x16x128xbf16>, vector<16x16x128xf32> -> vector<16x16x128xf32>
    "tpu.trace_stop"() : () -> ()
    %37 = tpu.reciprocal %34 {approx = true} : vector<16x16x1xf32> -> vector<16x16x1xf32>
    %38 = vector.broadcast %37 : vector<16x16x1xf32> to vector<16x16x128xf32>
    %39 = arith.mulf %36, %38 : vector<16x16x128xf32>
    %c0_20 = arith.constant 0 : index
    %c0_21 = arith.constant 0 : index
    %40 = vector.load %arg7[%c0_20, %c0_21] : memref<1x128xf32, #tpu.memory_space<vmem>>, vector<1x128xf32>
    %41 = vector.shape_cast %40 : vector<1x128xf32> to vector<1x1x128xf32>
    %42 = vector.broadcast %41 : vector<1x1x128xf32> to vector<16x16x128xf32>
    %43 = arith.addf %39, %42 : vector<16x16x128xf32>
    %c0_22 = arith.constant 0 : index
    %c0_23 = arith.constant 0 : index
    %c0_24 = arith.constant 0 : index
    %44 = vector.load %arg3[%c0_22, %c0_23, %c0_24] : memref<16x8x16xbf16, #tpu.memory_space<vmem>>, vector<16x8x16xbf16>
    %45 = arith.truncf %43 : vector<16x16x128xf32> to vector<16x16x128xbf16>
    "tpu.trace_start"() <{level = 10 : i32, message = "gne,ged->gnd"}> : () -> ()
    %cst_25 = arith.constant dense<0.000000e+00> : vector<16x8x128xf32>
    %46 = tpu.matmul %44, %45, %cst_25 {dimension_numbers = #tpu.dot_dimension_numbers<[2], [1], [1], [2], [0, 0, 0, 1, 1, 2], [0], [0]>} : vector<16x8x16xbf16>, vector<16x16x128xbf16>, vector<16x8x128xf32> -> vector<16x8x128xf32>
    "tpu.trace_stop"() : () -> ()
    %47 = vector.shape_cast %46 : vector<16x8x128xf32> to vector<128x128xf32>
    %48 = arith.truncf %47 : vector<128x128xf32> to vector<128x128xbf16>
    %c0_26 = arith.constant 0 : index
    %c0_27 = arith.constant 0 : index
    %49 = vector.load %arg8[%c0_26, %c0_27] : memref<128x128xbf16, #tpu.memory_space<vmem>>, vector<128x128xbf16>
    %cst_28 = arith.constant dense<0.000000e+00> : vector<128x128xf32>
    %50 = tpu.matmul %48, %49, %cst_28 {dimension_numbers = #tpu.dot_dimension_numbers<[1], [0], [0], [1], [0, 0, 1, 1], [], []>} : vector<128x128xbf16>, vector<128x128xbf16>, vector<128x128xf32> -> vector<128x128xf32>
    %c0_29 = arith.constant 0 : index
    %c0_30 = arith.constant 0 : index
    %51 = vector.load %arg9[%c0_29, %c0_30] : memref<1x128xf32, #tpu.memory_space<vmem>>, vector<1x128xf32>
    %52 = vector.broadcast %51 : vector<1x128xf32> to vector<128x128xf32>
    %53 = arith.addf %50, %52 : vector<128x128xf32>
    %cst_31 = arith.constant 0.000000e+00 : f32
    %54 = vector.broadcast %cst_31 : f32 to vector<128x128xf32>
    %55 = arith.cmpf oge, %53, %54 : vector<128x128xf32>
    %cst_32 = arith.constant 2.000000e-01 : f32
    %56 = vector.broadcast %cst_32 : f32 to vector<128x128xf32>
    %57 = arith.mulf %56, %53 : vector<128x128xf32>
    %58 = arith.select %55, %53, %57 : vector<128x128xi1>, vector<128x128xf32>
    %59 = arith.truncf %58 : vector<128x128xf32> to vector<128x128xbf16>
    %c0_33 = arith.constant 0 : index
    %c0_34 = arith.constant 0 : index
    %60 = vector.load %arg10[%c0_33, %c0_34] : memref<128x128xbf16, #tpu.memory_space<vmem>>, vector<128x128xbf16>
    %cst_35 = arith.constant dense<0.000000e+00> : vector<128x128xf32>
    %61 = tpu.matmul %59, %60, %cst_35 {dimension_numbers = #tpu.dot_dimension_numbers<[1], [0], [0], [1], [0, 0, 1, 1], [], []>} : vector<128x128xbf16>, vector<128x128xbf16>, vector<128x128xf32> -> vector<128x128xf32>
    %62 = vector.shape_cast %61 : vector<128x128xf32> to vector<16x8x128xf32>
    %c0_36 = arith.constant 0 : index
    %c0_37 = arith.constant 0 : index
    %c0_38 = arith.constant 0 : index
    %63 = vector.load %arg11[%c0_36, %c0_37, %c0_38] : memref<16x8x128xf32, #tpu.memory_space<vmem>>, vector<16x8x128xf32>
    tpu.vector_store %arg11[%c0_36, %c0_37, %c0_38], %62 {strides = array<i32>} : memref<16x8x128xf32, #tpu.memory_space<vmem>>, vector<16x8x128xf32>,
    return
  }
  func.func @transform_0(%arg0: i32) -> (i32, i32, i32) {
    %c0_i32 = arith.constant 0 : i32
    %c0_i32_0 = arith.constant 0 : i32
    %c0_i32_1 = arith.constant 0 : i32
    return %arg0, %c0_i32, %c0_i32_0 : i32, i32, i32
  }
  func.func @transform_1(%arg0: i32) -> (i32, i32, i32) {
    %c0_i32 = arith.constant 0 : i32
    %c0_i32_0 = arith.constant 0 : i32
    %c0_i32_1 = arith.constant 0 : i32
    return %arg0, %c0_i32, %c0_i32_0 : i32, i32, i32
  }
  func.func @transform_2(%arg0: i32) -> (i32, i32, i32) {
    %c0_i32 = arith.constant 0 : i32
    %c0_i32_0 = arith.constant 0 : i32
    %c0_i32_1 = arith.constant 0 : i32
    return %arg0, %c0_i32, %c0_i32_0 : i32, i32, i32
  }
  func.func @transform_3(%arg0: i32) -> (i32, i32) {
    %c0_i32 = arith.constant 0 : i32
    %c0_i32_0 = arith.constant 0 : i32
    %c0_i32_1 = arith.constant 0 : i32
    return %c0_i32, %c0_i32_0 : i32, i32
  }
  func.func @transform_4(%arg0: i32) -> (i32, i32) {
    %c0_i32 = arith.constant 0 : i32
    %c0_i32_0 = arith.constant 0 : i32
    %c0_i32_1 = arith.constant 0 : i32
    return %c0_i32, %c0_i32_0 : i32, i32
  }
  func.func @transform_5(%arg0: i32) -> (i32, i32) {
    %c0_i32 = arith.constant 0 : i32
    %c0_i32_0 = arith.constant 0 : i32
    %c0_i32_1 = arith.constant 0 : i32
    return %c0_i32, %c0_i32_0 : i32, i32
  }
  func.func @transform_6(%arg0: i32) -> (i32, i32) {
    %c0_i32 = arith.constant 0 : i32
    %c0_i32_0 = arith.constant 0 : i32
    %c0_i32_1 = arith.constant 0 : i32
    return %c0_i32, %c0_i32_0 : i32, i32
  }
  func.func @transform_7(%arg0: i32) -> (i32, i32) {
    %c0_i32 = arith.constant 0 : i32
    %c0_i32_0 = arith.constant 0 : i32
    %c0_i32_1 = arith.constant 0 : i32
    return %c0_i32, %c0_i32_0 : i32, i32
  }
  func.func @transform_8(%arg0: i32) -> (i32, i32) {
    %c0_i32 = arith.constant 0 : i32
    %c0_i32_0 = arith.constant 0 : i32
    %c0_i32_1 = arith.constant 0 : i32
    return %c0_i32, %c0_i32_0 : i32, i32
  }
  func.func @transform_9(%arg0: i32) -> (i32, i32) {
    %c0_i32 = arith.constant 0 : i32
    %c0_i32_0 = arith.constant 0 : i32
    %c0_i32_1 = arith.constant 0 : i32
    return %c0_i32, %c0_i32_0 : i32, i32
  }
  func.func @transform_10(%arg0: i32) -> (i32, i32, i32) {
    %c0_i32 = arith.constant 0 : i32
    %c0_i32_0 = arith.constant 0 : i32
    %c0_i32_1 = arith.constant 0 : i32
    return %arg0, %c0_i32, %c0_i32_0 : i32, i32, i32
  }
}

</mosaic_0001>

<llo_original>
// kernel: edge_gcn_v2.1
$region0: #{edge_gcn_v2.1}
  #allocation0 [shape = 'u32[]', space=smem, size = 0x4, offset = 0x4, fixed_abs, tag = 'smem constant byte address 0x4 - core index']
  #allocation1 [shape = 'u32[144,128]{1,0:T(1,128)}', space=vmem, size = 0x12000, scoped, tag = 'internal scratch']
  %s0 = inlined_call_operand.vmem [shape: bf16[32,16,8], index: 0, kind: input, shape index: {}]
  %s1 = inlined_call_operand.vmem [shape: bf16[32,16,16], index: 1, kind: input, shape index: {}]
  %s2 = inlined_call_operand.vmem [shape: bf16[32,8,16], index: 2, kind: input, shape index: {}]
  %s3 = inlined_call_operand.vmem [shape: bf16[8,128], index: 3, kind: input, shape index: {}]
  %s4 = inlined_call_operand.vmem [shape: bf16[128,8], index: 4, kind: input, shape index: {}]
  %s5 = inlined_call_operand.vmem [shape: bf16[8,128], index: 5, kind: input, shape index: {}]
  %s6 = inlined_call_operand.vmem [shape: f32[1,128], index: 6, kind: input, shape index: {}]
  %s7 = inlined_call_operand.vmem [shape: bf16[128,128], index: 7, kind: input, shape index: {}]
  %s8 = inlined_call_operand.vmem [shape: f32[1,128], index: 8, kind: input, shape index: {}]
  %s9 = inlined_call_operand.vmem [shape: bf16[128,128], index: 9, kind: input, shape index: {}]
  %s10 = inlined_call_operand.vmem [shape: f32[32,8,128], index: 10, kind: output, shape index: {}]
  %s11 = sld [smem:[#allocation0]]
  $region73: #{edge_gcn_v2.1} parent=0
    _
  %s13 = ssub.s32 1, %s11
  %s14 = scalar_select 0, %s13, %s11
  loop: start=0, step=1, limit=4
  $region2: #{edge_gcn_v2.1} parent=0 // loop_pre_header
    _
  $region3: #{edge_gcn_v2.1} parent=0 // loop_header
    %s16 = sphi 0, %s20
    %p17 = scmp.ge.s32.totalorder %s16, 4
    %s26 = sphi 0, %s28
    %s29 = sphi 0, %s26
    %s30 = sphi 0, %s29
    %s46 = sphi 0, %s30
    %s52 = sphi 0, %s54
    %s55 = sphi 0, %s52
    %s56 = sphi 0, %s55
    %s72 = sphi 0, %s56
    %s78 = sphi 0, %s80
    %s81 = sphi 0, %s78
    %s82 = sphi 0, %s81
    %s98 = sphi 0, %s82
    %s102 = sphi 0, %s102
    %s104 = sphi 0, %s102
    %s105 = sphi 0, %s104
    %s119 = sphi 0, %s105
    %s123 = sphi 0, %s123
    %s125 = sphi 0, %s123
    %s126 = sphi 0, %s125
    %s140 = sphi 0, %s126
    %s144 = sphi 0, %s144
    %s146 = sphi 0, %s144
    %s147 = sphi 0, %s146
    %s161 = sphi 0, %s147
    %s165 = sphi 0, %s165
    %s167 = sphi 0, %s165
    %s168 = sphi 0, %s167
    %s182 = sphi 0, %s168
    %s186 = sphi 0, %s186
    %s188 = sphi 0, %s186
    %s189 = sphi 0, %s188
    %s203 = sphi 0, %s189
    %s207 = sphi 0, %s207
    %s209 = sphi 0, %s207
    %s210 = sphi 0, %s209
    %s224 = sphi 0, %s210
    %s228 = sphi 0, %s228
    %s230 = sphi 0, %s228
    %s231 = sphi 0, %s230
    %s245 = sphi 0, %s231
    %s251 = sphi 0, %s253
    %s254 = sphi 0, %s251
    %s255 = sphi 0, %s254
    %s271 = sphi 0, %s255
  $region4: #{edge_gcn_v2.1} parent=0 // loop_header_branch
    %19 = sbr.rel (%p17) target = $region8
  $region5: #{edge_gcn_v2.1} parent=0 // loop_body
    %s21 = ssub.s32 %s16, 1
    %s22 = ssub.s32 %s16, 2
    %s23 = sadd.s32 %s16, 1
    %s24 = ssub.s32 %s16, %s23
    %p25 = scmp.eq.s32.totalorder %s24, 0
    %s27 = sadd.s32 %s26, 1
    %s28 = scalar_select %p25, %s26, %s27
    %p31 = pneg %p25
    %p32 = scmp.eq.s32.totalorder %s16, 1
    %p33 = por %p31, %p32
    %p34 = scmp.ne.s32.totalorder %s26, %s29
    %p35 = scmp.eq.s32.totalorder %s16, 0
    %p36 = por %p34, %p35
    %p37 = scmp.ne.s32.totalorder %s26, %s29
    %p38 = scmp.eq.s32.totalorder %s21, 1
    %p39 = por %p37, %p38
    %p40 = scmp.ne.s32.totalorder %s29, %s30
    %p41 = scmp.eq.s32.totalorder %s21, 0
    %p42 = por %p40, %p41
    %p43 = scmp.ne.s32.totalorder %s29, %s30
    %p44 = scmp.eq.s32.totalorder %s22, 1
    %p45 = por %p43, %p44
    %p47 = scmp.ne.s32.totalorder %s30, %s46
    %p48 = scmp.eq.s32.totalorder %s22, 0
    %p49 = por %p47, %p48
    %s50 = ssub.s32 %s16, %s23
    %p51 = scmp.eq.s32.totalorder %s50, 0
    %s53 = sadd.s32 %s52, 1
    %s54 = scalar_select %p51, %s52, %s53
    %p57 = pneg %p51
    %p58 = scmp.eq.s32.totalorder %s16, 1
    %p59 = por %p57, %p58
    %p60 = scmp.ne.s32.totalorder %s52, %s55
    %p61 = scmp.eq.s32.totalorder %s16, 0
    %p62 = por %p60, %p61
    %p63 = scmp.ne.s32.totalorder %s52, %s55
    %p64 = scmp.eq.s32.totalorder %s21, 1
    %p65 = por %p63, %p64
    %p66 = scmp.ne.s32.totalorder %s55, %s56
    %p67 = scmp.eq.s32.totalorder %s21, 0
    %p68 = por %p66, %p67
    %p69 = scmp.ne.s32.totalorder %s55, %s56
    %p70 = scmp.eq.s32.totalorder %s22, 1
    %p71 = por %p69, %p70
    %p73 = scmp.ne.s32.totalorder %s56, %s72
    %p74 = scmp.eq.s32.totalorder %s22, 0
    %p75 = por %p73, %p74
    %s76 = ssub.s32 %s16, %s23
    %p77 = scmp.eq.s32.totalorder %s76, 0
    %s79 = sadd.s32 %s78, 1
    %s80 = scalar_select %p77, %s78, %s79
    %p83 = pneg %p77
    %p84 = scmp.eq.s32.totalorder %s16, 1
    %p85 = por %p83, %p84
    %p86 = scmp.ne.s32.totalorder %s78, %s81
    %p87 = scmp.eq.s32.totalorder %s16, 0
    %p88 = por %p86, %p87
    %p89 = scmp.ne.s32.totalorder %s78, %s81
    %p90 = scmp.eq.s32.totalorder %s21, 1
    %p91 = por %p89, %p90
    %p92 = scmp.ne.s32.totalorder %s81, %s82
    %p93 = scmp.eq.s32.totalorder %s21, 0
    %p94 = por %p92, %p93
    %p95 = scmp.ne.s32.totalorder %s81, %s82
    %p96 = scmp.eq.s32.totalorder %s22, 1
    %p97 = por %p95, %p96
    %p99 = scmp.ne.s32.totalorder %s82, %s98
    %p100 = scmp.eq.s32.totalorder %s22, 0
    %p101 = por %p99, %p100
    %s103 = sadd.s32 %s102, 1
    %p106 = scmp.eq.s32.totalorder %s16, 1
    %p107 = scmp.ne.s32.totalorder %s102, %s104
    %p108 = scmp.eq.s32.totalorder %s16, 0
    %p109 = por %p107, %p108
    %p110 = scmp.ne.s32.totalorder %s102, %s104
    %p111 = scmp.eq.s32.totalorder %s21, 1
    %p112 = por %p110, %p111
    %p113 = scmp.ne.s32.totalorder %s104, %s105
    %p114 = scmp.eq.s32.totalorder %s21, 0
    %p115 = por %p113, %p114
    %p116 = scmp.ne.s32.totalorder %s104, %s105
    %p117 = scmp.eq.s32.totalorder %s22, 1
    %p118 = por %p116, %p117
    %p120 = scmp.ne.s32.totalorder %s105, %s119
    %p121 = scmp.eq.s32.totalorder %s22, 0
    %p122 = por %p120, %p121
    %s124 = sadd.s32 %s123, 1
    %p127 = scmp.eq.s32.totalorder %s16, 1
    %p128 = scmp.ne.s32.totalorder %s123, %s125
    %p129 = scmp.eq.s32.totalorder %s16, 0
    %p130 = por %p128, %p129
    %p131 = scmp.ne.s32.totalorder %s123, %s125
    %p132 = scmp.eq.s32.totalorder %s21, 1
    %p133 = por %p131, %p132
    %p134 = scmp.ne.s32.totalorder %s125, %s126
    %p135 = scmp.eq.s32.totalorder %s21, 0
    %p136 = por %p134, %p135
    %p137 = scmp.ne.s32.totalorder %s125, %s126
    %p138 = scmp.eq.s32.totalorder %s22, 1
    %p139 = por %p137, %p138
    %p141 = scmp.ne.s32.totalorder %s126, %s140
    %p142 = scmp.eq.s32.totalorder %s22, 0
    %p143 = por %p141, %p142
    %s145 = sadd.s32 %s144, 1
    %p148 = scmp.eq.s32.totalorder %s16, 1
    %p149 = scmp.ne.s32.totalorder %s144, %s146
    %p150 = scmp.eq.s32.totalorder %s16, 0
    %p151 = por %p149, %p150
    %p152 = scmp.ne.s32.totalorder %s144, %s146
    %p153 = scmp.eq.s32.totalorder %s21, 1
    %p154 = por %p152, %p153
    %p155 = scmp.ne.s32.totalorder %s146, %s147
    %p156 = scmp.eq.s32.totalorder %s21, 0
    %p157 = por %p155, %p156
    %p158 = scmp.ne.s32.totalorder %s146, %s147
    %p159 = scmp.eq.s32.totalorder %s22, 1
    %p160 = por %p158, %p159
    %p162 = scmp.ne.s32.totalorder %s147, %s161
    %p163 = scmp.eq.s32.totalorder %s22, 0
    %p164 = por %p162, %p163
    %s166 = sadd.s32 %s165, 1
    %p169 = scmp.eq.s32.totalorder %s16, 1
    %p170 = scmp.ne.s32.totalorder %s165, %s167
    %p171 = scmp.eq.s32.totalorder %s16, 0
    %p172 = por %p170, %p171
    %p173 = scmp.ne.s32.totalorder %s165, %s167
    %p174 = scmp.eq.s32.totalorder %s21, 1
    %p175 = por %p173, %p174
    %p176 = scmp.ne.s32.totalorder %s167, %s168
    %p177 = scmp.eq.s32.totalorder %s21, 0
    %p178 = por %p176, %p177
    %p179 = scmp.ne.s32.totalorder %s167, %s168
    %p180 = scmp.eq.s32.totalorder %s22, 1
    %p181 = por %p179, %p180
    %p183 = scmp.ne.s32.totalorder %s168, %s182
    %p184 = scmp.eq.s32.totalorder %s22, 0
    %p185 = por %p183, %p184
    %s187 = sadd.s32 %s186, 1
    %p190 = scmp.eq.s32.totalorder %s16, 1
    %p191 = scmp.ne.s32.totalorder %s186, %s188
    %p192 = scmp.eq.s32.totalorder %s16, 0
    %p193 = por %p191, %p192
    %p194 = scmp.ne.s32.totalorder %s186, %s188
    %p195 = scmp.eq.s32.totalorder %s21, 1
    %p196 = por %p194, %p195
    %p197 = scmp.ne.s32.totalorder %s188, %s189
    %p198 = scmp.eq.s32.totalorder %s21, 0
    %p199 = por %p197, %p198
    %p200 = scmp.ne.s32.totalorder %s188, %s189
    %p201 = scmp.eq.s32.totalorder %s22, 1
    %p202 = por %p200, %p201
    %p204 = scmp.ne.s32.totalorder %s189, %s203
    %p205 = scmp.eq.s32.totalorder %s22, 0
    %p206 = por %p204, %p205
    %s208 = sadd.s32 %s207, 1
    %p211 = scmp.eq.s32.totalorder %s16, 1
    %p212 = scmp.ne.s32.totalorder %s207, %s209
    %p213 = scmp.eq.s32.totalorder %s16, 0
    %p214 = por %p212, %p213
    %p215 = scmp.ne.s32.totalorder %s207, %s209
    %p216 = scmp.eq.s32.totalorder %s21, 1
    %p217 = por %p215, %p216
    %p218 = scmp.ne.s32.totalorder %s209, %s210
    %p219 = scmp.eq.s32.totalorder %s21, 0
    %p220 = por %p218, %p219
    %p221 = scmp.ne.s32.totalorder %s209, %s210
    %p222 = scmp.eq.s32.totalorder %s22, 1
    %p223 = por %p221, %p222
    %p225 = scmp.ne.s32.totalorder %s210, %s224
    %p226 = scmp.eq.s32.totalorder %s22, 0
    %p227 = por %p225, %p226
    %s229 = sadd.s32 %s228, 1
    %p232 = scmp.eq.s32.totalorder %s16, 1
    %p233 = scmp.ne.s32.totalorder %s228, %s230
    %p234 = scmp.eq.s32.totalorder %s16, 0
    %p235 = por %p233, %p234
    %p236 = scmp.ne.s32.totalorder %s228, %s230
    %p237 = scmp.eq.s32.totalorder %s21, 1
    %p238 = por %p236, %p237
    %p239 = scmp.ne.s32.totalorder %s230, %s231
    %p240 = scmp.eq.s32.totalorder %s21, 0
    %p241 = por %p239, %p240
    %p242 = scmp.ne.s32.totalorder %s230, %s231
    %p243 = scmp.eq.s32.totalorder %s22, 1
    %p244 = por %p242, %p243
    %p246 = scmp.ne.s32.totalorder %s231, %s245
    %p247 = scmp.eq.s32.totalorder %s22, 0
    %p248 = por %p246, %p247
    %s249 = ssub.s32 %s16, %s23
    %p250 = scmp.eq.s32.totalorder %s249, 0
    %s252 = sadd.s32 %s251, 1
    %s253 = scalar_select %p250, %s251, %s252
    %p256 = pneg %p250
    %p257 = scmp.eq.s32.totalorder %s16, 1
    %p258 = por %p256, %p257
    %p259 = scmp.ne.s32.totalorder %s251, %s254
    %p260 = scmp.eq.s32.totalorder %s16, 0
    %p261 = por %p259, %p260
    %p262 = scmp.ne.s32.totalorder %s251, %s254
    %p263 = scmp.eq.s32.totalorder %s21, 1
    %p264 = por %p262, %p263
    %p265 = scmp.ne.s32.totalorder %s254, %s255
    %p266 = scmp.eq.s32.totalorder %s21, 0
    %p267 = por %p265, %p266
    %p268 = scmp.ne.s32.totalorder %s254, %s255
    %p269 = scmp.eq.s32.totalorder %s22, 1
    %p270 = por %p268, %p269
    %p272 = scmp.ne.s32.totalorder %s255, %s271
    %p273 = scmp.eq.s32.totalorder %s22, 0
    %p274 = por %p272, %p273
    %p275 = scmp.le.s32.totalorder 1, %s16
    %p276 = scmp.lt.s32.totalorder %s16, 3
    %p277 = pnand %p275, %p276
    %p278 = pneg %p277
    // Predicated region
    $region9: #{edge_gcn_v2.1} parent=5 // pred_check
      _
    $region10: #{edge_gcn_v2.1} parent=5 // pred_check_branch
      %280 = sbr.rel (%p277) target = $region12
    $region11: #{edge_gcn_v2.1} parent=5 // pred_region
      %s281 = ssub.s32 %s16, 1
      // Predicated region
      $region13: #{edge_gcn_v2.1} parent=11 // pred_check
        %p282 = pneg %p115
      $region14: #{edge_gcn_v2.1} parent=11 // pred_check_branch
        %284 = sbr.rel (%p282) target = $region16
      $region15: #{edge_gcn_v2.1} parent=11 // pred_region
        _
      $region16: #{edge_gcn_v2.1} parent=11 // pred_fallthru
        _
      // Predicated region
      $region17: #{edge_gcn_v2.1} parent=11 // pred_check
        %p285 = pneg %p136
      $region18: #{edge_gcn_v2.1} parent=11 // pred_check_branch
        %287 = sbr.rel (%p285) target = $region20
      $region19: #{edge_gcn_v2.1} parent=11 // pred_region
        _
      $region20: #{edge_gcn_v2.1} parent=11 // pred_fallthru
        _
      // Predicated region
      $region21: #{edge_gcn_v2.1} parent=11 // pred_check
        %p288 = pneg %p157
      $region22: #{edge_gcn_v2.1} parent=11 // pred_check_branch
        %290 = sbr.rel (%p288) target = $region24
      $region23: #{edge_gcn_v2.1} parent=11 // pred_region
        _
      $region24: #{edge_gcn_v2.1} parent=11 // pred_fallthru
        _
      // Predicated region
      $region25: #{edge_gcn_v2.1} parent=11 // pred_check
        %p291 = pneg %p178
      $region26: #{edge_gcn_v2.1} parent=11 // pred_check_branch
        %293 = sbr.rel (%p291) target = $region28
      $region27: #{edge_gcn_v2.1} parent=11 // pred_region
        _
      $region28: #{edge_gcn_v2.1} parent=11 // pred_fallthru
        _
      // Predicated region
      $region29: #{edge_gcn_v2.1} parent=11 // pred_check
        %p294 = pneg %p199
      $region30: #{edge_gcn_v2.1} parent=11 // pred_check_branch
        %296 = sbr.rel (%p294) target = $region32
      $region31: #{edge_gcn_v2.1} parent=11 // pred_region
        _
      $region32: #{edge_gcn_v2.1} parent=11 // pred_fallthru
        _
      // Predicated region
      $region33: #{edge_gcn_v2.1} parent=11 // pred_check
        %p297 = pneg %p220
      $region34: #{edge_gcn_v2.1} parent=11 // pred_check_branch
        %299 = sbr.rel (%p297) target = $region36
      $region35: #{edge_gcn_v2.1} parent=11 // pred_region
        _
      $region36: #{edge_gcn_v2.1} parent=11 // pred_fallthru
        _
      // Predicated region
      $region37: #{edge_gcn_v2.1} parent=11 // pred_check
        %p300 = pneg %p241
      $region38: #{edge_gcn_v2.1} parent=11 // pred_check_branch
        %302 = sbr.rel (%p300) target = $region40
      $region39: #{edge_gcn_v2.1} parent=11 // pred_region
        _
      $region40: #{edge_gcn_v2.1} parent=11 // pred_fallthru
        _
    $region12: #{edge_gcn_v2.1} parent=5 // pred_fallthru
      _
    %p303 = scmp.lt.s32.totalorder %s16, 2
    // Predicated region
    $region41: #{edge_gcn_v2.1} parent=5 // pred_check
      %p304 = pneg %p303
    $region42: #{edge_gcn_v2.1} parent=5 // pred_check_branch
      %306 = sbr.rel (%p304) target = $region44
    $region43: #{edge_gcn_v2.1} parent=5 // pred_region
      // Predicated region
      $region45: #{edge_gcn_v2.1} parent=43 // pred_check
        %p307 = pneg %p36
      $region46: #{edge_gcn_v2.1} parent=43 // pred_check_branch
        %309 = sbr.rel (%p307) target = $region48
      $region47: #{edge_gcn_v2.1} parent=43 // pred_region
        %s310 = smul.u32 16, %s16
        %p311 = scmp.lt.s32.totalorder %s310, 31
        %s312 = scalar_select %p311, %s310, 31
        %s313 = smul.addr %s312, 2
        %s314 = smul.addr %s313, 4
        %s315 = scalar_lea.vmem %s0, %s314
        %s316 = smul.u32 16, %s16
      $region48: #{edge_gcn_v2.1} parent=43 // pred_fallthru
        _
      // Predicated region
      $region49: #{edge_gcn_v2.1} parent=43 // pred_check
        %p317 = pneg %p62
      $region50: #{edge_gcn_v2.1} parent=43 // pred_check_branch
        %319 = sbr.rel (%p317) target = $region52
      $region51: #{edge_gcn_v2.1} parent=43 // pred_region
        %s320 = smul.u32 16, %s16
        %p321 = scmp.lt.s32.totalorder %s320, 31
        %s322 = scalar_select %p321, %s320, 31
        %s323 = smul.addr %s322, 2
        %s324 = smul.addr %s323, 4
        %s325 = scalar_lea.vmem %s1, %s324
        %s326 = smul.u32 16, %s16
      $region52: #{edge_gcn_v2.1} parent=43 // pred_fallthru
        _
      // Predicated region
      $region53: #{edge_gcn_v2.1} parent=43 // pred_check
        %p327 = pneg %p88
      $region54: #{edge_gcn_v2.1} parent=43 // pred_check_branch
        %329 = sbr.rel (%p327) target = $region56
      $region55: #{edge_gcn_v2.1} parent=43 // pred_region
        %s330 = smul.u32 16, %s16
        %p331 = scmp.lt.s32.totalorder %s330, 31
        %s332 = scalar_select %p331, %s330, 31
        %s333 = smul.addr %s332, 4
        %s334 = scalar_lea.vmem %s2, %s333
        %s335 = smul.u32 16, %s16
      $region56: #{edge_gcn_v2.1} parent=43 // pred_fallthru
        _
    $region44: #{edge_gcn_v2.1} parent=5 // pred_fallthru
      _
    %p336 = scmp.le.s32.totalorder 1, %s16
    %p337 = scmp.lt.s32.totalorder %s16, 3
    %p338 = pnand %p336, %p337
    %p339 = pneg %p338
    // Predicated region
    $region57: #{edge_gcn_v2.1} parent=5 // pred_check
      _
    $region58: #{edge_gcn_v2.1} parent=5 // pred_check_branch
      %341 = sbr.rel (%p338) target = $region60
    $region59: #{edge_gcn_v2.1} parent=5 // pred_region
      %s342 = ssub.s32 %s16, 1
      %s343 = smul.u32 16, %s21
      %p344 = scmp.lt.s32.totalorder %s343, 31
      %s345 = scalar_select %p344, %s343, 31
      %s346 = smul.addr %s345, 2
      %s347 = smul.addr %s346, 4
      %s348 = scalar_lea.vmem %s0, %s347
      %p349 = pneg %p42
      %p350 = pneg %p39
      %s351 = smul.u32 16, %s21
      %p352 = scmp.lt.s32.totalorder %s351, 31
      %s353 = scalar_select %p352, %s351, 31
      %s354 = smul.addr %s353, 2
      %s355 = smul.addr %s354, 4
      %s356 = scalar_lea.vmem %s1, %s355
      %p357 = pneg %p68
      %p358 = pneg %p65
      %s359 = smul.u32 16, %s21
      %p360 = scmp.lt.s32.totalorder %s359, 31
      %s361 = scalar_select %p360, %s359, 31
      %s362 = smul.addr %s361, 4
      %s363 = scalar_lea.vmem %s2, %s362
      %p364 = pneg %p94
      %p365 = pneg %p91
      %p366 = pneg %p115
      %p367 = pneg %p112
      %p368 = pneg %p136
      %p369 = pneg %p133
      %p370 = pneg %p157
      %p371 = pneg %p154
      %p372 = pneg %p178
      %p373 = pneg %p175
      %p374 = pneg %p199
      %p375 = pneg %p196
      %p376 = pneg %p220
      %p377 = pneg %p217
      %p378 = pneg %p241
      %p379 = pneg %p238
      %p380 = pneg %p267
      %p381 = pneg %p264
      %s382 = smul.u32 16, %s21
      %p383 = scmp.lt.s32.totalorder %s382, 31
      %s384 = scalar_select %p383, %s382, 31
      %s385 = smul.addr %s384, 8
      %s386 = scalar_lea.vmem %s10, %s385
      %s387 = smul.u32 16, %s21
      %p388 = scmp.lt.s32.totalorder %s387, 31
      %s389 = scalar_select %p388, %s387, 31
      %s390 = smul.addr %s389, 2
      %s391 = smul.addr %s390, 4
      %s392 = scalar_lea.vmem %s0, %s391
      %s393 = smul.u32 16, %s21
      %s394 = smul.u32 16, %s21
      %p395 = scmp.lt.s32.totalorder %s394, 31
      %s396 = scalar_select %p395, %s394, 31
      %s397 = smul.addr %s396, 2
      %s398 = smul.addr %s397, 4
      %s399 = scalar_lea.vmem %s1, %s398
      %s400 = smul.u32 16, %s21
      %s401 = smul.u32 16, %s21
      %p402 = scmp.lt.s32.totalorder %s401, 31
      %s403 = scalar_select %p402, %s401, 31
      %s404 = smul.addr %s403, 4
      %s405 = scalar_lea.vmem %s2, %s404
      %s406 = smul.u32 16, %s21
      %s407 = smul.u32 16, %s21
      %p408 = scmp.lt.s32.totalorder %s407, 31
      %s409 = scalar_select %p408, %s407, 31
      %s410 = smul.addr %s409, 8
      %s411 = scalar_lea.vmem %s10, %s410
      %s412 = smul.u32 16, %s21
      %v416 = vld [vmem:[%s392] sm:$0xf]
      %v417 = vld [vmem:[%s392 + $0x4] sm:$0xf]
      %v418 = vld [vmem:[%s392 + $0x8] sm:$0xf]
      %v419 = vld [vmem:[%s392 + $0xc] sm:$0xf]
      %v420 = vld [vmem:[%s392 + $0x10] sm:$0xf]
      %v421 = vld [vmem:[%s392 + $0x14] sm:$0xf]
      %v422 = vld [vmem:[%s392 + $0x18] sm:$0xf]
      %v423 = vld [vmem:[%s392 + $0x1c] sm:$0xf]
      %v424 = vld [vmem:[%s392 + $0x20] sm:$0xf]
      %v425 = vld [vmem:[%s392 + $0x24] sm:$0xf]
      %v426 = vld [vmem:[%s392 + $0x28] sm:$0xf]
      %v427 = vld [vmem:[%s392 + $0x2c] sm:$0xf]
      %v428 = vld [vmem:[%s392 + $0x30] sm:$0xf]
      %v429 = vld [vmem:[%s392 + $0x34] sm:$0xf]
      %v430 = vld [vmem:[%s392 + $0x38] sm:$0xf]
      %v431 = vld [vmem:[%s392 + $0x3c] sm:$0xf]
      %v432 = vld [vmem:[%s392 + $0x40] sm:$0xf]
      %v433 = vld [vmem:[%s392 + $0x44] sm:$0xf]
      %v434 = vld [vmem:[%s392 + $0x48] sm:$0xf]
      %v435 = vld [vmem:[%s392 + $0x4c] sm:$0xf]
      %v436 = vld [vmem:[%s392 + $0x50] sm:$0xf]
      %v437 = vld [vmem:[%s392 + $0x54] sm:$0xf]
      %v438 = vld [vmem:[%s392 + $0x58] sm:$0xf]
      %v439 = vld [vmem:[%s392 + $0x5c] sm:$0xf]
      %v440 = vld [vmem:[%s392 + $0x60] sm:$0xf]
      %v441 = vld [vmem:[%s392 + $0x64] sm:$0xf]
      %v442 = vld [vmem:[%s392 + $0x68] sm:$0xf]
      %v443 = vld [vmem:[%s392 + $0x6c] sm:$0xf]
      %v444 = vld [vmem:[%s392 + $0x70] sm:$0xf]
      %v445 = vld [vmem:[%s392 + $0x74] sm:$0xf]
      %v446 = vld [vmem:[%s392 + $0x78] sm:$0xf]
      %v447 = vld [vmem:[%s392 + $0x7c] sm:$0xf]
      %v448 = vld [vmem:[%s3] sm:$0xf]
      %v481 = vunpack.c.l.b16 %v416
      %v482 = vunpack.c.l.b16 %v417
      %v483 = vunpack.c.l.b16 %v418
      %v484 = vunpack.c.l.b16 %v419
      %v485 = vunpack.c.l.b16 %v420
      %v486 = vunpack.c.l.b16 %v421
      %v487 = vunpack.c.l.b16 %v422
      %v488 = vunpack.c.l.b16 %v423
      %v489 = vunpack.c.l.b16 %v424
      %v490 = vunpack.c.l.b16 %v425
      %v491 = vunpack.c.l.b16 %v426
      %v492 = vunpack.c.l.b16 %v427
      %v493 = vunpack.c.l.b16 %v428
      %v494 = vunpack.c.l.b16 %v429
      %v495 = vunpack.c.l.b16 %v430
      %v496 = vunpack.c.l.b16 %v431
      %v497 = vunpack.c.l.b16 %v432
      %v498 = vunpack.c.l.b16 %v433
      %v499 = vunpack.c.l.b16 %v434
      %v500 = vunpack.c.l.b16 %v435
      %v501 = vunpack.c.l.b16 %v436
      %v502 = vunpack.c.l.b16 %v437
      %v503 = vunpack.c.l.b16 %v438
      %v504 = vunpack.c.l.b16 %v439
      %v505 = vunpack.c.l.b16 %v440
      %v506 = vunpack.c.l.b16 %v441
      %v507 = vunpack.c.l.b16 %v442
      %v508 = vunpack.c.l.b16 %v443
      %v509 = vunpack.c.l.b16 %v444
      %v510 = vunpack.c.l.b16 %v445
      %v511 = vunpack.c.l.b16 %v446
      %v512 = vunpack.c.l.b16 %v447
      %v513 = vpack.c.b16 %v482, %v481
      %v514 = vpack.c.b16 %v484, %v483
      %v515 = vpack.c.b16 %v486, %v485
      %v516 = vpack.c.b16 %v488, %v487
      %v517 = vpack.c.b16 %v490, %v489
      %v518 = vpack.c.b16 %v492, %v491
      %v519 = vpack.c.b16 %v494, %v493
      %v520 = vpack.c.b16 %v496, %v495
      %v521 = vpack.c.b16 %v498, %v497
      %v522 = vpack.c.b16 %v500, %v499
      %v523 = vpack.c.b16 %v502, %v501
      %v524 = vpack.c.b16 %v504, %v503
      %v525 = vpack.c.b16 %v506, %v505
      %v526 = vpack.c.b16 %v508, %v507
      %v527 = vpack.c.b16 %v510, %v509
      %v528 = vpack.c.b16 %v512, %v511
      %vm529 = vcmask 64512
      %v531 = vsel %vm529, %v513, 0
      %v534 = vsel %vm529, %v514, 0
      %v537 = vsel %vm529, %v515, 0
      %v540 = vsel %vm529, %v516, 0
      %v543 = vsel %vm529, %v517, 0
      %v546 = vsel %vm529, %v518, 0
      %v549 = vsel %vm529, %v519, 0
      %v552 = vsel %vm529, %v520, 0
      %v555 = vsel %vm529, %v521, 0
      %v558 = vsel %vm529, %v522, 0
      %v561 = vsel %vm529, %v523, 0
      %v564 = vsel %vm529, %v524, 0
      %v567 = vsel %vm529, %v525, 0
      %v570 = vsel %vm529, %v526, 0
      %v573 = vsel %vm529, %v527, 0
      %v576 = vsel %vm529, %v528, 0
      %vm578 = vcmask 1043456
      %v580 = vsel %vm578, %v448, 0
      %582 = vmatprep.subr.bf16.mxu0 0
      %583 = vmatpush1.bf16.msra.mxu0 %v580
      %584 = vmatprep.subr.bf16.mxu0 0
      %585 = vmatpush1.bf16.msra.mxu0 0
      %586 = vmatprep.subr.bf16.mxu0 0
      %587 = vmatpush1.bf16.msra.mxu0 0
      %588 = vmatprep.subr.bf16.mxu0 0
      %589 = vmatpush1.bf16.msra.mxu0 0
      %590 = vmatprep.subr.bf16.mxu0 0
      %591 = vmatpush1.bf16.msra.mxu0 0
      %592 = vmatprep.subr.bf16.mxu0 0
      %593 = vmatpush1.bf16.msra.mxu0 0
      %594 = vmatprep.subr.bf16.mxu0 0
      %595 = vmatpush1.bf16.msra.mxu0 0
      %596 = vmatprep.subr.bf16.mxu0 0
      %597 = vmatpush1.bf16.msra.mxu0 0
      %598 = vmatprep.subr.bf16.mxu0 0
      %599 = vmatpush1.bf16.msra.mxu0 0
      %600 = vmatprep.subr.bf16.mxu0 0
      %601 = vmatpush1.bf16.msra.mxu0 0
      %602 = vmatprep.subr.bf16.mxu0 0
      %603 = vmatpush1.bf16.msra.mxu0 0
      %604 = vmatprep.subr.bf16.mxu0 0
      %605 = vmatpush1.bf16.msra.mxu0 0
      %606 = vmatprep.subr.bf16.mxu0 0
      %607 = vmatpush1.bf16.msra.mxu0 0
      %608 = vmatprep.subr.bf16.mxu0 0
      %609 = vmatpush1.bf16.msra.mxu0 0
      %610 = vmatprep.subr.bf16.mxu0 0
      %611 = vmatpush1.bf16.msra.mxu0 0
      %612 = vmatprep.subr.bf16.mxu0 0
      %613 = vmatpush1.bf16.msra.mxu0 0
      %614 = vmatprep.mubr.bf16.mxu0 0
      %615 = vmatmul.mubr.bf16.gmra.mrb[0].mxu0 %v531
      %v616 = vpop.f32.mrb[0].mxu0
      %v617 = vadd.f32 0.0, %v616
      %v618 = vpop.f32.mrb[0].mxu0
      %v619 = vpop.f32.mrb[0].mxu0
      %v620 = vadd.f32 0.0, %v619
      %v621 = vpop.f32.mrb[0].mxu0
      %622 = vmatprep.mubr.bf16.mxu0 0
      %623 = vmatmul.mubr.bf16.gmra.mrb[0].mxu0 %v534
      %v624 = vpop.f32.mrb[0].mxu0
      %v625 = vadd.f32 0.0, %v624
      %v626 = vpop.f32.mrb[0].mxu0
      %v627 = vpop.f32.mrb[0].mxu0
      %v628 = vadd.f32 0.0, %v627
      %v629 = vpop.f32.mrb[0].mxu0
      %630 = vmatprep.mubr.bf16.mxu0 0
      %631 = vmatmul.mubr.bf16.gmra.mrb[0].mxu0 %v537
      %v632 = vpop.f32.mrb[0].mxu0
      %v633 = vadd.f32 0.0, %v632
      %v634 = vpop.f32.mrb[0].mxu0
      %v635 = vpop.f32.mrb[0].mxu0
      %v636 = vadd.f32 0.0, %v635
      %v637 = vpop.f32.mrb[0].mxu0
      %638 = vmatprep.mubr.bf16.mxu0 0
      %639 = vmatmul.mubr.bf16.gmra.mrb[0].mxu0 %v540
      %v640 = vpop.f32.mrb[0].mxu0
      %v641 = vadd.f32 0.0, %v640
      %v642 = vpop.f32.mrb[0].mxu0
      %v643 = vpop.f32.mrb[0].mxu0
      %v644 = vadd.f32 0.0, %v643
      %v645 = vpop.f32.mrb[0].mxu0
      %646 = vmatprep.mubr.bf16.mxu0 0
      %647 = vmatmul.mubr.bf16.gmra.mrb[0].mxu0 %v543
      %v648 = vpop.f32.mrb[0].mxu0
      %v649 = vadd.f32 0.0, %v648
      %v650 = vpop.f32.mrb[0].mxu0
      %v651 = vpop.f32.mrb[0].mxu0
      %v652 = vadd.f32 0.0, %v651
      %v653 = vpop.f32.mrb[0].mxu0
      %654 = vmatprep.mubr.bf16.mxu0 0
      %655 = vmatmul.mubr.bf16.gmra.mrb[0].mxu0 %v546
      %v656 = vpop.f32.mrb[0].mxu0
      %v657 = vadd.f32 0.0, %v656
      %v658 = vpop.f32.mrb[0].mxu0
      %v659 = vpop.f32.mrb[0].mxu0
      %v660 = vadd.f32 0.0, %v659
      %v661 = vpop.f32.mrb[0].mxu0
      %662 = vmatprep.mubr.bf16.mxu0 0
      %663 = vmatmul.mubr.bf16.gmra.mrb[0].mxu0 %v549
      %v664 = vpop.f32.mrb[0].mxu0
      %v665 = vadd.f32 0.0, %v664
      %v666 = vpop.f32.mrb[0].mxu0
      %v667 = vpop.f32.mrb[0].mxu0
      %v668 = vadd.f32 0.0, %v667
      %v669 = vpop.f32.mrb[0].mxu0
      %670 = vmatprep.mubr.bf16.mxu0 0
      %671 = vmatmul.mubr.bf16.gmra.mrb[0].mxu0 %v552
      %v672 = vpop.f32.mrb[0].mxu0
      %v673 = vadd.f32 0.0, %v672
      %v674 = vpop.f32.mrb[0].mxu0
      %v675 = vpop.f32.mrb[0].mxu0
      %v676 = vadd.f32 0.0, %v675
      %v677 = vpop.f32.mrb[0].mxu0
      %678 = vmatprep.mubr.bf16.mxu0 0
      %679 = vmatmul.mubr.bf16.gmra.mrb[0].mxu0 %v555
      %v680 = vpop.f32.mrb[0].mxu0
      %v681 = vadd.f32 0.0, %v680
      %v682 = vpop.f32.mrb[0].mxu0
      %v683 = vpop.f32.mrb[0].mxu0
      %v684 = vadd.f32 0.0, %v683
      %v685 = vpop.f32.mrb[0].mxu0
      %686 = vmatprep.mubr.bf16.mxu0 0
      %687 = vmatmul.mubr.bf16.gmra.mrb[0].mxu0 %v558
      %v688 = vpop.f32.mrb[0].mxu0
      %v689 = vadd.f32 0.0, %v688
      %v690 = vpop.f32.mrb[0].mxu0
      %v691 = vpop.f32.mrb[0].mxu0
      %v692 = vadd.f32 0.0, %v691
      %v693 = vpop.f32.mrb[0].mxu0
      %694 = vmatprep.mubr.bf16.mxu0 0
      %695 = vmatmul.mubr.bf16.gmra.mrb[0].mxu0 %v561
      %v696 = vpop.f32.mrb[0].mxu0
      %v697 = vadd.f32 0.0, %v696
      %v698 = vpop.f32.mrb[0].mxu0
      %v699 = vpop.f32.mrb[0].mxu0
      %v700 = vadd.f32 0.0, %v699
      %v701 = vpop.f32.mrb[0].mxu0
      %702 = vmatprep.mubr.bf16.mxu0 0
      %703 = vmatmul.mubr.bf16.gmra.mrb[0].mxu0 %v564
      %v704 = vpop.f32.mrb[0].mxu0
      %v705 = vadd.f32 0.0, %v704
      %v706 = vpop.f32.mrb[0].mxu0
      %v707 = vpop.f32.mrb[0].mxu0
      %v708 = vadd.f32 0.0, %v707
      %v709 = vpop.f32.mrb[0].mxu0
      %710 = vmatprep.mubr.bf16.mxu0 0
      %711 = vmatmul.mubr.bf16.gmra.mrb[0].mxu0 %v567
      %v712 = vpop.f32.mrb[0].mxu0
      %v713 = vadd.f32 0.0, %v712
      %v714 = vpop.f32.mrb[0].mxu0
      %v715 = vpop.f32.mrb[0].mxu0
      %v716 = vadd.f32 0.0, %v715
      %v717 = vpop.f32.mrb[0].mxu0
      %718 = vmatprep.mubr.bf16.mxu0 0
      %719 = vmatmul.mubr.bf16.gmra.mrb[0].mxu0 %v570
      %v720 = vpop.f32.mrb[0].mxu0
      %v721 = vadd.f32 0.0, %v720
      %v722 = vpop.f32.mrb[0].mxu0
      %v723 = vpop.f32.mrb[0].mxu0
      %v724 = vadd.f32 0.0, %v723
      %v725 = vpop.f32.mrb[0].mxu0
      %726 = vmatprep.mubr.bf16.mxu0 0
      %727 = vmatmul.mubr.bf16.gmra.mrb[0].mxu0 %v573
      %v728 = vpop.f32.mrb[0].mxu0
      %v729 = vadd.f32 0.0, %v728
      %v730 = vpop.f32.mrb[0].mxu0
      %v731 = vpop.f32.mrb[0].mxu0
      %v732 = vadd.f32 0.0, %v731
      %v733 = vpop.f32.mrb[0].mxu0
      %734 = vmatprep.mubr.bf16.mxu0 0
      %735 = vmatmul.mubr.bf16.gmra.mrb[0].mxu0 %v576
      %v736 = vpop.f32.mrb[0].mxu0
      %v737 = vadd.f32 0.0, %v736
      %v738 = vpop.f32.mrb[0].mxu0
      %v739 = vpop.f32.mrb[0].mxu0
      %v740 = vadd.f32 0.0, %v739
      %v741 = vpop.f32.mrb[0].mxu0
      %742 = vdwg.mxu0
      %v743 = vpack.c.bf16 %v620, %v617
      %v744 = vpack.c.bf16 %v628, %v625
      %v745 = vpack.c.bf16 %v636, %v633
      %v746 = vpack.c.bf16 %v644, %v641
      %v747 = vpack.c.bf16 %v652, %v649
      %v748 = vpack.c.bf16 %v660, %v657
      %v749 = vpack.c.bf16 %v668, %v665
      %v750 = vpack.c.bf16 %v676, %v673
      %v751 = vpack.c.bf16 %v684, %v681
      %v752 = vpack.c.bf16 %v692, %v689
      %v753 = vpack.c.bf16 %v700, %v697
      %v754 = vpack.c.bf16 %v708, %v705
      %v755 = vpack.c.bf16 %v716, %v713
      %v756 = vpack.c.bf16 %v724, %v721
      %v757 = vpack.c.bf16 %v732, %v729
      %v758 = vpack.c.bf16 %v740, %v737
      %v759 = vld [vmem:[%s4] sm:$0xf]
      %v760 = vld [vmem:[%s4 + $0x4] sm:$0xf]
      %v761 = vld [vmem:[%s4 + $0x8] sm:$0xf]
      %v762 = vld [vmem:[%s4 + $0xc] sm:$0xf]
      %v763 = vld [vmem:[%s4 + $0x10] sm:$0xf]
      %v764 = vld [vmem:[%s4 + $0x14] sm:$0xf]
      %v765 = vld [vmem:[%s4 + $0x18] sm:$0xf]
      %v766 = vld [vmem:[%s4 + $0x1c] sm:$0xf]
      %v767 = vld [vmem:[%s4 + $0x20] sm:$0xf]
      %v768 = vld [vmem:[%s4 + $0x24] sm:$0xf]
      %v769 = vld [vmem:[%s4 + $0x28] sm:$0xf]
      %v770 = vld [vmem:[%s4 + $0x2c] sm:$0xf]
      %v771 = vld [vmem:[%s4 + $0x30] sm:$0xf]
      %v772 = vld [vmem:[%s4 + $0x34] sm:$0xf]
      %v773 = vld [vmem:[%s4 + $0x38] sm:$0xf]
      %v774 = vld [vmem:[%s4 + $0x3c] sm:$0xf]
      %v791 = vunpack.c.l.b16 %v759
      %v792 = vunpack.c.l.b16 %v760
      %v793 = vunpack.c.l.b16 %v761
      %v794 = vunpack.c.l.b16 %v762
      %v795 = vunpack.c.l.b16 %v763
      %v796 = vunpack.c.l.b16 %v764
      %v797 = vunpack.c.l.b16 %v765
      %v798 = vunpack.c.l.b16 %v766
      %v799 = vunpack.c.l.b16 %v767
      %v800 = vunpack.c.l.b16 %v768
      %v801 = vunpack.c.l.b16 %v769
      %v802 = vunpack.c.l.b16 %v770
      %v803 = vunpack.c.l.b16 %v771
      %v804 = vunpack.c.l.b16 %v772
      %v805 = vunpack.c.l.b16 %v773
      %v806 = vunpack.c.l.b16 %v774
      %v807 = vpack.c.b16 %v792, %v791
      %v808 = vpack.c.b16 %v794, %v793
      %v809 = vpack.c.b16 %v796, %v795
      %v810 = vpack.c.b16 %v798, %v797
      %v811 = vpack.c.b16 %v800, %v799
      %v812 = vpack.c.b16 %v802, %v801
      %v813 = vpack.c.b16 %v804, %v803
      %v814 = vpack.c.b16 %v806, %v805
      %823 = vmatprep.subr.bf16.mxu0 0
      %824 = vmatpush1.bf16.msra.mxu0 %v807
      %825 = vmatprep.subr.bf16.mxu0 0
      %826 = vmatpush1.bf16.msra.mxu0 %v808
      %827 = vmatprep.subr.bf16.mxu0 0
      %828 = vmatpush1.bf16.msra.mxu0 %v809
      %829 = vmatprep.subr.bf16.mxu0 0
      %830 = vmatpush1.bf16.msra.mxu0 %v810
      %831 = vmatprep.subr.bf16.mxu0 0
      %832 = vmatpush1.bf16.msra.mxu0 %v811
      %833 = vmatprep.subr.bf16.mxu0 0
      %834 = vmatpush1.bf16.msra.mxu0 %v812
      %835 = vmatprep.subr.bf16.mxu0 0
      %836 = vmatpush1.bf16.msra.mxu0 %v813
      %837 = vmatprep.subr.bf16.mxu0 0
      %838 = vmatpush1.bf16.msra.mxu0 %v814
      %839 = vmatprep.subr.bf16.mxu0 0
      %840 = vmatpush1.bf16.msra.mxu0 0
      %841 = vmatprep.subr.bf16.mxu0 0
      %842 = vmatpush1.bf16.msra.mxu0 0
      %843 = vmatprep.subr.bf16.mxu0 0
      %844 = vmatpush1.bf16.msra.mxu0 0
      %845 = vmatprep.subr.bf16.mxu0 0
      %846 = vmatpush1.bf16.msra.mxu0 0
      %847 = vmatprep.subr.bf16.mxu0 0
      %848 = vmatpush1.bf16.msra.mxu0 0
      %849 = vmatprep.subr.bf16.mxu0 0
      %850 = vmatpush1.bf16.msra.mxu0 0
      %851 = vmatprep.subr.bf16.mxu0 0
      %852 = vmatpush1.bf16.msra.mxu0 0
      %853 = vmatprep.subr.bf16.mxu0 0
      %854 = vmatpush1.bf16.msra.mxu0 0
      %855 = vmatprep.mubr.bf16.mxu0 0
      %856 = vmatmul.mubr.bf16.gmra.mrb[0].mxu0 %v743
      %v857 = vpop.f32.mrb[0].mxu0
      %v858 = vadd.f32 0.0, %v857
      %v859 = vpop.f32.mrb[0].mxu0
      %v860 = vpop.f32.mrb[0].mxu0
      %v861 = vadd.f32 0.0, %v860
      %v862 = vpop.f32.mrb[0].mxu0
      %863 = vmatprep.mubr.bf16.mxu0 0
      %864 = vmatmul.mubr.bf16.gmra.mrb[0].mxu0 %v744
      %v865 = vpop.f32.mrb[0].mxu0
      %v866 = vadd.f32 0.0, %v865
      %v867 = vpop.f32.mrb[0].mxu0
      %v868 = vpop.f32.mrb[0].mxu0
      %v869 = vadd.f32 0.0, %v868
      %v870 = vpop.f32.mrb[0].mxu0
      %871 = vmatprep.mubr.bf16.mxu0 0
      %872 = vmatmul.mubr.bf16.gmra.mrb[0].mxu0 %v745
      %v873 = vpop.f32.mrb[0].mxu0
      %v874 = vadd.f32 0.0, %v873
      %v875 = vpop.f32.mrb[0].mxu0
      %v876 = vpop.f32.mrb[0].mxu0
      %v877 = vadd.f32 0.0, %v876
      %v878 = vpop.f32.mrb[0].mxu0
      %879 = vmatprep.mubr.bf16.mxu0 0
      %880 = vmatmul.mubr.bf16.gmra.mrb[0].mxu0 %v746
      %v881 = vpop.f32.mrb[0].mxu0
      %v882 = vadd.f32 0.0, %v881
      %v883 = vpop.f32.mrb[0].mxu0
      %v884 = vpop.f32.mrb[0].mxu0
      %v885 = vadd.f32 0.0, %v884
      %v886 = vpop.f32.mrb[0].mxu0
      %887 = vmatprep.mubr.bf16.mxu0 0
      %888 = vmatmul.mubr.bf16.gmra.mrb[0].mxu0 %v747
      %v889 = vpop.f32.mrb[0].mxu0
      %v890 = vadd.f32 0.0, %v889
      %v891 = vpop.f32.mrb[0].mxu0
      %v892 = vpop.f32.mrb[0].mxu0
      %v893 = vadd.f32 0.0, %v892
      %v894 = vpop.f32.mrb[0].mxu0
      %895 = vmatprep.mubr.bf16.mxu0 0
      %896 = vmatmul.mubr.bf16.gmra.mrb[0].mxu0 %v748
      %v897 = vpop.f32.mrb[0].mxu0
      %v898 = vadd.f32 0.0, %v897
      %v899 = vpop.f32.mrb[0].mxu0
      %v900 = vpop.f32.mrb[0].mxu0
      %v901 = vadd.f32 0.0, %v900
      %v902 = vpop.f32.mrb[0].mxu0
      %903 = vmatprep.mubr.bf16.mxu0 0
      %904 = vmatmul.mubr.bf16.gmra.mrb[0].mxu0 %v749
      %v905 = vpop.f32.mrb[0].mxu0
      %v906 = vadd.f32 0.0, %v905
      %v907 = vpop.f32.mrb[0].mxu0
      %v908 = vpop.f32.mrb[0].mxu0
      %v909 = vadd.f32 0.0, %v908
      %v910 = vpop.f32.mrb[0].mxu0
      %911 = vmatprep.mubr.bf16.mxu0 0
      %912 = vmatmul.mubr.bf16.gmra.mrb[0].mxu0 %v750
      %v913 = vpop.f32.mrb[0].mxu0
      %v914 = vadd.f32 0.0, %v913
      %v915 = vpop.f32.mrb[0].mxu0
      %v916 = vpop.f32.mrb[0].mxu0
      %v917 = vadd.f32 0.0, %v916
      %v918 = vpop.f32.mrb[0].mxu0
      %919 = vmatprep.mubr.bf16.mxu0 0
      %920 = vmatmul.mubr.bf16.gmra.mrb[0].mxu0 %v751
      %v921 = vpop.f32.mrb[0].mxu0
      %v922 = vadd.f32 0.0, %v921
      %v923 = vpop.f32.mrb[0].mxu0
      %v924 = vpop.f32.mrb[0].mxu0
      %v925 = vadd.f32 0.0, %v924
      %v926 = vpop.f32.mrb[0].mxu0
      %927 = vmatprep.mubr.bf16.mxu0 0
      %928 = vmatmul.mubr.bf16.gmra.mrb[0].mxu0 %v752
      %v929 = vpop.f32.mrb[0].mxu0
      %v930 = vadd.f32 0.0, %v929
      %v931 = vpop.f32.mrb[0].mxu0
      %v932 = vpop.f32.mrb[0].mxu0
      %v933 = vadd.f32 0.0, %v932
      %v934 = vpop.f32.mrb[0].mxu0
      %935 = vmatprep.mubr.bf16.mxu0 0
      %936 = vmatmul.mubr.bf16.gmra.mrb[0].mxu0 %v753
      %v937 = vpop.f32.mrb[0].mxu0
      %v938 = vadd.f32 0.0, %v937
      %v939 = vpop.f32.mrb[0].mxu0
      %v940 = vpop.f32.mrb[0].mxu0
      %v941 = vadd.f32 0.0, %v940
      %v942 = vpop.f32.mrb[0].mxu0
      %943 = vmatprep.mubr.bf16.mxu0 0
      %944 = vmatmul.mubr.bf16.gmra.mrb[0].mxu0 %v754
      %v945 = vpop.f32.mrb[0].mxu0
      %v946 = vadd.f32 0.0, %v945
      %v947 = vpop.f32.mrb[0].mxu0
      %v948 = vpop.f32.mrb[0].mxu0
      %v949 = vadd.f32 0.0, %v948
      %v950 = vpop.f32.mrb[0].mxu0
      %951 = vmatprep.mubr.bf16.mxu0 0
      %952 = vmatmul.mubr.bf16.gmra.mrb[0].mxu0 %v755
      %v953 = vpop.f32.mrb[0].mxu0
      %v954 = vadd.f32 0.0, %v953
      %v955 = vpop.f32.mrb[0].mxu0
      %v956 = vpop.f32.mrb[0].mxu0
      %v957 = vadd.f32 0.0, %v956
      %v958 = vpop.f32.mrb[0].mxu0
      %959 = vmatprep.mubr.bf16.mxu0 0
      %960 = vmatmul.mubr.bf16.gmra.mrb[0].mxu0 %v756
      %v961 = vpop.f32.mrb[0].mxu0
      %v962 = vadd.f32 0.0, %v961
      %v963 = vpop.f32.mrb[0].mxu0
      %v964 = vpop.f32.mrb[0].mxu0
      %v965 = vadd.f32 0.0, %v964
      %v966 = vpop.f32.mrb[0].mxu0
      %967 = vmatprep.mubr.bf16.mxu0 0
      %968 = vmatmul.mubr.bf16.gmra.mrb[0].mxu0 %v757
      %v969 = vpop.f32.mrb[0].mxu0
      %v970 = vadd.f32 0.0, %v969
      %v971 = vpop.f32.mrb[0].mxu0
      %v972 = vpop.f32.mrb[0].mxu0
      %v973 = vadd.f32 0.0, %v972
      %v974 = vpop.f32.mrb[0].mxu0
      %975 = vmatprep.mubr.bf16.mxu0 0
      %976 = vmatmul.mubr.bf16.gmra.mrb[0].mxu0 %v758
      %v977 = vpop.f32.mrb[0].mxu0
      %v978 = vadd.f32 0.0, %v977
      %v979 = vpop.f32.mrb[0].mxu0
      %v980 = vpop.f32.mrb[0].mxu0
      %v981 = vadd.f32 0.0, %v980
      %v982 = vpop.f32.mrb[0].mxu0
      %983 = vdwg.mxu0
      %v984 = vld [vmem:[%s5] sm:$0xf]
      %985 = vmatprep.subr.bf16.mxu0 0
      %986 = vmatpush1.bf16.xpose.msra.mxu0 %v743
      %987 = vmatprep.subr.bf16.mxu0 0
      %988 = vmatpush1.bf16.xpose.msra.mxu0 0
      %989 = vmatprep.subr.bf16.mxu0 0
      %990 = vmatpush1.bf16.xpose.msra.mxu0 0
      %991 = vmatprep.subr.bf16.mxu0 0
      %992 = vmatpush1.bf16.xpose.msra.mxu0 0
      %993 = vmatprep.subr.bf16.mxu0 0
      %994 = vmatpush1.bf16.xpose.msra.mxu0 0
      %995 = vmatprep.subr.bf16.mxu0 0
      %996 = vmatpush1.bf16.xpose.msra.mxu0 0
      %997 = vmatprep.subr.bf16.mxu0 0
      %998 = vmatpush1.bf16.xpose.msra.mxu0 0
      %999 = vmatprep.subr.bf16.mxu0 0
      %1000 = vmatpush1.bf16.xpose.msra.mxu0 0
      %1001 = vmatprep.subr.bf16.mxu0 0
      %1002 = vmatpush1.bf16.xpose.msra.mxu0 0
      %1003 = vmatprep.subr.bf16.mxu0 0
      %1004 = vmatpush1.bf16.xpose.msra.mxu0 0
      %1005 = vmatprep.subr.bf16.mxu0 0
      %1006 = vmatpush1.bf16.xpose.msra.mxu0 0
      %1007 = vmatprep.subr.bf16.mxu0 0
      %1008 = vmatpush1.bf16.xpose.msra.mxu0 0
      %1009 = vmatprep.subr.bf16.mxu0 0
      %1010 = vmatpush1.bf16.xpose.msra.mxu0 0
      %1011 = vmatprep.subr.bf16.mxu0 0
      %1012 = vmatpush1.bf16.xpose.msra.mxu0 0
      %1013 = vmatprep.subr.bf16.mxu0 0
      %1014 = vmatpush1.bf16.xpose.msra.mxu0 0
      %1015 = vmatprep.subr.bf16.mxu0 0
      %1016 = vmatpush1.bf16.xpose.msra.mxu0 0
      %1017 = vmatprep.mubr.bf16.mxu0 0
      %1018 = vmatmul.mubr.bf16.gmra.mrb[0].mxu0 %v984
      %v1019 = vpop.f32.mrb[0].mxu0
      %v1020 = vadd.f32 0.0, %v1019
      %v1021 = vpop.f32.mrb[0].mxu0
      %v1022 = vpop.f32.mrb[0].mxu0
      %v1023 = vpop.f32.mrb[0].mxu0
      %1024 = vdwg.mxu0
      %1025 = vmatprep.subr.bf16.mxu0 0
      %1026 = vmatpush1.bf16.xpose.msra.mxu0 %v744
      %1027 = vmatprep.subr.bf16.mxu0 0
      %1028 = vmatpush1.bf16.xpose.msra.mxu0 0
      %1029 = vmatprep.subr.bf16.mxu0 0
      %1030 = vmatpush1.bf16.xpose.msra.mxu0 0
      %1031 = vmatprep.subr.bf16.mxu0 0
      %1032 = vmatpush1.bf16.xpose.msra.mxu0 0
      %1033 = vmatprep.subr.bf16.mxu0 0
      %1034 = vmatpush1.bf16.xpose.msra.mxu0 0
      %1035 = vmatprep.subr.bf16.mxu0 0
      %1036 = vmatpush1.bf16.xpose.msra.mxu0 0
      %1037 = vmatprep.subr.bf16.mxu0 0
      %1038 = vmatpush1.bf16.xpose.msra.mxu0 0
      %1039 = vmatprep.subr.bf16.mxu0 0
      %1040 = vmatpush1.bf16.xpose.msra.mxu0 0
      %1041 = vmatprep.subr.bf16.mxu0 0
      %1042 = vmatpush1.bf16.xpose.msra.mxu0 0
      %1043 = vmatprep.subr.bf16.mxu0 0
      %1044 = vmatpush1.bf16.xpose.msra.mxu0 0
      %1045 = vmatprep.subr.bf16.mxu0 0
      %1046 = vmatpush1.bf16.xpose.msra.mxu0 0
      %1047 = vmatprep.subr.bf16.mxu0 0
      %1048 = vmatpush1.bf16.xpose.msra.mxu0 0
      %1049 = vmatprep.subr.bf16.mxu0 0
      %1050 = vmatpush1.bf16.xpose.msra.mxu0 0
      %1051 = vmatprep.subr.bf16.mxu0 0
      %1052 = vmatpush1.bf16.xpose.msra.mxu0 0
      %1053 = vmatprep.subr.bf16.mxu0 0
      %1054 = vmatpush1.bf16.xpose.msra.mxu0 0
      %1055 = vmatprep.subr.bf16.mxu0 0
      %1056 = vmatpush1.bf16.xpose.msra.mxu0 0
      %1057 = vmatprep.mubr.bf16.mxu0 0
      %1058 = vmatmul.mubr.bf16.gmra.mrb[0].mxu0 %v984
      %v1059 = vpop.f32.mrb[0].mxu0
      %v1060 = vadd.f32 0.0, %v1059
      %v1061 = vpop.f32.mrb[0].mxu0
      %v1062 = vpop.f32.mrb[0].mxu0
      %v1063 = vpop.f32.mrb[0].mxu0
      %1064 = vdwg.mxu0
      %1065 = vmatprep.subr.bf16.mxu0 0
      %1066 = vmatpush1.bf16.xpose.msra.mxu0 %v745
      %1067 = vmatprep.subr.bf16.mxu0 0
      %1068 = vmatpush1.bf16.xpose.msra.mxu0 0
      %1069 = vmatprep.subr.bf16.mxu0 0
      %1070 = vmatpush1.bf16.xpose.msra.mxu0 0
      %1071 = vmatprep.subr.bf16.mxu0 0
      %1072 = vmatpush1.bf16.xpose.msra.mxu0 0
      %1073 = vmatprep.subr.bf16.mxu0 0
      %1074 = vmatpush1.bf16.xpose.msra.mxu0 0
      %1075 = vmatprep.subr.bf16.mxu0 0
      %1076 = vmatpush1.bf16.xpose.msra.mxu0 0
      %1077 = vmatprep.subr.bf16.mxu0 0
      %1078 = vmatpush1.bf16.xpose.msra.mxu0 0
      %1079 = vmatprep.subr.bf16.mxu0 0
      %1080 = vmatpush1.bf16.xpose.msra.mxu0 0
      %1081 = vmatprep.subr.bf16.mxu0 0
      %1082 = vmatpush1.bf16.xpose.msra.mxu0 0
      %1083 = vmatprep.subr.bf16.mxu0 0
      %1084 = vmatpush1.bf16.xpose.msra.mxu0 0
      %1085 = vmatprep.subr.bf16.mxu0 0
      %1086 = vmatpush1.bf16.xpose.msra.mxu0 0
      %1087 = vmatprep.subr.bf16.mxu0 0
      %1088 = vmatpush1.bf16.xpose.msra.mxu0 0
      %1089 = vmatprep.subr.bf16.mxu0 0
      %1090 = vmatpush1.bf16.xpose.msra.mxu0 0
      %1091 = vmatprep.subr.bf16.mxu0 0
      %1092 = vmatpush1.bf16.xpose.msra.mxu0 0
      %1093 = vmatprep.subr.bf16.mxu0 0
      %1094 = vmatpush1.bf16.xpose.msra.mxu0 0
      %1095 = vmatprep.subr.bf16.mxu0 0
      %1096 = vmatpush1.bf16.xpose.msra.mxu0 0
      %1097 = vmatprep.mubr.bf16.mxu0 0
      %1098 = vmatmul.mubr.bf16.gmra.mrb[0].mxu0 %v984
      %v1099 = vpop.f32.mrb[0].mxu0
      %v1100 = vadd.f32 0.0, %v1099
      %v1101 = vpop.f32.mrb[0].mxu0
      %v1102 = vpop.f32.mrb[0].mxu0
      %v1103 = vpop.f32.mrb[0].mxu0
      %1104 = vdwg.mxu0
      %1105 = vmatprep.subr.bf16.mxu0 0
      %1106 = vmatpush1.bf16.xpose.msra.mxu0 %v746
      %1107 = vmatprep.subr.bf16.mxu0 0
      %1108 = vmatpush1.bf16.xpose.msra.mxu0 0
      %1109 = vmatprep.subr.bf16.mxu0 0
      %1110 = vmatpush1.bf16.xpose.msra.mxu0 0
      %1111 = vmatprep.subr.bf16.mxu0 0
      %1112 = vmatpush1.bf16.xpose.msra.mxu0 0
      %1113 = vmatprep.subr.bf16.mxu0 0
      %1114 = vmatpush1.bf16.xpose.msra.mxu0 0
      %1115 = vmatprep.subr.bf16.mxu0 0
      %1116 = vmatpush1.bf16.xpose.msra.mxu0 0
      %1117 = vmatprep.subr.bf16.mxu0 0
      %1118 = vmatpush1.bf16.xpose.msra.mxu0 0
      %1119 = vmatprep.subr.bf16.mxu0 0
      %1120 = vmatpush1.bf16.xpose.msra.mxu0 0
      %1121 = vmatprep.subr.bf16.mxu0 0
      %1122 = vmatpush1.bf16.xpose.msra.mxu0 0
      %1123 = vmatprep.subr.bf16.mxu0 0
      %1124 = vmatpush1.bf16.xpose.msra.mxu0 0
      %1125 = vmatprep.subr.bf16.mxu0 0
      %1126 = vmatpush1.bf16.xpose.msra.mxu0 0
      %1127 = vmatprep.subr.bf16.mxu0 0
      %1128 = vmatpush1.bf16.xpose.msra.mxu0 0
      %1129 = vmatprep.subr.bf16.mxu0 0
      %1130 = vmatpush1.bf16.xpose.msra.mxu0 0
      %1131 = vmatprep.subr.bf16.mxu0 0
      %1132 = vmatpush1.bf16.xpose.msra.mxu0 0
      %1133 = vmatprep.subr.bf16.mxu0 0
      %1134 = vmatpush1.bf16.xpose.msra.mxu0 0
      %1135 = vmatprep.subr.bf16.mxu0 0
      %1136 = vmatpush1.bf16.xpose.msra.mxu0 0
      %1137 = vmatprep.mubr.bf16.mxu0 0
      %1138 = vmatmul.mubr.bf16.gmra.mrb[0].mxu0 %v984
      %v1139 = vpop.f32.mrb[0].mxu0
      %v1140 = vadd.f32 0.0, %v1139
      %v1141 = vpop.f32.mrb[0].mxu0
      %v1142 = vpop.f32.mrb[0].mxu0
      %v1143 = vpop.f32.mrb[0].mxu0
      %1144 = vdwg.mxu0
      %1145 = vmatprep.subr.bf16.mxu0 0
      %1146 = vmatpush1.bf16.xpose.msra.mxu0 %v747
      %1147 = vmatprep.subr.bf16.mxu0 0
      %1148 = vmatpush1.bf16.xpose.msra.mxu0 0
      %1149 = vmatprep.subr.bf16.mxu0 0
      %1150 = vmatpush1.bf16.xpose.msra.mxu0 0
      %1151 = vmatprep.subr.bf16.mxu0 0
      %1152 = vmatpush1.bf16.xpose.msra.mxu0 0
      %1153 = vmatprep.subr.bf16.mxu0 0
      %1154 = vmatpush1.bf16.xpose.msra.mxu0 0
      %1155 = vmatprep.subr.bf16.mxu0 0
      %1156 = vmatpush1.bf16.xpose.msra.mxu0 0
      %1157 = vmatprep.subr.bf16.mxu0 0
      %1158 = vmatpush1.bf16.xpose.msra.mxu0 0
      %1159 = vmatprep.subr.bf16.mxu0 0
      %1160 = vmatpush1.bf16.xpose.msra.mxu0 0
      %1161 = vmatprep.subr.bf16.mxu0 0
      %1162 = vmatpush1.bf16.xpose.msra.mxu0 0
      %1163 = vmatprep.subr.bf16.mxu0 0
      %1164 = vmatpush1.bf16.xpose.msra.mxu0 0
      %1165 = vmatprep.subr.bf16.mxu0 0
      %1166 = vmatpush1.bf16.xpose.msra.mxu0 0
      %1167 = vmatprep.subr.bf16.mxu0 0
      %1168 = vmatpush1.bf16.xpose.msra.mxu0 0
      %1169 = vmatprep.subr.bf16.mxu0 0
      %1170 = vmatpush1.bf16.xpose.msra.mxu0 0
      %1171 = vmatprep.subr.bf16.mxu0 0
      %1172 = vmatpush1.bf16.xpose.msra.mxu0 0
      %1173 = vmatprep.subr.bf16.mxu0 0
      %1174 = vmatpush1.bf16.xpose.msra.mxu0 0
      %1175 = vmatprep.subr.bf16.mxu0 0
      %1176 = vmatpush1.bf16.xpose.msra.mxu0 0
      %1177 = vmatprep.mubr.bf16.mxu0 0
      %1178 = vmatmul.mubr.bf16.gmra.mrb[0].mxu0 %v984
      %v1179 = vpop.f32.mrb[0].mxu0
      %v1180 = vadd.f32 0.0, %v1179
      %v1181 = vpop.f32.mrb[0].mxu0
      %v1182 = vpop.f32.mrb[0].mxu0
      %v1183 = vpop.f32.mrb[0].mxu0
      %1184 = vdwg.mxu0
      %1185 = vmatprep.subr.bf16.mxu0 0
      %1186 = vmatpush1.bf16.xpose.msra.mxu0 %v748
      %1187 = vmatprep.subr.bf16.mxu0 0
      %1188 = vmatpush1.bf16.xpose.msra.mxu0 0
      %1189 = vmatprep.subr.bf16.mxu0 0
      %1190 = vmatpush1.bf16.xpose.msra.mxu0 0
      %1191 = vmatprep.subr.bf16.mxu0 0
      %1192 = vmatpush1.bf16.xpose.msra.mxu0 0
      %1193 = vmatprep.subr.bf16.mxu0 0
      %1194 = vmatpush1.bf16.xpose.msra.mxu0 0
      %1195 = vmatprep.subr.bf16.mxu0 0
      %1196 = vmatpush1.bf16.xpose.msra.mxu0 0
      %1197 = vmatprep.subr.bf16.mxu0 0
      %1198 = vmatpush1.bf16.xpose.msra.mxu0 0
      %1199 = vmatprep.subr.bf16.mxu0 0
      %1200 = vmatpush1.bf16.xpose.msra.mxu0 0
      %1201 = vmatprep.subr.bf16.mxu0 0
      %1202 = vmatpush1.bf16.xpose.msra.mxu0 0
      %1203 = vmatprep.subr.bf16.mxu0 0
      %1204 = vmatpush1.bf16.xpose.msra.mxu0 0
      %1205 = vmatprep.subr.bf16.mxu0 0
      %1206 = vmatpush1.bf16.xpose.msra.mxu0 0
      %1207 = vmatprep.subr.bf16.mxu0 0
      %1208 = vmatpush1.bf16.xpose.msra.mxu0 0
      %1209 = vmatprep.subr.bf16.mxu0 0
      %1210 = vmatpush1.bf16.xpose.msra.mxu0 0
      %1211 = vmatprep.subr.bf16.mxu0 0
      %1212 = vmatpush1.bf16.xpose.msra.mxu0 0
      %1213 = vmatprep.subr.bf16.mxu0 0
      %1214 = vmatpush1.bf16.xpose.msra.mxu0 0
      %1215 = vmatprep.subr.bf16.mxu0 0
      %1216 = vmatpush1.bf16.xpose.msra.mxu0 0
      %1217 = vmatprep.mubr.bf16.mxu0 0
      %1218 = vmatmul.mubr.bf16.gmra.mrb[0].mxu0 %v984
      %v1219 = vpop.f32.mrb[0].mxu0
      %v1220 = vadd.f32 0.0, %v1219
      %v1221 = vpop.f32.mrb[0].mxu0
      %v1222 = vpop.f32.mrb[0].mxu0
      %v1223 = vpop.f32.mrb[0].mxu0
      %1224 = vdwg.mxu0
      %1225 = vmatprep.subr.bf16.mxu0 0
      %1226 = vmatpush1.bf16.xpose.msra.mxu0 %v749
      %1227 = vmatprep.subr.bf16.mxu0 0
      %1228 = vmatpush1.bf16.xpose.msra.mxu0 0
      %1229 = vmatprep.subr.bf16.mxu0 0
      %1230 = vmatpush1.bf16.xpose.msra.mxu0 0
      %1231 = vmatprep.subr.bf16.mxu0 0
      %1232 = vmatpush1.bf16.xpose.msra.mxu0 0
      %1233 = vmatprep.subr.bf16.mxu0 0
      %1234 = vmatpush1.bf16.xpose.msra.mxu0 0
      %1235 = vmatprep.subr.bf16.mxu0 0
      %1236 = vmatpush1.bf16.xpose.msra.mxu0 0
      %1237 = vmatprep.subr.bf16.mxu0 0
      %1238 = vmatpush1.bf16.xpose.msra.mxu0 0
      %1239 = vmatprep.subr.bf16.mxu0 0
      %1240 = vmatpush1.bf16.xpose.msra.mxu0 0
      %1241 = vmatprep.subr.bf16.mxu0 0
      %1242 = vmatpush1.bf16.xpose.msra.mxu0 0
      %1243 = vmatprep.subr.bf16.mxu0 0
      %1244 = vmatpush1.bf16.xpose.msra.mxu0 0
      %1245 = vmatprep.subr.bf16.mxu0 0
      %1246 = vmatpush1.bf16.xpose.msra.mxu0 0
      %1247 = vmatprep.subr.bf16.mxu0 0
      %1248 = vmatpush1.bf16.xpose.msra.mxu0 0
      %1249 = vmatprep.subr.bf16.mxu0 0
      %1250 = vmatpush1.bf16.xpose.msra.mxu0 0
      %1251 = vmatprep.subr.bf16.mxu0 0
      %1252 = vmatpush1.bf16.xpose.msra.mxu0 0
      %1253 = vmatprep.subr.bf16.mxu0 0
      %1254 = vmatpush1.bf16.xpose.msra.mxu0 0
      %1255 = vmatprep.subr.bf16.mxu0 0
      %1256 = vmatpush1.bf16.xpose.msra.mxu0 0
      %1257 = vmatprep.mubr.bf16.mxu0 0
      %1258 = vmatmul.mubr.bf16.gmra.mrb[0].mxu0 %v984
      %v1259 = vpop.f32.mrb[0].mxu0
      %v1260 = vadd.f32 0.0, %v1259
      %v1261 = vpop.f32.mrb[0].mxu0
      %v1262 = vpop.f32.mrb[0].mxu0
      %v1263 = vpop.f32.mrb[0].mxu0
      %1264 = vdwg.mxu0
      %1265 = vmatprep.subr.bf16.mxu0 0
      %1266 = vmatpush1.bf16.xpose.msra.mxu0 %v750
      %1267 = vmatprep.subr.bf16.mxu0 0
      %1268 = vmatpush1.bf16.xpose.msra.mxu0 0
      %1269 = vmatprep.subr.bf16.mxu0 0
      %1270 = vmatpush1.bf16.xpose.msra.mxu0 0
      %1271 = vmatprep.subr.bf16.mxu0 0
      %1272 = vmatpush1.bf16.xpose.msra.mxu0 0
      %1273 = vmatprep.subr.bf16.mxu0 0
      %1274 = vmatpush1.bf16.xpose.msra.mxu0 0
      %1275 = vmatprep.subr.bf16.mxu0 0
      %1276 = vmatpush1.bf16.xpose.msra.mxu0 0
      %1277 = vmatprep.subr.bf16.mxu0 0
      %1278 = vmatpush1.bf16.xpose.msra.mxu0 0
      %1279 = vmatprep.subr.bf16.mxu0 0
      %1280 = vmatpush1.bf16.xpose.msra.mxu0 0
      %1281 = vmatprep.subr.bf16.mxu0 0
      %1282 = vmatpush1.bf16.xpose.msra.mxu0 0
      %1283 = vmatprep.subr.bf16.mxu0 0
      %1284 = vmatpush1.bf16.xpose.msra.mxu0 0
      %1285 = vmatprep.subr.bf16.mxu0 0
      %1286 = vmatpush1.bf16.xpose.msra.mxu0 0
      %1287 = vmatprep.subr.bf16.mxu0 0
      %1288 = vmatpush1.bf16.xpose.msra.mxu0 0
      %1289 = vmatprep.subr.bf16.mxu0 0
      %1290 = vmatpush1.bf16.xpose.msra.mxu0 0
      %1291 = vmatprep.subr.bf16.mxu0 0
      %1292 = vmatpush1.bf16.xpose.msra.mxu0 0
      %1293 = vmatprep.subr.bf16.mxu0 0
      %1294 = vmatpush1.bf16.xpose.msra.mxu0 0
      %1295 = vmatprep.subr.bf16.mxu0 0
      %1296 = vmatpush1.bf16.xpose.msra.mxu0 0
      %1297 = vmatprep.mubr.bf16.mxu0 0
      %1298 = vmatmul.mubr.bf16.gmra.mrb[0].mxu0 %v984
      %v1299 = vpop.f32.mrb[0].mxu0
      %v1300 = vadd.f32 0.0, %v1299
      %v1301 = vpop.f32.mrb[0].mxu0
      %v1302 = vpop.f32.mrb[0].mxu0
      %v1303 = vpop.f32.mrb[0].mxu0
      %1304 = vdwg.mxu0
      %1305 = vmatprep.subr.bf16.mxu0 0
      %1306 = vmatpush1.bf16.xpose.msra.mxu0 %v751
      %1307 = vmatprep.subr.bf16.mxu0 0
      %1308 = vmatpush1.bf16.xpose.msra.mxu0 0
      %1309 = vmatprep.subr.bf16.mxu0 0
      %1310 = vmatpush1.bf16.xpose.msra.mxu0 0
      %1311 = vmatprep.subr.bf16.mxu0 0
      %1312 = vmatpush1.bf16.xpose.msra.mxu0 0
      %1313 = vmatprep.subr.bf16.mxu0 0
      %1314 = vmatpush1.bf16.xpose.msra.mxu0 0
      %1315 = vmatprep.subr.bf16.mxu0 0
      %1316 = vmatpush1.bf16.xpose.msra.mxu0 0
      %1317 = vmatprep.subr.bf16.mxu0 0
      %1318 = vmatpush1.bf16.xpose.msra.mxu0 0
      %1319 = vmatprep.subr.bf16.mxu0 0
      %1320 = vmatpush1.bf16.xpose.msra.mxu0 0
      %1321 = vmatprep.subr.bf16.mxu0 0
      %1322 = vmatpush1.bf16.xpose.msra.mxu0 0
      %1323 = vmatprep.subr.bf16.mxu0 0
      %1324 = vmatpush1.bf16.xpose.msra.mxu0 0
      %1325 = vmatprep.subr.bf16.mxu0 0
      %1326 = vmatpush1.bf16.xpose.msra.mxu0 0
      %1327 = vmatprep.subr.bf16.mxu0 0
      %1328 = vmatpush1.bf16.xpose.msra.mxu0 0
      %1329 = vmatprep.subr.bf16.mxu0 0
      %1330 = vmatpush1.bf16.xpose.msra.mxu0 0
      %1331 = vmatprep.subr.bf16.mxu0 0
      %1332 = vmatpush1.bf16.xpose.msra.mxu0 0
      %1333 = vmatprep.subr.bf16.mxu0 0
      %1334 = vmatpush1.bf16.xpose.msra.mxu0 0
      %1335 = vmatprep.subr.bf16.mxu0 0
      %1336 = vmatpush1.bf16.xpose.msra.mxu0 0
      %1337 = vmatprep.mubr.bf16.mxu0 0
      %1338 = vmatmul.mubr.bf16.gmra.mrb[0].mxu0 %v984
      %v1339 = vpop.f32.mrb[0].mxu0
      %v1340 = vadd.f32 0.0, %v1339
      %v1341 = vpop.f32.mrb[0].mxu0
      %v1342 = vpop.f32.mrb[0].mxu0
      %v1343 = vpop.f32.mrb[0].mxu0
      %1344 = vdwg.mxu0
      %1345 = vmatprep.subr.bf16.mxu0 0
      %1346 = vmatpush1.bf16.xpose.msra.mxu0 %v752
      %1347 = vmatprep.subr.bf16.mxu0 0
      %1348 = vmatpush1.bf16.xpose.msra.mxu0 0
      %1349 = vmatprep.subr.bf16.mxu0 0
      %1350 = vmatpush1.bf16.xpose.msra.mxu0 0
      %1351 = vmatprep.subr.bf16.mxu0 0
      %1352 = vmatpush1.bf16.xpose.msra.mxu0 0
      %1353 = vmatprep.subr.bf16.mxu0 0
      %1354 = vmatpush1.bf16.xpose.msra.mxu0 0
      %1355 = vmatprep.subr.bf16.mxu0 0
      %1356 = vmatpush1.bf16.xpose.msra.mxu0 0
      %1357 = vmatprep.subr.bf16.mxu0 0
      %1358 = vmatpush1.bf16.xpose.msra.mxu0 0
      %1359 = vmatprep.subr.bf16.mxu0 0
      %1360 = vmatpush1.bf16.xpose.msra.mxu0 0
      %1361 = vmatprep.subr.bf16.mxu0 0
      %1362 = vmatpush1.bf16.xpose.msra.mxu0 0
      %1363 = vmatprep.subr.bf16.mxu0 0
      %1364 = vmatpush1.bf16.xpose.msra.mxu0 0
      %1365 = vmatprep.subr.bf16.mxu0 0
      %1366 = vmatpush1.bf16.xpose.msra.mxu0 0
      %1367 = vmatprep.subr.bf16.mxu0 0
      %1368 = vmatpush1.bf16.xpose.msra.mxu0 0
      %1369 = vmatprep.subr.bf16.mxu0 0
      %1370 = vmatpush1.bf16.xpose.msra.mxu0 0
      %1371 = vmatprep.subr.bf16.mxu0 0
      %1372 = vmatpush1.bf16.xpose.msra.mxu0 0
      %1373 = vmatprep.subr.bf16.mxu0 0
      %1374 = vmatpush1.bf16.xpose.msra.mxu0 0
      %1375 = vmatprep.subr.bf16.mxu0 0
      %1376 = vmatpush1.bf16.xpose.msra.mxu0 0
      %1377 = vmatprep.mubr.bf16.mxu0 0
      %1378 = vmatmul.mubr.bf16.gmra.mrb[0].mxu0 %v984
      %v1379 = vpop.f32.mrb[0].mxu0
      %v1380 = vadd.f32 0.0, %v1379
      %v1381 = vpop.f32.mrb[0].mxu0
      %v1382 = vpop.f32.mrb[0].mxu0
      %v1383 = vpop.f32.mrb[0].mxu0
      %1384 = vdwg.mxu0
      %1385 = vmatprep.subr.bf16.mxu0 0
      %1386 = vmatpush1.bf16.xpose.msra.mxu0 %v753
      %1387 = vmatprep.subr.bf16.mxu0 0
      %1388 = vmatpush1.bf16.xpose.msra.mxu0 0
      %1389 = vmatprep.subr.bf16.mxu0 0
      %1390 = vmatpush1.bf16.xpose.msra.mxu0 0
      %1391 = vmatprep.subr.bf16.mxu0 0
      %1392 = vmatpush1.bf16.xpose.msra.mxu0 0
      %1393 = vmatprep.subr.bf16.mxu0 0
      %1394 = vmatpush1.bf16.xpose.msra.mxu0 0
      %1395 = vmatprep.subr.bf16.mxu0 0
      %1396 = vmatpush1.bf16.xpose.msra.mxu0 0
      %1397 = vmatprep.subr.bf16.mxu0 0
      %1398 = vmatpush1.bf16.xpose.msra.mxu0 0
      %1399 = vmatprep.subr.bf16.mxu0 0
      %1400 = vmatpush1.bf16.xpose.msra.mxu0 0
      %1401 = vmatprep.subr.bf16.mxu0 0
      %1402 = vmatpush1.bf16.xpose.msra.mxu0 0
      %1403 = vmatprep.subr.bf16.mxu0 0
      %1404 = vmatpush1.bf16.xpose.msra.mxu0 0
      %1405 = vmatprep.subr.bf16.mxu0 0
      %1406 = vmatpush1.bf16.xpose.msra.mxu0 0
      %1407 = vmatprep.subr.bf16.mxu0 0
      %1408 = vmatpush1.bf16.xpose.msra.mxu0 0
      %1409 = vmatprep.subr.bf16.mxu0 0
      %1410 = vmatpush1.bf16.xpose.msra.mxu0 0
      %1411 = vmatprep.subr.bf16.mxu0 0
      %1412 = vmatpush1.bf16.xpose.msra.mxu0 0
      %1413 = vmatprep.subr.bf16.mxu0 0
      %1414 = vmatpush1.bf16.xpose.msra.mxu0 0
      %1415 = vmatprep.subr.bf16.mxu0 0
      %1416 = vmatpush1.bf16.xpose.msra.mxu0 0
      %1417 = vmatprep.mubr.bf16.mxu0 0
      %1418 = vmatmul.mubr.bf16.gmra.mrb[0].mxu0 %v984
      %v1419 = vpop.f32.mrb[0].mxu0
      %v1420 = vadd.f32 0.0, %v1419
      %v1421 = vpop.f32.mrb[0].mxu0
      %v1422 = vpop.f32.mrb[0].mxu0
      %v1423 = vpop.f32.mrb[0].mxu0
      %1424 = vdwg.mxu0
      %1425 = vmatprep.subr.bf16.mxu0 0
      %1426 = vmatpush1.bf16.xpose.msra.mxu0 %v754
      %1427 = vmatprep.subr.bf16.mxu0 0
      %1428 = vmatpush1.bf16.xpose.msra.mxu0 0
      %1429 = vmatprep.subr.bf16.mxu0 0
      %1430 = vmatpush1.bf16.xpose.msra.mxu0 0
      %1431 = vmatprep.subr.bf16.mxu0 0
      %1432 = vmatpush1.bf16.xpose.msra.mxu0 0
      %1433 = vmatprep.subr.bf16.mxu0 0
      %1434 = vmatpush1.bf16.xpose.msra.mxu0 0
      %1435 = vmatprep.subr.bf16.mxu0 0
      %1436 = vmatpush1.bf16.xpose.msra.mxu0 0
      %1437 = vmatprep.subr.bf16.mxu0 0
      %1438 = vmatpush1.bf16.xpose.msra.mxu0 0
      %1439 = vmatprep.subr.bf16.mxu0 0
      %1440 = vmatpush1.bf16.xpose.msra.mxu0 0
      %1441 = vmatprep.subr.bf16.mxu0 0
      %1442 = vmatpush1.bf16.xpose.msra.mxu0 0
      %1443 = vmatprep.subr.bf16.mxu0 0
      %1444 = vmatpush1.bf16.xpose.msra.mxu0 0
      %1445 = vmatprep.subr.bf16.mxu0 0
      %1446 = vmatpush1.bf16.xpose.msra.mxu0 0
      %1447 = vmatprep.subr.bf16.mxu0 0
      %1448 = vmatpush1.bf16.xpose.msra.mxu0 0
      %1449 = vmatprep.subr.bf16.mxu0 0
      %1450 = vmatpush1.bf16.xpose.msra.mxu0 0
      %1451 = vmatprep.subr.bf16.mxu0 0
      %1452 = vmatpush1.bf16.xpose.msra.mxu0 0
      %1453 = vmatprep.subr.bf16.mxu0 0
      %1454 = vmatpush1.bf16.xpose.msra.mxu0 0
      %1455 = vmatprep.subr.bf16.mxu0 0
      %1456 = vmatpush1.bf16.xpose.msra.mxu0 0
      %1457 = vmatprep.mubr.bf16.mxu0 0
      %1458 = vmatmul.mubr.bf16.gmra.mrb[0].mxu0 %v984
      %v1459 = vpop.f32.mrb[0].mxu0
      %v1460 = vadd.f32 0.0, %v1459
      %v1461 = vpop.f32.mrb[0].mxu0
      %v1462 = vpop.f32.mrb[0].mxu0
      %v1463 = vpop.f32.mrb[0].mxu0
      %1464 = vdwg.mxu0
      %1465 = vmatprep.subr.bf16.mxu0 0
      %1466 = vmatpush1.bf16.xpose.msra.mxu0 %v755
      %1467 = vmatprep.subr.bf16.mxu0 0
      %1468 = vmatpush1.bf16.xpose.msra.mxu0 0
      %1469 = vmatprep.subr.bf16.mxu0 0
      %1470 = vmatpush1.bf16.xpose.msra.mxu0 0
      %1471 = vmatprep.subr.bf16.mxu0 0
      %1472 = vmatpush1.bf16.xpose.msra.mxu0 0
      %1473 = vmatprep.subr.bf16.mxu0 0
      %1474 = vmatpush1.bf16.xpose.msra.mxu0 0
      %1475 = vmatprep.subr.bf16.mxu0 0
      %1476 = vmatpush1.bf16.xpose.msra.mxu0 0
      %1477 = vmatprep.subr.bf16.mxu0 0
      %1478 = vmatpush1.bf16.xpose.msra.mxu0 0
      %1479 = vmatprep.subr.bf16.mxu0 0
      %1480 = vmatpush1.bf16.xpose.msra.mxu0 0
      %1481 = vmatprep.subr.bf16.mxu0 0
      %1482 = vmatpush1.bf16.xpose.msra.mxu0 0
      %1483 = vmatprep.subr.bf16.mxu0 0
      %1484 = vmatpush1.bf16.xpose.msra.mxu0 0
      %1485 = vmatprep.subr.bf16.mxu0 0
      %1486 = vmatpush1.bf16.xpose.msra.mxu0 0
      %1487 = vmatprep.subr.bf16.mxu0 0
      %1488 = vmatpush1.bf16.xpose.msra.mxu0 0
      %1489 = vmatprep.subr.bf16.mxu0 0
      %1490 = vmatpush1.bf16.xpose.msra.mxu0 0
      %1491 = vmatprep.subr.bf16.mxu0 0
      %1492 = vmatpush1.bf16.xpose.msra.mxu0 0
      %1493 = vmatprep.subr.bf16.mxu0 0
      %1494 = vmatpush1.bf16.xpose.msra.mxu0 0
      %1495 = vmatprep.subr.bf16.mxu0 0
      %1496 = vmatpush1.bf16.xpose.msra.mxu0 0
      %1497 = vmatprep.mubr.bf16.mxu0 0
      %1498 = vmatmul.mubr.bf16.gmra.mrb[0].mxu0 %v984
      %v1499 = vpop.f32.mrb[0].mxu0
      %v1500 = vadd.f32 0.0, %v1499
      %v1501 = vpop.f32.mrb[0].mxu0
      %v1502 = vpop.f32.mrb[0].mxu0
      %v1503 = vpop.f32.mrb[0].mxu0
      %1504 = vdwg.mxu0
      %1505 = vmatprep.subr.bf16.mxu0 0
      %1506 = vmatpush1.bf16.xpose.msra.mxu0 %v756
      %1507 = vmatprep.subr.bf16.mxu0 0
      %1508 = vmatpush1.bf16.xpose.msra.mxu0 0
      %1509 = vmatprep.subr.bf16.mxu0 0
      %1510 = vmatpush1.bf16.xpose.msra.mxu0 0
      %1511 = vmatprep.subr.bf16.mxu0 0
      %1512 = vmatpush1.bf16.xpose.msra.mxu0 0
      %1513 = vmatprep.subr.bf16.mxu0 0
      %1514 = vmatpush1.bf16.xpose.msra.mxu0 0
      %1515 = vmatprep.subr.bf16.mxu0 0
      %1516 = vmatpush1.bf16.xpose.msra.mxu0 0
      %1517 = vmatprep.subr.bf16.mxu0 0
      %1518 = vmatpush1.bf16.xpose.msra.mxu0 0
      %1519 = vmatprep.subr.bf16.mxu0 0
      %1520 = vmatpush1.bf16.xpose.msra.mxu0 0
      %1521 = vmatprep.subr.bf16.mxu0 0
      %1522 = vmatpush1.bf16.xpose.msra.mxu0 0
      %1523 = vmatprep.subr.bf16.mxu0 0
      %1524 = vmatpush1.bf16.xpose.msra.mxu0 0
      %1525 = vmatprep.subr.bf16.mxu0 0
      %1526 = vmatpush1.bf16.xpose.msra.mxu0 0
      %1527 = vmatprep.subr.bf16.mxu0 0
      %1528 = vmatpush1.bf16.xpose.msra.mxu0 0
      %1529 = vmatprep.subr.bf16.mxu0 0
      %1530 = vmatpush1.bf16.xpose.msra.mxu0 0
      %1531 = vmatprep.subr.bf16.mxu0 0
      %1532 = vmatpush1.bf16.xpose.msra.mxu0 0
      %1533 = vmatprep.subr.bf16.mxu0 0
      %1534 = vmatpush1.bf16.xpose.msra.mxu0 0
      %1535 = vmatprep.subr.bf16.mxu0 0
      %1536 = vmatpush1.bf16.xpose.msra.mxu0 0
      %1537 = vmatprep.mubr.bf16.mxu0 0
      %1538 = vmatmul.mubr.bf16.gmra.mrb[0].mxu0 %v984
      %v1539 = vpop.f32.mrb[0].mxu0
      %v1540 = vadd.f32 0.0, %v1539
      %v1541 = vpop.f32.mrb[0].mxu0
      %v1542 = vpop.f32.mrb[0].mxu0
      %v1543 = vpop.f32.mrb[0].mxu0
      %1544 = vdwg.mxu0
      %1545 = vmatprep.subr.bf16.mxu0 0
      %1546 = vmatpush1.bf16.xpose.msra.mxu0 %v757
      %1547 = vmatprep.subr.bf16.mxu0 0
      %1548 = vmatpush1.bf16.xpose.msra.mxu0 0
      %1549 = vmatprep.subr.bf16.mxu0 0
      %1550 = vmatpush1.bf16.xpose.msra.mxu0 0
      %1551 = vmatprep.subr.bf16.mxu0 0
      %1552 = vmatpush1.bf16.xpose.msra.mxu0 0
      %1553 = vmatprep.subr.bf16.mxu0 0
      %1554 = vmatpush1.bf16.xpose.msra.mxu0 0
      %1555 = vmatprep.subr.bf16.mxu0 0
      %1556 = vmatpush1.bf16.xpose.msra.mxu0 0
      %1557 = vmatprep.subr.bf16.mxu0 0
      %1558 = vmatpush1.bf16.xpose.msra.mxu0 0
      %1559 = vmatprep.subr.bf16.mxu0 0
      %1560 = vmatpush1.bf16.xpose.msra.mxu0 0
      %1561 = vmatprep.subr.bf16.mxu0 0
      %1562 = vmatpush1.bf16.xpose.msra.mxu0 0
      %1563 = vmatprep.subr.bf16.mxu0 0
      %1564 = vmatpush1.bf16.xpose.msra.mxu0 0
      %1565 = vmatprep.subr.bf16.mxu0 0
      %1566 = vmatpush1.bf16.xpose.msra.mxu0 0
      %1567 = vmatprep.subr.bf16.mxu0 0
      %1568 = vmatpush1.bf16.xpose.msra.mxu0 0
      %1569 = vmatprep.subr.bf16.mxu0 0
      %1570 = vmatpush1.bf16.xpose.msra.mxu0 0
      %1571 = vmatprep.subr.bf16.mxu0 0
      %1572 = vmatpush1.bf16.xpose.msra.mxu0 0
      %1573 = vmatprep.subr.bf16.mxu0 0
      %1574 = vmatpush1.bf16.xpose.msra.mxu0 0
      %1575 = vmatprep.subr.bf16.mxu0 0
      %1576 = vmatpush1.bf16.xpose.msra.mxu0 0
      %1577 = vmatprep.mubr.bf16.mxu0 0
      %1578 = vmatmul.mubr.bf16.gmra.mrb[0].mxu0 %v984
      %v1579 = vpop.f32.mrb[0].mxu0
      %v1580 = vadd.f32 0.0, %v1579
      %v1581 = vpop.f32.mrb[0].mxu0
      %v1582 = vpop.f32.mrb[0].mxu0
      %v1583 = vpop.f32.mrb[0].mxu0
      %1584 = vdwg.mxu0
      %1585 = vmatprep.subr.bf16.mxu0 0
      %1586 = vmatpush1.bf16.xpose.msra.mxu0 %v758
      %1587 = vmatprep.subr.bf16.mxu0 0
      %1588 = vmatpush1.bf16.xpose.msra.mxu0 0
      %1589 = vmatprep.subr.bf16.mxu0 0
      %1590 = vmatpush1.bf16.xpose.msra.mxu0 0
      %1591 = vmatprep.subr.bf16.mxu0 0
      %1592 = vmatpush1.bf16.xpose.msra.mxu0 0
      %1593 = vmatprep.subr.bf16.mxu0 0
      %1594 = vmatpush1.bf16.xpose.msra.mxu0 0
      %1595 = vmatprep.subr.bf16.mxu0 0
      %1596 = vmatpush1.bf16.xpose.msra.mxu0 0
      %1597 = vmatprep.subr.bf16.mxu0 0
      %1598 = vmatpush1.bf16.xpose.msra.mxu0 0
      %1599 = vmatprep.subr.bf16.mxu0 0
      %1600 = vmatpush1.bf16.xpose.msra.mxu0 0
      %1601 = vmatprep.subr.bf16.mxu0 0
      %1602 = vmatpush1.bf16.xpose.msra.mxu0 0
      %1603 = vmatprep.subr.bf16.mxu0 0
      %1604 = vmatpush1.bf16.xpose.msra.mxu0 0
      %1605 = vmatprep.subr.bf16.mxu0 0
      %1606 = vmatpush1.bf16.xpose.msra.mxu0 0
      %1607 = vmatprep.subr.bf16.mxu0 0
      %1608 = vmatpush1.bf16.xpose.msra.mxu0 0
      %1609 = vmatprep.subr.bf16.mxu0 0
      %1610 = vmatpush1.bf16.xpose.msra.mxu0 0
      %1611 = vmatprep.subr.bf16.mxu0 0
      %1612 = vmatpush1.bf16.xpose.msra.mxu0 0
      %1613 = vmatprep.subr.bf16.mxu0 0
      %1614 = vmatpush1.bf16.xpose.msra.mxu0 0
      %1615 = vmatprep.subr.bf16.mxu0 0
      %1616 = vmatpush1.bf16.xpose.msra.mxu0 0
      %1617 = vmatprep.mubr.bf16.mxu0 0
      %1618 = vmatmul.mubr.bf16.gmra.mrb[0].mxu0 %v984
      %v1619 = vpop.f32.mrb[0].mxu0
      %v1620 = vadd.f32 0.0, %v1619
      %v1621 = vpop.f32.mrb[0].mxu0
      %v1622 = vpop.f32.mrb[0].mxu0
      %v1623 = vpop.f32.mrb[0].mxu0
      %1624 = vdwg.mxu0
      %1626 = vset.pattern.permute.xlu0 0
      %1627 = vperm.xlu0 %1626, %v858
      %v1628 = vpop.permute.xlu0 %1627
      %1631 = vset.pattern.permute.xlu0 0
      %1632 = vperm.xlu0 %1631, %v861
      %v1633 = vpop.permute.xlu0 %1632
      %1636 = vset.pattern.permute.xlu0 0
      %1637 = vperm.xlu0 %1636, %v866
      %v1638 = vpop.permute.xlu0 %1637
      %1641 = vset.pattern.permute.xlu0 0
      %1642 = vperm.xlu0 %1641, %v869
      %v1643 = vpop.permute.xlu0 %1642
      %1646 = vset.pattern.permute.xlu0 0
      %1647 = vperm.xlu0 %1646, %v874
      %v1648 = vpop.permute.xlu0 %1647
      %1651 = vset.pattern.permute.xlu0 0
      %1652 = vperm.xlu0 %1651, %v877
      %v1653 = vpop.permute.xlu0 %1652
      %1656 = vset.pattern.permute.xlu0 0
      %1657 = vperm.xlu0 %1656, %v882
      %v1658 = vpop.permute.xlu0 %1657
      %1661 = vset.pattern.permute.xlu0 0
      %1662 = vperm.xlu0 %1661, %v885
      %v1663 = vpop.permute.xlu0 %1662
      %1666 = vset.pattern.permute.xlu0 0
      %1667 = vperm.xlu0 %1666, %v890
      %v1668 = vpop.permute.xlu0 %1667
      %1671 = vset.pattern.permute.xlu0 0
      %1672 = vperm.xlu0 %1671, %v893
      %v1673 = vpop.permute.xlu0 %1672
      %1676 = vset.pattern.permute.xlu0 0
      %1677 = vperm.xlu0 %1676, %v898
      %v1678 = vpop.permute.xlu0 %1677
      %1681 = vset.pattern.permute.xlu0 0
      %1682 = vperm.xlu0 %1681, %v901
      %v1683 = vpop.permute.xlu0 %1682
      %1686 = vset.pattern.permute.xlu0 0
      %1687 = vperm.xlu0 %1686, %v906
      %v1688 = vpop.permute.xlu0 %1687
      %1691 = vset.pattern.permute.xlu0 0
      %1692 = vperm.xlu0 %1691, %v909
      %v1693 = vpop.permute.xlu0 %1692
      %1696 = vset.pattern.permute.xlu0 0
      %1697 = vperm.xlu0 %1696, %v914
      %v1698 = vpop.permute.xlu0 %1697
      %1701 = vset.pattern.permute.xlu0 0
      %1702 = vperm.xlu0 %1701, %v917
      %v1703 = vpop.permute.xlu0 %1702
      %1706 = vset.pattern.permute.xlu0 0
      %1707 = vperm.xlu0 %1706, %v922
      %v1708 = vpop.permute.xlu0 %1707
      %1711 = vset.pattern.permute.xlu0 0
      %1712 = vperm.xlu0 %1711, %v925
      %v1713 = vpop.permute.xlu0 %1712
      %1716 = vset.pattern.permute.xlu0 0
      %1717 = vperm.xlu0 %1716, %v930
      %v1718 = vpop.permute.xlu0 %1717
      %1721 = vset.pattern.permute.xlu0 0
      %1722 = vperm.xlu0 %1721, %v933
      %v1723 = vpop.permute.xlu0 %1722
      %1726 = vset.pattern.permute.xlu0 0
      %1727 = vperm.xlu0 %1726, %v938
      %v1728 = vpop.permute.xlu0 %1727
      %1731 = vset.pattern.permute.xlu0 0
      %1732 = vperm.xlu0 %1731, %v941
      %v1733 = vpop.permute.xlu0 %1732
      %1736 = vset.pattern.permute.xlu0 0
      %1737 = vperm.xlu0 %1736, %v946
      %v1738 = vpop.permute.xlu0 %1737
      %1741 = vset.pattern.permute.xlu0 0
      %1742 = vperm.xlu0 %1741, %v949
      %v1743 = vpop.permute.xlu0 %1742
      %1746 = vset.pattern.permute.xlu0 0
      %1747 = vperm.xlu0 %1746, %v954
      %v1748 = vpop.permute.xlu0 %1747
      %1751 = vset.pattern.permute.xlu0 0
      %1752 = vperm.xlu0 %1751, %v957
      %v1753 = vpop.permute.xlu0 %1752
      %1756 = vset.pattern.permute.xlu0 0
      %1757 = vperm.xlu0 %1756, %v962
      %v1758 = vpop.permute.xlu0 %1757
      %1761 = vset.pattern.permute.xlu0 0
      %1762 = vperm.xlu0 %1761, %v965
      %v1763 = vpop.permute.xlu0 %1762
      %1766 = vset.pattern.permute.xlu0 0
      %1767 = vperm.xlu0 %1766, %v970
      %v1768 = vpop.permute.xlu0 %1767
      %1771 = vset.pattern.permute.xlu0 0
      %1772 = vperm.xlu0 %1771, %v973
      %v1773 = vpop.permute.xlu0 %1772
      %1776 = vset.pattern.permute.xlu0 0
      %1777 = vperm.xlu0 %1776, %v978
      %v1778 = vpop.permute.xlu0 %1777
      %1781 = vset.pattern.permute.xlu0 0
      %1782 = vperm.xlu0 %1781, %v981
      %v1783 = vpop.permute.xlu0 %1782
      %v1785 = vlaneseq
      %v1786 = vshrl.u32 %v1785, 7
      %v1787 = vsub.s32 0, %v1786
      %v1788 = vrot.slane %v1020, %v1787
      %v1789 = vlaneseq
      %v1790 = vshrl.u32 %v1789, 7
      %v1791 = vsub.s32 0, %v1790
      %v1792 = vrot.slane %v1060, %v1791
      %v1793 = vlaneseq
      %v1794 = vshrl.u32 %v1793, 7
      %v1795 = vsub.s32 0, %v1794
      %v1796 = vrot.slane %v1100, %v1795
      %v1797 = vlaneseq
      %v1798 = vshrl.u32 %v1797, 7
      %v1799 = vsub.s32 0, %v1798
      %v1800 = vrot.slane %v1140, %v1799
      %v1801 = vlaneseq
      %v1802 = vshrl.u32 %v1801, 7
      %v1803 = vsub.s32 0, %v1802
      %v1804 = vrot.slane %v1180, %v1803
      %v1805 = vlaneseq
      %v1806 = vshrl.u32 %v1805, 7
      %v1807 = vsub.s32 0, %v1806
      %v1808 = vrot.slane %v1220, %v1807
      %v1809 = vlaneseq
      %v1810 = vshrl.u32 %v1809, 7
      %v1811 = vsub.s32 0, %v1810
      %v1812 = vrot.slane %v1260, %v1811
      %v1813 = vlaneseq
      %v1814 = vshrl.u32 %v1813, 7
      %v1815 = vsub.s32 0, %v1814
      %v1816 = vrot.slane %v1300, %v1815
      %v1817 = vlaneseq
      %v1818 = vshrl.u32 %v1817, 7
      %v1819 = vsub.s32 0, %v1818
      %v1820 = vrot.slane %v1340, %v1819
      %v1821 = vlaneseq
      %v1822 = vshrl.u32 %v1821, 7
      %v1823 = vsub.s32 0, %v1822
      %v1824 = vrot.slane %v1380, %v1823
      %v1825 = vlaneseq
      %v1826 = vshrl.u32 %v1825, 7
      %v1827 = vsub.s32 0, %v1826
      %v1828 = vrot.slane %v1420, %v1827
      %v1829 = vlaneseq
      %v1830 = vshrl.u32 %v1829, 7
      %v1831 = vsub.s32 0, %v1830
      %v1832 = vrot.slane %v1460, %v1831
      %v1833 = vlaneseq
      %v1834 = vshrl.u32 %v1833, 7
      %v1835 = vsub.s32 0, %v1834
      %v1836 = vrot.slane %v1500, %v1835
      %v1837 = vlaneseq
      %v1838 = vshrl.u32 %v1837, 7
      %v1839 = vsub.s32 0, %v1838
      %v1840 = vrot.slane %v1540, %v1839
      %v1841 = vlaneseq
      %v1842 = vshrl.u32 %v1841, 7
      %v1843 = vsub.s32 0, %v1842
      %v1844 = vrot.slane %v1580, %v1843
      %v1845 = vlaneseq
      %v1846 = vshrl.u32 %v1845, 7
      %v1847 = vsub.s32 0, %v1846
      %v1848 = vrot.slane %v1620, %v1847
      %v1849 = vadd.f32 %v1628, %v1788
      %v1850 = vadd.f32 %v1633, %v1788
      %v1851 = vadd.f32 %v1638, %v1792
      %v1852 = vadd.f32 %v1643, %v1792
      %v1853 = vadd.f32 %v1648, %v1796
      %v1854 = vadd.f32 %v1653, %v1796
      %v1855 = vadd.f32 %v1658, %v1800
      %v1856 = vadd.f32 %v1663, %v1800
      %v1857 = vadd.f32 %v1668, %v1804
      %v1858 = vadd.f32 %v1673, %v1804
      %v1859 = vadd.f32 %v1678, %v1808
      %v1860 = vadd.f32 %v1683, %v1808
      %v1861 = vadd.f32 %v1688, %v1812
      %v1862 = vadd.f32 %v1693, %v1812
      %v1863 = vadd.f32 %v1698, %v1816
      %v1864 = vadd.f32 %v1703, %v1816
      %v1865 = vadd.f32 %v1708, %v1820
      %v1866 = vadd.f32 %v1713, %v1820
      %v1867 = vadd.f32 %v1718, %v1824
      %v1868 = vadd.f32 %v1723, %v1824
      %v1869 = vadd.f32 %v1728, %v1828
      %v1870 = vadd.f32 %v1733, %v1828
      %v1871 = vadd.f32 %v1738, %v1832
      %v1872 = vadd.f32 %v1743, %v1832
      %v1873 = vadd.f32 %v1748, %v1836
      %v1874 = vadd.f32 %v1753, %v1836
      %v1875 = vadd.f32 %v1758, %v1840
      %v1876 = vadd.f32 %v1763, %v1840
      %v1877 = vadd.f32 %v1768, %v1844
      %v1878 = vadd.f32 %v1773, %v1844
      %v1879 = vadd.f32 %v1778, %v1848
      %v1880 = vadd.f32 %v1783, %v1848
      %vm1881 = vcmp.ge.f32.partialorder %v1849, 0.0
      %vm1882 = vcmp.ge.f32.partialorder %v1850, 0.0
      %vm1883 = vcmp.ge.f32.partialorder %v1851, 0.0
      %vm1884 = vcmp.ge.f32.partialorder %v1852, 0.0
      %vm1885 = vcmp.ge.f32.partialorder %v1853, 0.0
      %vm1886 = vcmp.ge.f32.partialorder %v1854, 0.0
      %vm1887 = vcmp.ge.f32.partialorder %v1855, 0.0
      %vm1888 = vcmp.ge.f32.partialorder %v1856, 0.0
      %vm1889 = vcmp.ge.f32.partialorder %v1857, 0.0
      %vm1890 = vcmp.ge.f32.partialorder %v1858, 0.0
      %vm1891 = vcmp.ge.f32.partialorder %v1859, 0.0
      %vm1892 = vcmp.ge.f32.partialorder %v1860, 0.0
      %vm1893 = vcmp.ge.f32.partialorder %v1861, 0.0
      %vm1894 = vcmp.ge.f32.partialorder %v1862, 0.0
      %vm1895 = vcmp.ge.f32.partialorder %v1863, 0.0
      %vm1896 = vcmp.ge.f32.partialorder %v1864, 0.0
      %vm1897 = vcmp.ge.f32.partialorder %v1865, 0.0
      %vm1898 = vcmp.ge.f32.partialorder %v1866, 0.0
      %vm1899 = vcmp.ge.f32.partialorder %v1867, 0.0
      %vm1900 = vcmp.ge.f32.partialorder %v1868, 0.0
      %vm1901 = vcmp.ge.f32.partialorder %v1869, 0.0
      %vm1902 = vcmp.ge.f32.partialorder %v1870, 0.0
      %vm1903 = vcmp.ge.f32.partialorder %v1871, 0.0
      %vm1904 = vcmp.ge.f32.partialorder %v1872, 0.0
      %vm1905 = vcmp.ge.f32.partialorder %v1873, 0.0
      %vm1906 = vcmp.ge.f32.partialorder %v1874, 0.0
      %vm1907 = vcmp.ge.f32.partialorder %v1875, 0.0
      %vm1908 = vcmp.ge.f32.partialorder %v1876, 0.0
      %vm1909 = vcmp.ge.f32.partialorder %v1877, 0.0
      %vm1910 = vcmp.ge.f32.partialorder %v1878, 0.0
      %vm1911 = vcmp.ge.f32.partialorder %v1879, 0.0
      %vm1912 = vcmp.ge.f32.partialorder %v1880, 0.0
      %v1913 = vmul.f32 %v1849, 0.2
      %v1914 = vmul.f32 %v1850, 0.2
      %v1915 = vmul.f32 %v1851, 0.2
      %v1916 = vmul.f32 %v1852, 0.2
      %v1917 = vmul.f32 %v1853, 0.2
      %v1918 = vmul.f32 %v1854, 0.2
      %v1919 = vmul.f32 %v1855, 0.2
      %v1920 = vmul.f32 %v1856, 0.2
      %v1921 = vmul.f32 %v1857, 0.2
      %v1922 = vmul.f32 %v1858, 0.2
      %v1923 = vmul.f32 %v1859, 0.2
      %v1924 = vmul.f32 %v1860, 0.2
      %v1925 = vmul.f32 %v1861, 0.2
      %v1926 = vmul.f32 %v1862, 0.2
      %v1927 = vmul.f32 %v1863, 0.2
      %v1928 = vmul.f32 %v1864, 0.2
      %v1929 = vmul.f32 %v1865, 0.2
      %v1930 = vmul.f32 %v1866, 0.2
      %v1931 = vmul.f32 %v1867, 0.2
      %v1932 = vmul.f32 %v1868, 0.2
      %v1933 = vmul.f32 %v1869, 0.2
      %v1934 = vmul.f32 %v1870, 0.2
      %v1935 = vmul.f32 %v1871, 0.2
      %v1936 = vmul.f32 %v1872, 0.2
      %v1937 = vmul.f32 %v1873, 0.2
      %v1938 = vmul.f32 %v1874, 0.2
      %v1939 = vmul.f32 %v1875, 0.2
      %v1940 = vmul.f32 %v1876, 0.2
      %v1941 = vmul.f32 %v1877, 0.2
      %v1942 = vmul.f32 %v1878, 0.2
      %v1943 = vmul.f32 %v1879, 0.2
      %v1944 = vmul.f32 %v1880, 0.2
      %v1945 = vsel %vm1881, %v1849, %v1913
      %v1946 = vsel %vm1882, %v1850, %v1914
      %v1947 = vsel %vm1883, %v1851, %v1915
      %v1948 = vsel %vm1884, %v1852, %v1916
      %v1949 = vsel %vm1885, %v1853, %v1917
      %v1950 = vsel %vm1886, %v1854, %v1918
      %v1951 = vsel %vm1887, %v1855, %v1919
      %v1952 = vsel %vm1888, %v1856, %v1920
      %v1953 = vsel %vm1889, %v1857, %v1921
      %v1954 = vsel %vm1890, %v1858, %v1922
      %v1955 = vsel %vm1891, %v1859, %v1923
      %v1956 = vsel %vm1892, %v1860, %v1924
      %v1957 = vsel %vm1893, %v1861, %v1925
      %v1958 = vsel %vm1894, %v1862, %v1926
      %v1959 = vsel %vm1895, %v1863, %v1927
      %v1960 = vsel %vm1896, %v1864, %v1928
      %v1961 = vsel %vm1897, %v1865, %v1929
      %v1962 = vsel %vm1898, %v1866, %v1930
      %v1963 = vsel %vm1899, %v1867, %v1931
      %v1964 = vsel %vm1900, %v1868, %v1932
      %v1965 = vsel %vm1901, %v1869, %v1933
      %v1966 = vsel %vm1902, %v1870, %v1934
      %v1967 = vsel %vm1903, %v1871, %v1935
      %v1968 = vsel %vm1904, %v1872, %v1936
      %v1969 = vsel %vm1905, %v1873, %v1937
      %v1970 = vsel %vm1906, %v1874, %v1938
      %v1971 = vsel %vm1907, %v1875, %v1939
      %v1972 = vsel %vm1908, %v1876, %v1940
      %v1973 = vsel %vm1909, %v1877, %v1941
      %v1974 = vsel %vm1910, %v1878, %v1942
      %v1975 = vsel %vm1911, %v1879, %v1943
      %v1976 = vsel %vm1912, %v1880, %v1944
      %v1977 = vld [vmem:[%s399] sm:$0xf]
      %v1978 = vld [vmem:[%s399 + $0x4] sm:$0xf]
      %v1979 = vld [vmem:[%s399 + $0x8] sm:$0xf]
      %v1980 = vld [vmem:[%s399 + $0xc] sm:$0xf]
      %v1981 = vld [vmem:[%s399 + $0x10] sm:$0xf]
      %v1982 = vld [vmem:[%s399 + $0x14] sm:$0xf]
      %v1983 = vld [vmem:[%s399 + $0x18] sm:$0xf]
      %v1984 = vld [vmem:[%s399 + $0x1c] sm:$0xf]
      %v1985 = vld [vmem:[%s399 + $0x20] sm:$0xf]
      %v1986 = vld [vmem:[%s399 + $0x24] sm:$0xf]
      %v1987 = vld [vmem:[%s399 + $0x28] sm:$0xf]
      %v1988 = vld [vmem:[%s399 + $0x2c] sm:$0xf]
      %v1989 = vld [vmem:[%s399 + $0x30] sm:$0xf]
      %v1990 = vld [vmem:[%s399 + $0x34] sm:$0xf]
      %v1991 = vld [vmem:[%s399 + $0x38] sm:$0xf]
      %v1992 = vld [vmem:[%s399 + $0x3c] sm:$0xf]
      %v1993 = vld [vmem:[%s399 + $0x40] sm:$0xf]
      %v1994 = vld [vmem:[%s399 + $0x44] sm:$0xf]
      %v1995 = vld [vmem:[%s399 + $0x48] sm:$0xf]
      %v1996 = vld [vmem:[%s399 + $0x4c] sm:$0xf]
      %v1997 = vld [vmem:[%s399 + $0x50] sm:$0xf]
      %v1998 = vld [vmem:[%s399 + $0x54] sm:$0xf]
      %v1999 = vld [vmem:[%s399 + $0x58] sm:$0xf]
      %v2000 = vld [vmem:[%s399 + $0x5c] sm:$0xf]
      %v2001 = vld [vmem:[%s399 + $0x60] sm:$0xf]
      %v2002 = vld [vmem:[%s399 + $0x64] sm:$0xf]
      %v2003 = vld [vmem:[%s399 + $0x68] sm:$0xf]
      %v2004 = vld [vmem:[%s399 + $0x6c] sm:$0xf]
      %v2005 = vld [vmem:[%s399 + $0x70] sm:$0xf]
      %v2006 = vld [vmem:[%s399 + $0x74] sm:$0xf]
      %v2007 = vld [vmem:[%s399 + $0x78] sm:$0xf]
      %v2008 = vld [vmem:[%s399 + $0x7c] sm:$0xf]
      %vm2009 = vcmp.gt.bf16.partialorder %v1977, 0
      %vm2010 = vcmp.gt.bf16.partialorder %v1978, 0
      %vm2011 = vcmp.gt.bf16.partialorder %v1979, 0
      %vm2012 = vcmp.gt.bf16.partialorder %v1980, 0
      %vm2013 = vcmp.gt.bf16.partialorder %v1981, 0
      %vm2014 = vcmp.gt.bf16.partialorder %v1982, 0
      %vm2015 = vcmp.gt.bf16.partialorder %v1983, 0
      %vm2016 = vcmp.gt.bf16.partialorder %v1984, 0
      %vm2017 = vcmp.gt.bf16.partialorder %v1985, 0
      %vm2018 = vcmp.gt.bf16.partialorder %v1986, 0
      %vm2019 = vcmp.gt.bf16.partialorder %v1987, 0
      %vm2020 = vcmp.gt.bf16.partialorder %v1988, 0
      %vm2021 = vcmp.gt.bf16.partialorder %v1989, 0
      %vm2022 = vcmp.gt.bf16.partialorder %v1990, 0
      %vm2023 = vcmp.gt.bf16.partialorder %v1991, 0
      %vm2024 = vcmp.gt.bf16.partialorder %v1992, 0
      %vm2025 = vcmp.gt.bf16.partialorder %v1993, 0
      %vm2026 = vcmp.gt.bf16.partialorder %v1994, 0
      %vm2027 = vcmp.gt.bf16.partialorder %v1995, 0
      %vm2028 = vcmp.gt.bf16.partialorder %v1996, 0
      %vm2029 = vcmp.gt.bf16.partialorder %v1997, 0
      %vm2030 = vcmp.gt.bf16.partialorder %v1998, 0
      %vm2031 = vcmp.gt.bf16.partialorder %v1999, 0
      %vm2032 = vcmp.gt.bf16.partialorder %v2000, 0
      %vm2033 = vcmp.gt.bf16.partialorder %v2001, 0
      %vm2034 = vcmp.gt.bf16.partialorder %v2002, 0
      %vm2035 = vcmp.gt.bf16.partialorder %v2003, 0
      %vm2036 = vcmp.gt.bf16.partialorder %v2004, 0
      %vm2037 = vcmp.gt.bf16.partialorder %v2005, 0
      %vm2038 = vcmp.gt.bf16.partialorder %v2006, 0
      %vm2039 = vcmp.gt.bf16.partialorder %v2007, 0
      %vm2040 = vcmp.gt.bf16.partialorder %v2008, 0
      %v2041 = vsel %vm2009, 65537, 0
      %v2042 = vsel %vm2010, 65537, 0
      %v2043 = vsel %vm2011, 65537, 0
      %v2044 = vsel %vm2012, 65537, 0
      %v2045 = vsel %vm2013, 65537, 0
      %v2046 = vsel %vm2014, 65537, 0
      %v2047 = vsel %vm2015, 65537, 0
      %v2048 = vsel %vm2016, 65537, 0
      %v2049 = vsel %vm2017, 65537, 0
      %v2050 = vsel %vm2018, 65537, 0
      %v2051 = vsel %vm2019, 65537, 0
      %v2052 = vsel %vm2020, 65537, 0
      %v2053 = vsel %vm2021, 65537, 0
      %v2054 = vsel %vm2022, 65537, 0
      %v2055 = vsel %vm2023, 65537, 0
      %v2056 = vsel %vm2024, 65537, 0
      %v2057 = vsel %vm2025, 65537, 0
      %v2058 = vsel %vm2026, 65537, 0
      %v2059 = vsel %vm2027, 65537, 0
      %v2060 = vsel %vm2028, 65537, 0
      %v2061 = vsel %vm2029, 65537, 0
      %v2062 = vsel %vm2030, 65537, 0
      %v2063 = vsel %vm2031, 65537, 0
      %v2064 = vsel %vm2032, 65537, 0
      %v2065 = vsel %vm2033, 65537, 0
      %v2066 = vsel %vm2034, 65537, 0
      %v2067 = vsel %vm2035, 65537, 0
      %v2068 = vsel %vm2036, 65537, 0
      %v2069 = vsel %vm2037, 65537, 0
      %v2070 = vsel %vm2038, 65537, 0
      %v2071 = vsel %vm2039, 65537, 0
      %v2072 = vsel %vm2040, 65537, 0
      %v2073 = vunpack.c.l.b16 %v2041
      %v2074 = vunpack.c.l.b16 %v2042
      %v2075 = vunpack.c.l.b16 %v2043
      %v2076 = vunpack.c.l.b16 %v2044
      %v2077 = vunpack.c.l.b16 %v2045
      %v2078 = vunpack.c.l.b16 %v2046
      %v2079 = vunpack.c.l.b16 %v2047
      %v2080 = vunpack.c.l.b16 %v2048
      %v2081 = vunpack.c.l.b16 %v2049
      %v2082 = vunpack.c.l.b16 %v2050
      %v2083 = vunpack.c.l.b16 %v2051
      %v2084 = vunpack.c.l.b16 %v2052
      %v2085 = vunpack.c.l.b16 %v2053
      %v2086 = vunpack.c.l.b16 %v2054
      %v2087 = vunpack.c.l.b16 %v2055
      %v2088 = vunpack.c.l.b16 %v2056
      %v2089 = vunpack.c.l.b16 %v2057
      %v2090 = vunpack.c.l.b16 %v2058
      %v2091 = vunpack.c.l.b16 %v2059
      %v2092 = vunpack.c.l.b16 %v2060
      %v2093 = vunpack.c.l.b16 %v2061
      %v2094 = vunpack.c.l.b16 %v2062
      %v2095 = vunpack.c.l.b16 %v2063
      %v2096 = vunpack.c.l.b16 %v2064
      %v2097 = vunpack.c.l.b16 %v2065
      %v2098 = vunpack.c.l.b16 %v2066
      %v2099 = vunpack.c.l.b16 %v2067
      %v2100 = vunpack.c.l.b16 %v2068
      %v2101 = vunpack.c.l.b16 %v2069
      %v2102 = vunpack.c.l.b16 %v2070
      %v2103 = vunpack.c.l.b16 %v2071
      %v2104 = vunpack.c.l.b16 %v2072
      %vm2105 = vcmp.ne.s32.totalorder %v2073, 0
      %vm2106 = vcmp.ne.s32.totalorder %v2074, 0
      %vm2107 = vcmp.ne.s32.totalorder %v2075, 0
      %vm2108 = vcmp.ne.s32.totalorder %v2076, 0
      %vm2109 = vcmp.ne.s32.totalorder %v2077, 0
      %vm2110 = vcmp.ne.s32.totalorder %v2078, 0
      %vm2111 = vcmp.ne.s32.totalorder %v2079, 0
      %vm2112 = vcmp.ne.s32.totalorder %v2080, 0
      %vm2113 = vcmp.ne.s32.totalorder %v2081, 0
      %vm2114 = vcmp.ne.s32.totalorder %v2082, 0
      %vm2115 = vcmp.ne.s32.totalorder %v2083, 0
      %vm2116 = vcmp.ne.s32.totalorder %v2084, 0
      %vm2117 = vcmp.ne.s32.totalorder %v2085, 0
      %vm2118 = vcmp.ne.s32.totalorder %v2086, 0
      %vm2119 = vcmp.ne.s32.totalorder %v2087, 0
      %vm2120 = vcmp.ne.s32.totalorder %v2088, 0
      %vm2121 = vcmp.ne.s32.totalorder %v2089, 0
      %vm2122 = vcmp.ne.s32.totalorder %v2090, 0
      %vm2123 = vcmp.ne.s32.totalorder %v2091, 0
      %vm2124 = vcmp.ne.s32.totalorder %v2092, 0
      %vm2125 = vcmp.ne.s32.totalorder %v2093, 0
      %vm2126 = vcmp.ne.s32.totalorder %v2094, 0
      %vm2127 = vcmp.ne.s32.totalorder %v2095, 0
      %vm2128 = vcmp.ne.s32.totalorder %v2096, 0
      %vm2129 = vcmp.ne.s32.totalorder %v2097, 0
      %vm2130 = vcmp.ne.s32.totalorder %v2098, 0
      %vm2131 = vcmp.ne.s32.totalorder %v2099, 0
      %vm2132 = vcmp.ne.s32.totalorder %v2100, 0
      %vm2133 = vcmp.ne.s32.totalorder %v2101, 0
      %vm2134 = vcmp.ne.s32.totalorder %v2102, 0
      %vm2135 = vcmp.ne.s32.totalorder %v2103, 0
      %vm2136 = vcmp.ne.s32.totalorder %v2104, 0
      %v2137 = vsel %vm2105, %v1945, -1e+30
      %v2138 = vsel %vm2106, %v1946, -1e+30
      %v2139 = vsel %vm2107, %v1947, -1e+30
      %v2140 = vsel %vm2108, %v1948, -1e+30
      %v2141 = vsel %vm2109, %v1949, -1e+30
      %v2142 = vsel %vm2110, %v1950, -1e+30
      %v2143 = vsel %vm2111, %v1951, -1e+30
      %v2144 = vsel %vm2112, %v1952, -1e+30
      %v2145 = vsel %vm2113, %v1953, -1e+30
      %v2146 = vsel %vm2114, %v1954, -1e+30
      %v2147 = vsel %vm2115, %v1955, -1e+30
      %v2148 = vsel %vm2116, %v1956, -1e+30
      %v2149 = vsel %vm2117, %v1957, -1e+30
      %v2150 = vsel %vm2118, %v1958, -1e+30
      %v2151 = vsel %vm2119, %v1959, -1e+30
      %v2152 = vsel %vm2120, %v1960, -1e+30
      %v2153 = vsel %vm2121, %v1961, -1e+30
      %v2154 = vsel %vm2122, %v1962, -1e+30
      %v2155 = vsel %vm2123, %v1963, -1e+30
      %v2156 = vsel %vm2124, %v1964, -1e+30
      %v2157 = vsel %vm2125, %v1965, -1e+30
      %v2158 = vsel %vm2126, %v1966, -1e+30
      %v2159 = vsel %vm2127, %v1967, -1e+30
      %v2160 = vsel %vm2128, %v1968, -1e+30
      %v2161 = vsel %vm2129, %v1969, -1e+30
      %v2162 = vsel %vm2130, %v1970, -1e+30
      %v2163 = vsel %vm2131, %v1971, -1e+30
      %v2164 = vsel %vm2132, %v1972, -1e+30
      %v2165 = vsel %vm2133, %v1973, -1e+30
      %v2166 = vsel %vm2134, %v1974, -1e+30
      %v2167 = vsel %vm2135, %v1975, -1e+30
      %v2168 = vsel %vm2136, %v1976, -1e+30
      %vm2169 = vcmask 130048
      %v2170 = vsel %vm2169, %v2137, -inf
      %2171 = vmax.xlane.f32.xlu0 %v2170
      %v2172 = vpop.xlane.xlu0 %2171
      %v2173 = vsel %vm2169, %v2138, -inf
      %2174 = vmax.xlane.f32.xlu0 %v2173
      %v2175 = vpop.xlane.xlu0 %2174
      %v2176 = vsel %vm2169, %v2139, -inf
      %2177 = vmax.xlane.f32.xlu0 %v2176
      %v2178 = vpop.xlane.xlu0 %2177
      %v2179 = vsel %vm2169, %v2140, -inf
      %2180 = vmax.xlane.f32.xlu0 %v2179
      %v2181 = vpop.xlane.xlu0 %2180
      %v2182 = vsel %vm2169, %v2141, -inf
      %2183 = vmax.xlane.f32.xlu0 %v2182
      %v2184 = vpop.xlane.xlu0 %2183
      %v2185 = vsel %vm2169, %v2142, -inf
      %2186 = vmax.xlane.f32.xlu0 %v2185
      %v2187 = vpop.xlane.xlu0 %2186
      %v2188 = vsel %vm2169, %v2143, -inf
      %2189 = vmax.xlane.f32.xlu0 %v2188
      %v2190 = vpop.xlane.xlu0 %2189
      %v2191 = vsel %vm2169, %v2144, -inf
      %2192 = vmax.xlane.f32.xlu0 %v2191
      %v2193 = vpop.xlane.xlu0 %2192
      %v2194 = vsel %vm2169, %v2145, -inf
      %2195 = vmax.xlane.f32.xlu0 %v2194
      %v2196 = vpop.xlane.xlu0 %2195
      %v2197 = vsel %vm2169, %v2146, -inf
      %2198 = vmax.xlane.f32.xlu0 %v2197
      %v2199 = vpop.xlane.xlu0 %2198
      %v2200 = vsel %vm2169, %v2147, -inf
      %2201 = vmax.xlane.f32.xlu0 %v2200
      %v2202 = vpop.xlane.xlu0 %2201
      %v2203 = vsel %vm2169, %v2148, -inf
      %2204 = vmax.xlane.f32.xlu0 %v2203
      %v2205 = vpop.xlane.xlu0 %2204
      %v2206 = vsel %vm2169, %v2149, -inf
      %2207 = vmax.xlane.f32.xlu0 %v2206
      %v2208 = vpop.xlane.xlu0 %2207
      %v2209 = vsel %vm2169, %v2150, -inf
      %2210 = vmax.xlane.f32.xlu0 %v2209
      %v2211 = vpop.xlane.xlu0 %2210
      %v2212 = vsel %vm2169, %v2151, -inf
      %2213 = vmax.xlane.f32.xlu0 %v2212
      %v2214 = vpop.xlane.xlu0 %2213
      %v2215 = vsel %vm2169, %v2152, -inf
      %2216 = vmax.xlane.f32.xlu0 %v2215
      %v2217 = vpop.xlane.xlu0 %2216
      %v2218 = vsel %vm2169, %v2153, -inf
      %2219 = vmax.xlane.f32.xlu0 %v2218
      %v2220 = vpop.xlane.xlu0 %2219
      %v2221 = vsel %vm2169, %v2154, -inf
      %2222 = vmax.xlane.f32.xlu0 %v2221
      %v2223 = vpop.xlane.xlu0 %2222
      %v2224 = vsel %vm2169, %v2155, -inf
      %2225 = vmax.xlane.f32.xlu0 %v2224
      %v2226 = vpop.xlane.xlu0 %2225
      %v2227 = vsel %vm2169, %v2156, -inf
      %2228 = vmax.xlane.f32.xlu0 %v2227
      %v2229 = vpop.xlane.xlu0 %2228
      %v2230 = vsel %vm2169, %v2157, -inf
      %2231 = vmax.xlane.f32.xlu0 %v2230
      %v2232 = vpop.xlane.xlu0 %2231
      %v2233 = vsel %vm2169, %v2158, -inf
      %2234 = vmax.xlane.f32.xlu0 %v2233
      %v2235 = vpop.xlane.xlu0 %2234
      %v2236 = vsel %vm2169, %v2159, -inf
      %2237 = vmax.xlane.f32.xlu0 %v2236
      %v2238 = vpop.xlane.xlu0 %2237
      %v2239 = vsel %vm2169, %v2160, -inf
      %2240 = vmax.xlane.f32.xlu0 %v2239
      %v2241 = vpop.xlane.xlu0 %2240
      %v2242 = vsel %vm2169, %v2161, -inf
      %2243 = vmax.xlane.f32.xlu0 %v2242
      %v2244 = vpop.xlane.xlu0 %2243
      %v2245 = vsel %vm2169, %v2162, -inf
      %2246 = vmax.xlane.f32.xlu0 %v2245
      %v2247 = vpop.xlane.xlu0 %2246
      %v2248 = vsel %vm2169, %v2163, -inf
      %2249 = vmax.xlane.f32.xlu0 %v2248
      %v2250 = vpop.xlane.xlu0 %2249
      %v2251 = vsel %vm2169, %v2164, -inf
      %2252 = vmax.xlane.f32.xlu0 %v2251
      %v2253 = vpop.xlane.xlu0 %2252
      %v2254 = vsel %vm2169, %v2165, -inf
      %2255 = vmax.xlane.f32.xlu0 %v2254
      %v2256 = vpop.xlane.xlu0 %2255
      %v2257 = vsel %vm2169, %v2166, -inf
      %2258 = vmax.xlane.f32.xlu0 %v2257
      %v2259 = vpop.xlane.xlu0 %2258
      %v2260 = vsel %vm2169, %v2167, -inf
      %2261 = vmax.xlane.f32.xlu0 %v2260
      %v2262 = vpop.xlane.xlu0 %2261
      %v2263 = vsel %vm2169, %v2168, -inf
      %2264 = vmax.xlane.f32.xlu0 %v2263
      %v2265 = vpop.xlane.xlu0 %2264
      %v2266 = vsub.f32 %v2137, %v2172
      %v2267 = vsub.f32 %v2138, %v2175
      %v2268 = vsub.f32 %v2139, %v2178
      %v2269 = vsub.f32 %v2140, %v2181
      %v2270 = vsub.f32 %v2141, %v2184
      %v2271 = vsub.f32 %v2142, %v2187
      %v2272 = vsub.f32 %v2143, %v2190
      %v2273 = vsub.f32 %v2144, %v2193
      %v2274 = vsub.f32 %v2145, %v2196
      %v2275 = vsub.f32 %v2146, %v2199
      %v2276 = vsub.f32 %v2147, %v2202
      %v2277 = vsub.f32 %v2148, %v2205
      %v2278 = vsub.f32 %v2149, %v2208
      %v2279 = vsub.f32 %v2150, %v2211
      %v2280 = vsub.f32 %v2151, %v2214
      %v2281 = vsub.f32 %v2152, %v2217
      %v2282 = vsub.f32 %v2153, %v2220
      %v2283 = vsub.f32 %v2154, %v2223
      %v2284 = vsub.f32 %v2155, %v2226
      %v2285 = vsub.f32 %v2156, %v2229
      %v2286 = vsub.f32 %v2157, %v2232
      %v2287 = vsub.f32 %v2158, %v2235
      %v2288 = vsub.f32 %v2159, %v2238
      %v2289 = vsub.f32 %v2160, %v2241
      %v2290 = vsub.f32 %v2161, %v2244
      %v2291 = vsub.f32 %v2162, %v2247
      %v2292 = vsub.f32 %v2163, %v2250
      %v2293 = vsub.f32 %v2164, %v2253
      %v2294 = vsub.f32 %v2165, %v2256
      %v2295 = vsub.f32 %v2166, %v2259
      %v2296 = vsub.f32 %v2167, %v2262
      %v2297 = vsub.f32 %v2168, %v2265
      %v2298 = vmul.f32 %v2266, 1.442695
      %v2299 = vpow.pop %v2298
      %v2300 = vmul.f32 %v2267, 1.442695
      %v2301 = vpow.pop %v2300
      %v2302 = vmul.f32 %v2268, 1.442695
      %v2303 = vpow.pop %v2302
      %v2304 = vmul.f32 %v2269, 1.442695
      %v2305 = vpow.pop %v2304
      %v2306 = vmul.f32 %v2270, 1.442695
      %v2307 = vpow.pop %v2306
      %v2308 = vmul.f32 %v2271, 1.442695
      %v2309 = vpow.pop %v2308
      %v2310 = vmul.f32 %v2272, 1.442695
      %v2311 = vpow.pop %v2310
      %v2312 = vmul.f32 %v2273, 1.442695
      %v2313 = vpow.pop %v2312
      %v2314 = vmul.f32 %v2274, 1.442695
      %v2315 = vpow.pop %v2314
      %v2316 = vmul.f32 %v2275, 1.442695
      %v2317 = vpow.pop %v2316
      %v2318 = vmul.f32 %v2276, 1.442695
      %v2319 = vpow.pop %v2318
      %v2320 = vmul.f32 %v2277, 1.442695
      %v2321 = vpow.pop %v2320
      %v2322 = vmul.f32 %v2278, 1.442695
      %v2323 = vpow.pop %v2322
      %v2324 = vmul.f32 %v2279, 1.442695
      %v2325 = vpow.pop %v2324
      %v2326 = vmul.f32 %v2280, 1.442695
      %v2327 = vpow.pop %v2326
      %v2328 = vmul.f32 %v2281, 1.442695
      %v2329 = vpow.pop %v2328
      %v2330 = vmul.f32 %v2282, 1.442695
      %v2331 = vpow.pop %v2330
      %v2332 = vmul.f32 %v2283, 1.442695
      %v2333 = vpow.pop %v2332
      %v2334 = vmul.f32 %v2284, 1.442695
      %v2335 = vpow.pop %v2334
      %v2336 = vmul.f32 %v2285, 1.442695
      %v2337 = vpow.pop %v2336
      %v2338 = vmul.f32 %v2286, 1.442695
      %v2339 = vpow.pop %v2338
      %v2340 = vmul.f32 %v2287, 1.442695
      %v2341 = vpow.pop %v2340
      %v2342 = vmul.f32 %v2288, 1.442695
      %v2343 = vpow.pop %v2342
      %v2344 = vmul.f32 %v2289, 1.442695
      %v2345 = vpow.pop %v2344
      %v2346 = vmul.f32 %v2290, 1.442695
      %v2347 = vpow.pop %v2346
      %v2348 = vmul.f32 %v2291, 1.442695
      %v2349 = vpow.pop %v2348
      %v2350 = vmul.f32 %v2292, 1.442695
      %v2351 = vpow.pop %v2350
      %v2352 = vmul.f32 %v2293, 1.442695
      %v2353 = vpow.pop %v2352
      %v2354 = vmul.f32 %v2294, 1.442695
      %v2355 = vpow.pop %v2354
      %v2356 = vmul.f32 %v2295, 1.442695
      %v2357 = vpow.pop %v2356
      %v2358 = vmul.f32 %v2296, 1.442695
      %v2359 = vpow.pop %v2358
      %v2360 = vmul.f32 %v2297, 1.442695
      %v2361 = vpow.pop %v2360
      %v2362 = vsel %vm2169, %v2299, 0.0
      %2363 = vadd.xlane.f32.xlu0 %v2362
      %v2364 = vpop.xlane.xlu0 %2363
      %v2365 = vsel %vm2169, %v2301, 0.0
      %2366 = vadd.xlane.f32.xlu0 %v2365
      %v2367 = vpop.xlane.xlu0 %2366
      %v2368 = vsel %vm2169, %v2303, 0.0
      %2369 = vadd.xlane.f32.xlu0 %v2368
      %v2370 = vpop.xlane.xlu0 %2369
      %v2371 = vsel %vm2169, %v2305, 0.0
      %2372 = vadd.xlane.f32.xlu0 %v2371
      %v2373 = vpop.xlane.xlu0 %2372
      %v2374 = vsel %vm2169, %v2307, 0.0
      %2375 = vadd.xlane.f32.xlu0 %v2374
      %v2376 = vpop.xlane.xlu0 %2375
      %v2377 = vsel %vm2169, %v2309, 0.0
      %2378 = vadd.xlane.f32.xlu0 %v2377
      %v2379 = vpop.xlane.xlu0 %2378
      %v2380 = vsel %vm2169, %v2311, 0.0
      %2381 = vadd.xlane.f32.xlu0 %v2380
      %v2382 = vpop.xlane.xlu0 %2381
      %v2383 = vsel %vm2169, %v2313, 0.0
      %2384 = vadd.xlane.f32.xlu0 %v2383
      %v2385 = vpop.xlane.xlu0 %2384
      %v2386 = vsel %vm2169, %v2315, 0.0
      %2387 = vadd.xlane.f32.xlu0 %v2386
      %v2388 = vpop.xlane.xlu0 %2387
      %v2389 = vsel %vm2169, %v2317, 0.0
      %2390 = vadd.xlane.f32.xlu0 %v2389
      %v2391 = vpop.xlane.xlu0 %2390
      %v2392 = vsel %vm2169, %v2319, 0.0
      %2393 = vadd.xlane.f32.xlu0 %v2392
      %v2394 = vpop.xlane.xlu0 %2393
      %v2395 = vsel %vm2169, %v2321, 0.0
      %2396 = vadd.xlane.f32.xlu0 %v2395
      %v2397 = vpop.xlane.xlu0 %2396
      %v2398 = vsel %vm2169, %v2323, 0.0
      %2399 = vadd.xlane.f32.xlu0 %v2398
      %v2400 = vpop.xlane.xlu0 %2399
      %v2401 = vsel %vm2169, %v2325, 0.0
      %2402 = vadd.xlane.f32.xlu0 %v2401
      %v2403 = vpop.xlane.xlu0 %2402
      %v2404 = vsel %vm2169, %v2327, 0.0
      %2405 = vadd.xlane.f32.xlu0 %v2404
      %v2406 = vpop.xlane.xlu0 %2405
      %v2407 = vsel %vm2169, %v2329, 0.0
      %2408 = vadd.xlane.f32.xlu0 %v2407
      %v2409 = vpop.xlane.xlu0 %2408
      %v2410 = vsel %vm2169, %v2331, 0.0
      %2411 = vadd.xlane.f32.xlu0 %v2410
      %v2412 = vpop.xlane.xlu0 %2411
      %v2413 = vsel %vm2169, %v2333, 0.0
      %2414 = vadd.xlane.f32.xlu0 %v2413
      %v2415 = vpop.xlane.xlu0 %2414
      %v2416 = vsel %vm2169, %v2335, 0.0
      %2417 = vadd.xlane.f32.xlu0 %v2416
      %v2418 = vpop.xlane.xlu0 %2417
      %v2419 = vsel %vm2169, %v2337, 0.0
      %2420 = vadd.xlane.f32.xlu0 %v2419
      %v2421 = vpop.xlane.xlu0 %2420
      %v2422 = vsel %vm2169, %v2339, 0.0
      %2423 = vadd.xlane.f32.xlu0 %v2422
      %v2424 = vpop.xlane.xlu0 %2423
      %v2425 = vsel %vm2169, %v2341, 0.0
      %2426 = vadd.xlane.f32.xlu0 %v2425
      %v2427 = vpop.xlane.xlu0 %2426
      %v2428 = vsel %vm2169, %v2343, 0.0
      %2429 = vadd.xlane.f32.xlu0 %v2428
      %v2430 = vpop.xlane.xlu0 %2429
      %v2431 = vsel %vm2169, %v2345, 0.0
      %2432 = vadd.xlane.f32.xlu0 %v2431
      %v2433 = vpop.xlane.xlu0 %2432
      %v2434 = vsel %vm2169, %v2347, 0.0
      %2435 = vadd.xlane.f32.xlu0 %v2434
      %v2436 = vpop.xlane.xlu0 %2435
      %v2437 = vsel %vm2169, %v2349, 0.0
      %2438 = vadd.xlane.f32.xlu0 %v2437
      %v2439 = vpop.xlane.xlu0 %2438
      %v2440 = vsel %vm2169, %v2351, 0.0
      %2441 = vadd.xlane.f32.xlu0 %v2440
      %v2442 = vpop.xlane.xlu0 %2441
      %v2443 = vsel %vm2169, %v2353, 0.0
      %2444 = vadd.xlane.f32.xlu0 %v2443
      %v2445 = vpop.xlane.xlu0 %2444
      %v2446 = vsel %vm2169, %v2355, 0.0
      %2447 = vadd.xlane.f32.xlu0 %v2446
      %v2448 = vpop.xlane.xlu0 %2447
      %v2449 = vsel %vm2169, %v2357, 0.0
      %2450 = vadd.xlane.f32.xlu0 %v2449
      %v2451 = vpop.xlane.xlu0 %2450
      %v2452 = vsel %vm2169, %v2359, 0.0
      %2453 = vadd.xlane.f32.xlu0 %v2452
      %v2454 = vpop.xlane.xlu0 %2453
      %v2455 = vsel %vm2169, %v2361, 0.0
      %2456 = vadd.xlane.f32.xlu0 %v2455
      %v2457 = vpop.xlane.xlu0 %2456
      %v2458 = vpack.c.bf16 %v2301, %v2299
      %v2459 = vpack.c.bf16 %v2305, %v2303
      %v2460 = vpack.c.bf16 %v2309, %v2307
      %v2461 = vpack.c.bf16 %v2313, %v2311
      %v2462 = vpack.c.bf16 %v2317, %v2315
      %v2463 = vpack.c.bf16 %v2321, %v2319
      %v2464 = vpack.c.bf16 %v2325, %v2323
      %v2465 = vpack.c.bf16 %v2329, %v2327
      %v2466 = vpack.c.bf16 %v2333, %v2331
      %v2467 = vpack.c.bf16 %v2337, %v2335
      %v2468 = vpack.c.bf16 %v2341, %v2339
      %v2469 = vpack.c.bf16 %v2345, %v2343
      %v2470 = vpack.c.bf16 %v2349, %v2347
      %v2471 = vpack.c.bf16 %v2353, %v2351
      %v2472 = vpack.c.bf16 %v2357, %v2355
      %v2473 = vpack.c.bf16 %v2361, %v2359
      %v2475 = vsel %vm2169, %v2458, 0
      %2477 = vmatprep.subr.bf16.mxu0 0
      %2478 = vmatpush1.bf16.msra.mxu0 %v743
      %2479 = vmatprep.subr.bf16.mxu0 0
      %2480 = vmatpush1.bf16.msra.mxu0 0
      %2481 = vmatprep.subr.bf16.mxu0 0
      %2482 = vmatpush1.bf16.msra.mxu0 0
      %2483 = vmatprep.subr.bf16.mxu0 0
      %2484 = vmatpush1.bf16.msra.mxu0 0
      %2485 = vmatprep.subr.bf16.mxu0 0
      %2486 = vmatpush1.bf16.msra.mxu0 0
      %2487 = vmatprep.subr.bf16.mxu0 0
      %2488 = vmatpush1.bf16.msra.mxu0 0
      %2489 = vmatprep.subr.bf16.mxu0 0
      %2490 = vmatpush1.bf16.msra.mxu0 0
      %2491 = vmatprep.subr.bf16.mxu0 0
      %2492 = vmatpush1.bf16.msra.mxu0 0
      %2493 = vmatprep.subr.bf16.mxu0 0
      %2494 = vmatpush1.bf16.msra.mxu0 0
      %2495 = vmatprep.subr.bf16.mxu0 0
      %2496 = vmatpush1.bf16.msra.mxu0 0
      %2497 = vmatprep.subr.bf16.mxu0 0
      %2498 = vmatpush1.bf16.msra.mxu0 0
      %2499 = vmatprep.subr.bf16.mxu0 0
      %2500 = vmatpush1.bf16.msra.mxu0 0
      %2501 = vmatprep.subr.bf16.mxu0 0
      %2502 = vmatpush1.bf16.msra.mxu0 0
      %2503 = vmatprep.subr.bf16.mxu0 0
      %2504 = vmatpush1.bf16.msra.mxu0 0
      %2505 = vmatprep.subr.bf16.mxu0 0
      %2506 = vmatpush1.bf16.msra.mxu0 0
      %2507 = vmatprep.subr.bf16.mxu0 0
      %2508 = vmatpush1.bf16.msra.mxu0 0
      %2509 = vmatprep.mubr.bf16.mxu0 0
      %2510 = vmatmul.mubr.bf16.gmra.mrb[0].mxu0 %v2475
      %v2511 = vpop.f32.mrb[0].mxu0
      %v2512 = vadd.f32 0.0, %v2511
      %v2513 = vpop.f32.mrb[0].mxu0
      %v2514 = vpop.f32.mrb[0].mxu0
      %v2515 = vadd.f32 0.0, %v2514
      %v2516 = vpop.f32.mrb[0].mxu0
      %2517 = vdwg.mxu0
      %v2519 = vsel %vm2169, %v2459, 0
      %2521 = vmatprep.subr.bf16.mxu0 0
      %2522 = vmatpush1.bf16.msra.mxu0 %v744
      %2523 = vmatprep.subr.bf16.mxu0 0
      %2524 = vmatpush1.bf16.msra.mxu0 0
      %2525 = vmatprep.subr.bf16.mxu0 0
      %2526 = vmatpush1.bf16.msra.mxu0 0
      %2527 = vmatprep.subr.bf16.mxu0 0
      %2528 = vmatpush1.bf16.msra.mxu0 0
      %2529 = vmatprep.subr.bf16.mxu0 0
      %2530 = vmatpush1.bf16.msra.mxu0 0
      %2531 = vmatprep.subr.bf16.mxu0 0
      %2532 = vmatpush1.bf16.msra.mxu0 0
      %2533 = vmatprep.subr.bf16.mxu0 0
      %2534 = vmatpush1.bf16.msra.mxu0 0
      %2535 = vmatprep.subr.bf16.mxu0 0
      %2536 = vmatpush1.bf16.msra.mxu0 0
      %2537 = vmatprep.subr.bf16.mxu0 0
      %2538 = vmatpush1.bf16.msra.mxu0 0
      %2539 = vmatprep.subr.bf16.mxu0 0
      %2540 = vmatpush1.bf16.msra.mxu0 0
      %2541 = vmatprep.subr.bf16.mxu0 0
      %2542 = vmatpush1.bf16.msra.mxu0 0
      %2543 = vmatprep.subr.bf16.mxu0 0
      %2544 = vmatpush1.bf16.msra.mxu0 0
      %2545 = vmatprep.subr.bf16.mxu0 0
      %2546 = vmatpush1.bf16.msra.mxu0 0
      %2547 = vmatprep.subr.bf16.mxu0 0
      %2548 = vmatpush1.bf16.msra.mxu0 0
      %2549 = vmatprep.subr.bf16.mxu0 0
      %2550 = vmatpush1.bf16.msra.mxu0 0
      %2551 = vmatprep.subr.bf16.mxu0 0
      %2552 = vmatpush1.bf16.msra.mxu0 0
      %2553 = vmatprep.mubr.bf16.mxu0 0
      %2554 = vmatmul.mubr.bf16.gmra.mrb[0].mxu0 %v2519
      %v2555 = vpop.f32.mrb[0].mxu0
      %v2556 = vadd.f32 0.0, %v2555
      %v2557 = vpop.f32.mrb[0].mxu0
      %v2558 = vpop.f32.mrb[0].mxu0
      %v2559 = vadd.f32 0.0, %v2558
      %v2560 = vpop.f32.mrb[0].mxu0
      %2561 = vdwg.mxu0
      %v2563 = vsel %vm2169, %v2460, 0
      %2565 = vmatprep.subr.bf16.mxu0 0
      %2566 = vmatpush1.bf16.msra.mxu0 %v745
      %2567 = vmatprep.subr.bf16.mxu0 0
      %2568 = vmatpush1.bf16.msra.mxu0 0
      %2569 = vmatprep.subr.bf16.mxu0 0
      %2570 = vmatpush1.bf16.msra.mxu0 0
      %2571 = vmatprep.subr.bf16.mxu0 0
      %2572 = vmatpush1.bf16.msra.mxu0 0
      %2573 = vmatprep.subr.bf16.mxu0 0
      %2574 = vmatpush1.bf16.msra.mxu0 0
      %2575 = vmatprep.subr.bf16.mxu0 0
      %2576 = vmatpush1.bf16.msra.mxu0 0
      %2577 = vmatprep.subr.bf16.mxu0 0
      %2578 = vmatpush1.bf16.msra.mxu0 0
      %2579 = vmatprep.subr.bf16.mxu0 0
      %2580 = vmatpush1.bf16.msra.mxu0 0
      %2581 = vmatprep.subr.bf16.mxu0 0
      %2582 = vmatpush1.bf16.msra.mxu0 0
      %2583 = vmatprep.subr.bf16.mxu0 0
      %2584 = vmatpush1.bf16.msra.mxu0 0
      %2585 = vmatprep.subr.bf16.mxu0 0
      %2586 = vmatpush1.bf16.msra.mxu0 0
      %2587 = vmatprep.subr.bf16.mxu0 0
      %2588 = vmatpush1.bf16.msra.mxu0 0
      %2589 = vmatprep.subr.bf16.mxu0 0
      %2590 = vmatpush1.bf16.msra.mxu0 0
      %2591 = vmatprep.subr.bf16.mxu0 0
      %2592 = vmatpush1.bf16.msra.mxu0 0
      %2593 = vmatprep.subr.bf16.mxu0 0
      %2594 = vmatpush1.bf16.msra.mxu0 0
      %2595 = vmatprep.subr.bf16.mxu0 0
      %2596 = vmatpush1.bf16.msra.mxu0 0
      %2597 = vmatprep.mubr.bf16.mxu0 0
      %2598 = vmatmul.mubr.bf16.gmra.mrb[0].mxu0 %v2563
      %v2599 = vpop.f32.mrb[0].mxu0
      %v2600 = vadd.f32 0.0, %v2599
      %v2601 = vpop.f32.mrb[0].mxu0
      %v2602 = vpop.f32.mrb[0].mxu0
      %v2603 = vadd.f32 0.0, %v2602
      %v2604 = vpop.f32.mrb[0].mxu0
      %2605 = vdwg.mxu0
      %v2607 = vsel %vm2169, %v2461, 0
      %2609 = vmatprep.subr.bf16.mxu0 0
      %2610 = vmatpush1.bf16.msra.mxu0 %v746
      %2611 = vmatprep.subr.bf16.mxu0 0
      %2612 = vmatpush1.bf16.msra.mxu0 0
      %2613 = vmatprep.subr.bf16.mxu0 0
      %2614 = vmatpush1.bf16.msra.mxu0 0
      %2615 = vmatprep.subr.bf16.mxu0 0
      %2616 = vmatpush1.bf16.msra.mxu0 0
      %2617 = vmatprep.subr.bf16.mxu0 0
      %2618 = vmatpush1.bf16.msra.mxu0 0
      %2619 = vmatprep.subr.bf16.mxu0 0
      %2620 = vmatpush1.bf16.msra.mxu0 0
      %2621 = vmatprep.subr.bf16.mxu0 0
      %2622 = vmatpush1.bf16.msra.mxu0 0
      %2623 = vmatprep.subr.bf16.mxu0 0
      %2624 = vmatpush1.bf16.msra.mxu0 0
      %2625 = vmatprep.subr.bf16.mxu0 0
      %2626 = vmatpush1.bf16.msra.mxu0 0
      %2627 = vmatprep.subr.bf16.mxu0 0
      %2628 = vmatpush1.bf16.msra.mxu0 0
      %2629 = vmatprep.subr.bf16.mxu0 0
      %2630 = vmatpush1.bf16.msra.mxu0 0
      %2631 = vmatprep.subr.bf16.mxu0 0
      %2632 = vmatpush1.bf16.msra.mxu0 0
      %2633 = vmatprep.subr.bf16.mxu0 0
      %2634 = vmatpush1.bf16.msra.mxu0 0
      %2635 = vmatprep.subr.bf16.mxu0 0
      %2636 = vmatpush1.bf16.msra.mxu0 0
      %2637 = vmatprep.subr.bf16.mxu0 0
      %2638 = vmatpush1.bf16.msra.mxu0 0
      %2639 = vmatprep.subr.bf16.mxu0 0
      %2640 = vmatpush1.bf16.msra.mxu0 0
      %2641 = vmatprep.mubr.bf16.mxu0 0
      %2642 = vmatmul.mubr.bf16.gmra.mrb[0].mxu0 %v2607
      %v2643 = vpop.f32.mrb[0].mxu0
      %v2644 = vadd.f32 0.0, %v2643
      %v2645 = vpop.f32.mrb[0].mxu0
      %v2646 = vpop.f32.mrb[0].mxu0
      %v2647 = vadd.f32 0.0, %v2646
      %v2648 = vpop.f32.mrb[0].mxu0
      %2649 = vdwg.mxu0
      %v2651 = vsel %vm2169, %v2462, 0
      %2653 = vmatprep.subr.bf16.mxu0 0
      %2654 = vmatpush1.bf16.msra.mxu0 %v747
      %2655 = vmatprep.subr.bf16.mxu0 0
      %2656 = vmatpush1.bf16.msra.mxu0 0
      %2657 = vmatprep.subr.bf16.mxu0 0
      %2658 = vmatpush1.bf16.msra.mxu0 0
      %2659 = vmatprep.subr.bf16.mxu0 0
      %2660 = vmatpush1.bf16.msra.mxu0 0
      %2661 = vmatprep.subr.bf16.mxu0 0
      %2662 = vmatpush1.bf16.msra.mxu0 0
      %2663 = vmatprep.subr.bf16.mxu0 0
      %2664 = vmatpush1.bf16.msra.mxu0 0
      %2665 = vmatprep.subr.bf16.mxu0 0
      %2666 = vmatpush1.bf16.msra.mxu0 0
      %2667 = vmatprep.subr.bf16.mxu0 0
      %2668 = vmatpush1.bf16.msra.mxu0 0
      %2669 = vmatprep.subr.bf16.mxu0 0
      %2670 = vmatpush1.bf16.msra.mxu0 0
      %2671 = vmatprep.subr.bf16.mxu0 0
      %2672 = vmatpush1.bf16.msra.mxu0 0
      %2673 = vmatprep.subr.bf16.mxu0 0
      %2674 = vmatpush1.bf16.msra.mxu0 0
      %2675 = vmatprep.subr.bf16.mxu0 0
      %2676 = vmatpush1.bf16.msra.mxu0 0
      %2677 = vmatprep.subr.bf16.mxu0 0
      %2678 = vmatpush1.bf16.msra.mxu0 0
      %2679 = vmatprep.subr.bf16.mxu0 0
      %2680 = vmatpush1.bf16.msra.mxu0 0
      %2681 = vmatprep.subr.bf16.mxu0 0
      %2682 = vmatpush1.bf16.msra.mxu0 0
      %2683 = vmatprep.subr.bf16.mxu0 0
      %2684 = vmatpush1.bf16.msra.mxu0 0
      %2685 = vmatprep.mubr.bf16.mxu0 0
      %2686 = vmatmul.mubr.bf16.gmra.mrb[0].mxu0 %v2651
      %v2687 = vpop.f32.mrb[0].mxu0
      %v2688 = vadd.f32 0.0, %v2687
      %v2689 = vpop.f32.mrb[0].mxu0
      %v2690 = vpop.f32.mrb[0].mxu0
      %v2691 = vadd.f32 0.0, %v2690
      %v2692 = vpop.f32.mrb[0].mxu0
      %2693 = vdwg.mxu0
      %v2695 = vsel %vm2169, %v2463, 0
      %2697 = vmatprep.subr.bf16.mxu0 0
      %2698 = vmatpush1.bf16.msra.mxu0 %v748
      %2699 = vmatprep.subr.bf16.mxu0 0
      %2700 = vmatpush1.bf16.msra.mxu0 0
      %2701 = vmatprep.subr.bf16.mxu0 0
      %2702 = vmatpush1.bf16.msra.mxu0 0
      %2703 = vmatprep.subr.bf16.mxu0 0
      %2704 = vmatpush1.bf16.msra.mxu0 0
      %2705 = vmatprep.subr.bf16.mxu0 0
      %2706 = vmatpush1.bf16.msra.mxu0 0
      %2707 = vmatprep.subr.bf16.mxu0 0
      %2708 = vmatpush1.bf16.msra.mxu0 0
      %2709 = vmatprep.subr.bf16.mxu0 0
      %2710 = vmatpush1.bf16.msra.mxu0 0
      %2711 = vmatprep.subr.bf16.mxu0 0
      %2712 = vmatpush1.bf16.msra.mxu0 0
      %2713 = vmatprep.subr.bf16.mxu0 0
      %2714 = vmatpush1.bf16.msra.mxu0 0
      %2715 = vmatprep.subr.bf16.mxu0 0
      %2716 = vmatpush1.bf16.msra.mxu0 0
      %2717 = vmatprep.subr.bf16.mxu0 0
      %2718 = vmatpush1.bf16.msra.mxu0 0
      %2719 = vmatprep.subr.bf16.mxu0 0
      %2720 = vmatpush1.bf16.msra.mxu0 0
      %2721 = vmatprep.subr.bf16.mxu0 0
      %2722 = vmatpush1.bf16.msra.mxu0 0
      %2723 = vmatprep.subr.bf16.mxu0 0
      %2724 = vmatpush1.bf16.msra.mxu0 0
      %2725 = vmatprep.subr.bf16.mxu0 0
      %2726 = vmatpush1.bf16.msra.mxu0 0
      %2727 = vmatprep.subr.bf16.mxu0 0
      %2728 = vmatpush1.bf16.msra.mxu0 0
      %2729 = vmatprep.mubr.bf16.mxu0 0
      %2730 = vmatmul.mubr.bf16.gmra.mrb[0].mxu0 %v2695
      %v2731 = vpop.f32.mrb[0].mxu0
      %v2732 = vadd.f32 0.0, %v2731
      %v2733 = vpop.f32.mrb[0].mxu0
      %v2734 = vpop.f32.mrb[0].mxu0
      %v2735 = vadd.f32 0.0, %v2734
      %v2736 = vpop.f32.mrb[0].mxu0
      %2737 = vdwg.mxu0
      %v2739 = vsel %vm2169, %v2464, 0
      %2741 = vmatprep.subr.bf16.mxu0 0
      %2742 = vmatpush1.bf16.msra.mxu0 %v749
      %2743 = vmatprep.subr.bf16.mxu0 0
      %2744 = vmatpush1.bf16.msra.mxu0 0
      %2745 = vmatprep.subr.bf16.mxu0 0
      %2746 = vmatpush1.bf16.msra.mxu0 0
      %2747 = vmatprep.subr.bf16.mxu0 0
      %2748 = vmatpush1.bf16.msra.mxu0 0
      %2749 = vmatprep.subr.bf16.mxu0 0
      %2750 = vmatpush1.bf16.msra.mxu0 0
      %2751 = vmatprep.subr.bf16.mxu0 0
      %2752 = vmatpush1.bf16.msra.mxu0 0
      %2753 = vmatprep.subr.bf16.mxu0 0
      %2754 = vmatpush1.bf16.msra.mxu0 0
      %2755 = vmatprep.subr.bf16.mxu0 0
      %2756 = vmatpush1.bf16.msra.mxu0 0
      %2757 = vmatprep.subr.bf16.mxu0 0
      %2758 = vmatpush1.bf16.msra.mxu0 0
      %2759 = vmatprep.subr.bf16.mxu0 0
      %2760 = vmatpush1.bf16.msra.mxu0 0
      %2761 = vmatprep.subr.bf16.mxu0 0
      %2762 = vmatpush1.bf16.msra.mxu0 0
      %2763 = vmatprep.subr.bf16.mxu0 0
      %2764 = vmatpush1.bf16.msra.mxu0 0
      %2765 = vmatprep.subr.bf16.mxu0 0
      %2766 = vmatpush1.bf16.msra.mxu0 0
      %2767 = vmatprep.subr.bf16.mxu0 0
      %2768 = vmatpush1.bf16.msra.mxu0 0
      %2769 = vmatprep.subr.bf16.mxu0 0
      %2770 = vmatpush1.bf16.msra.mxu0 0
      %2771 = vmatprep.subr.bf16.mxu0 0
      %2772 = vmatpush1.bf16.msra.mxu0 0
      %2773 = vmatprep.mubr.bf16.mxu0 0
      %2774 = vmatmul.mubr.bf16.gmra.mrb[0].mxu0 %v2739
      %v2775 = vpop.f32.mrb[0].mxu0
      %v2776 = vadd.f32 0.0, %v2775
      %v2777 = vpop.f32.mrb[0].mxu0
      %v2778 = vpop.f32.mrb[0].mxu0
      %v2779 = vadd.f32 0.0, %v2778
      %v2780 = vpop.f32.mrb[0].mxu0
      %2781 = vdwg.mxu0
      %v2783 = vsel %vm2169, %v2465, 0
      %2785 = vmatprep.subr.bf16.mxu0 0
      %2786 = vmatpush1.bf16.msra.mxu0 %v750
      %2787 = vmatprep.subr.bf16.mxu0 0
      %2788 = vmatpush1.bf16.msra.mxu0 0
      %2789 = vmatprep.subr.bf16.mxu0 0
      %2790 = vmatpush1.bf16.msra.mxu0 0
      %2791 = vmatprep.subr.bf16.mxu0 0
      %2792 = vmatpush1.bf16.msra.mxu0 0
      %2793 = vmatprep.subr.bf16.mxu0 0
      %2794 = vmatpush1.bf16.msra.mxu0 0
      %2795 = vmatprep.subr.bf16.mxu0 0
      %2796 = vmatpush1.bf16.msra.mxu0 0
      %2797 = vmatprep.subr.bf16.mxu0 0
      %2798 = vmatpush1.bf16.msra.mxu0 0
      %2799 = vmatprep.subr.bf16.mxu0 0
      %2800 = vmatpush1.bf16.msra.mxu0 0
      %2801 = vmatprep.subr.bf16.mxu0 0
      %2802 = vmatpush1.bf16.msra.mxu0 0
      %2803 = vmatprep.subr.bf16.mxu0 0
      %2804 = vmatpush1.bf16.msra.mxu0 0
      %2805 = vmatprep.subr.bf16.mxu0 0
      %2806 = vmatpush1.bf16.msra.mxu0 0
      %2807 = vmatprep.subr.bf16.mxu0 0
      %2808 = vmatpush1.bf16.msra.mxu0 0
      %2809 = vmatprep.subr.bf16.mxu0 0
      %2810 = vmatpush1.bf16.msra.mxu0 0
      %2811 = vmatprep.subr.bf16.mxu0 0
      %2812 = vmatpush1.bf16.msra.mxu0 0
      %2813 = vmatprep.subr.bf16.mxu0 0
      %2814 = vmatpush1.bf16.msra.mxu0 0
      %2815 = vmatprep.subr.bf16.mxu0 0
      %2816 = vmatpush1.bf16.msra.mxu0 0
      %2817 = vmatprep.mubr.bf16.mxu0 0
      %2818 = vmatmul.mubr.bf16.gmra.mrb[0].mxu0 %v2783
      %v2819 = vpop.f32.mrb[0].mxu0
      %v2820 = vadd.f32 0.0, %v2819
      %v2821 = vpop.f32.mrb[0].mxu0
      %v2822 = vpop.f32.mrb[0].mxu0
      %v2823 = vadd.f32 0.0, %v2822
      %v2824 = vpop.f32.mrb[0].mxu0
      %2825 = vdwg.mxu0
      %v2827 = vsel %vm2169, %v2466, 0
      %2829 = vmatprep.subr.bf16.mxu0 0
      %2830 = vmatpush1.bf16.msra.mxu0 %v751
      %2831 = vmatprep.subr.bf16.mxu0 0
      %2832 = vmatpush1.bf16.msra.mxu0 0
      %2833 = vmatprep.subr.bf16.mxu0 0
      %2834 = vmatpush1.bf16.msra.mxu0 0
      %2835 = vmatprep.subr.bf16.mxu0 0
      %2836 = vmatpush1.bf16.msra.mxu0 0
      %2837 = vmatprep.subr.bf16.mxu0 0
      %2838 = vmatpush1.bf16.msra.mxu0 0
      %2839 = vmatprep.subr.bf16.mxu0 0
      %2840 = vmatpush1.bf16.msra.mxu0 0
      %2841 = vmatprep.subr.bf16.mxu0 0
      %2842 = vmatpush1.bf16.msra.mxu0 0
      %2843 = vmatprep.subr.bf16.mxu0 0
      %2844 = vmatpush1.bf16.msra.mxu0 0
      %2845 = vmatprep.subr.bf16.mxu0 0
      %2846 = vmatpush1.bf16.msra.mxu0 0
      %2847 = vmatprep.subr.bf16.mxu0 0
      %2848 = vmatpush1.bf16.msra.mxu0 0
      %2849 = vmatprep.subr.bf16.mxu0 0
      %2850 = vmatpush1.bf16.msra.mxu0 0
      %2851 = vmatprep.subr.bf16.mxu0 0
      %2852 = vmatpush1.bf16.msra.mxu0 0
      %2853 = vmatprep.subr.bf16.mxu0 0
      %2854 = vmatpush1.bf16.msra.mxu0 0
      %2855 = vmatprep.subr.bf16.mxu0 0
      %2856 = vmatpush1.bf16.msra.mxu0 0
      %2857 = vmatprep.subr.bf16.mxu0 0
      %2858 = vmatpush1.bf16.msra.mxu0 0
      %2859 = vmatprep.subr.bf16.mxu0 0
      %2860 = vmatpush1.bf16.msra.mxu0 0
      %2861 = vmatprep.mubr.bf16.mxu0 0
      %2862 = vmatmul.mubr.bf16.gmra.mrb[0].mxu0 %v2827
      %v2863 = vpop.f32.mrb[0].mxu0
      %v2864 = vadd.f32 0.0, %v2863
      %v2865 = vpop.f32.mrb[0].mxu0
      %v2866 = vpop.f32.mrb[0].mxu0
      %v2867 = vadd.f32 0.0, %v2866
      %v2868 = vpop.f32.mrb[0].mxu0
      %2869 = vdwg.mxu0
      %v2871 = vsel %vm2169, %v2467, 0
      %2873 = vmatprep.subr.bf16.mxu0 0
      %2874 = vmatpush1.bf16.msra.mxu0 %v752
      %2875 = vmatprep.subr.bf16.mxu0 0
      %2876 = vmatpush1.bf16.msra.mxu0 0
      %2877 = vmatprep.subr.bf16.mxu0 0
      %2878 = vmatpush1.bf16.msra.mxu0 0
      %2879 = vmatprep.subr.bf16.mxu0 0
      %2880 = vmatpush1.bf16.msra.mxu0 0
      %2881 = vmatprep.subr.bf16.mxu0 0
      %2882 = vmatpush1.bf16.msra.mxu0 0
      %2883 = vmatprep.subr.bf16.mxu0 0
      %2884 = vmatpush1.bf16.msra.mxu0 0
      %2885 = vmatprep.subr.bf16.mxu0 0
      %2886 = vmatpush1.bf16.msra.mxu0 0
      %2887 = vmatprep.subr.bf16.mxu0 0
      %2888 = vmatpush1.bf16.msra.mxu0 0
      %2889 = vmatprep.subr.bf16.mxu0 0
      %2890 = vmatpush1.bf16.msra.mxu0 0
      %2891 = vmatprep.subr.bf16.mxu0 0
      %2892 = vmatpush1.bf16.msra.mxu0 0
      %2893 = vmatprep.subr.bf16.mxu0 0
      %2894 = vmatpush1.bf16.msra.mxu0 0
      %2895 = vmatprep.subr.bf16.mxu0 0
      %2896 = vmatpush1.bf16.msra.mxu0 0
      %2897 = vmatprep.subr.bf16.mxu0 0
      %2898 = vmatpush1.bf16.msra.mxu0 0
      %2899 = vmatprep.subr.bf16.mxu0 0
      %2900 = vmatpush1.bf16.msra.mxu0 0
      %2901 = vmatprep.subr.bf16.mxu0 0
      %2902 = vmatpush1.bf16.msra.mxu0 0
      %2903 = vmatprep.subr.bf16.mxu0 0
      %2904 = vmatpush1.bf16.msra.mxu0 0
      %2905 = vmatprep.mubr.bf16.mxu0 0
      %2906 = vmatmul.mubr.bf16.gmra.mrb[0].mxu0 %v2871
      %v2907 = vpop.f32.mrb[0].mxu0
      %v2908 = vadd.f32 0.0, %v2907
      %v2909 = vpop.f32.mrb[0].mxu0
      %v2910 = vpop.f32.mrb[0].mxu0
      %v2911 = vadd.f32 0.0, %v2910
      %v2912 = vpop.f32.mrb[0].mxu0
      %2913 = vdwg.mxu0
      %v2915 = vsel %vm2169, %v2468, 0
      %2917 = vmatprep.subr.bf16.mxu0 0
      %2918 = vmatpush1.bf16.msra.mxu0 %v753
      %2919 = vmatprep.subr.bf16.mxu0 0
      %2920 = vmatpush1.bf16.msra.mxu0 0
      %2921 = vmatprep.subr.bf16.mxu0 0
      %2922 = vmatpush1.bf16.msra.mxu0 0
      %2923 = vmatprep.subr.bf16.mxu0 0
      %2924 = vmatpush1.bf16.msra.mxu0 0
      %2925 = vmatprep.subr.bf16.mxu0 0
      %2926 = vmatpush1.bf16.msra.mxu0 0
      %2927 = vmatprep.subr.bf16.mxu0 0
      %2928 = vmatpush1.bf16.msra.mxu0 0
      %2929 = vmatprep.subr.bf16.mxu0 0
      %2930 = vmatpush1.bf16.msra.mxu0 0
      %2931 = vmatprep.subr.bf16.mxu0 0
      %2932 = vmatpush1.bf16.msra.mxu0 0
      %2933 = vmatprep.subr.bf16.mxu0 0
      %2934 = vmatpush1.bf16.msra.mxu0 0
      %2935 = vmatprep.subr.bf16.mxu0 0
      %2936 = vmatpush1.bf16.msra.mxu0 0
      %2937 = vmatprep.subr.bf16.mxu0 0
      %2938 = vmatpush1.bf16.msra.mxu0 0
      %2939 = vmatprep.subr.bf16.mxu0 0
      %2940 = vmatpush1.bf16.msra.mxu0 0
      %2941 = vmatprep.subr.bf16.mxu0 0
      %2942 = vmatpush1.bf16.msra.mxu0 0
      %2943 = vmatprep.subr.bf16.mxu0 0
      %2944 = vmatpush1.bf16.msra.mxu0 0
      %2945 = vmatprep.subr.bf16.mxu0 0
      %2946 = vmatpush1.bf16.msra.mxu0 0
      %2947 = vmatprep.subr.bf16.mxu0 0
      %2948 = vmatpush1.bf16.msra.mxu0 0
      %2949 = vmatprep.mubr.bf16.mxu0 0
      %2950 = vmatmul.mubr.bf16.gmra.mrb[0].mxu0 %v2915
      %v2951 = vpop.f32.mrb[0].mxu0
      %v2952 = vadd.f32 0.0, %v2951
      %v2953 = vpop.f32.mrb[0].mxu0
      %v2954 = vpop.f32.mrb[0].mxu0
      %v2955 = vadd.f32 0.0, %v2954
      %v2956 = vpop.f32.mrb[0].mxu0
      %2957 = vdwg.mxu0
      %v2959 = vsel %vm2169, %v2469, 0
      %2961 = vmatprep.subr.bf16.mxu0 0
      %2962 = vmatpush1.bf16.msra.mxu0 %v754
      %2963 = vmatprep.subr.bf16.mxu0 0
      %2964 = vmatpush1.bf16.msra.mxu0 0
      %2965 = vmatprep.subr.bf16.mxu0 0
      %2966 = vmatpush1.bf16.msra.mxu0 0
      %2967 = vmatprep.subr.bf16.mxu0 0
      %2968 = vmatpush1.bf16.msra.mxu0 0
      %2969 = vmatprep.subr.bf16.mxu0 0
      %2970 = vmatpush1.bf16.msra.mxu0 0
      %2971 = vmatprep.subr.bf16.mxu0 0
      %2972 = vmatpush1.bf16.msra.mxu0 0
      %2973 = vmatprep.subr.bf16.mxu0 0
      %2974 = vmatpush1.bf16.msra.mxu0 0
      %2975 = vmatprep.subr.bf16.mxu0 0
      %2976 = vmatpush1.bf16.msra.mxu0 0
      %2977 = vmatprep.subr.bf16.mxu0 0
      %2978 = vmatpush1.bf16.msra.mxu0 0
      %2979 = vmatprep.subr.bf16.mxu0 0
      %2980 = vmatpush1.bf16.msra.mxu0 0
      %2981 = vmatprep.subr.bf16.mxu0 0
      %2982 = vmatpush1.bf16.msra.mxu0 0
      %2983 = vmatprep.subr.bf16.mxu0 0
      %2984 = vmatpush1.bf16.msra.mxu0 0
      %2985 = vmatprep.subr.bf16.mxu0 0
      %2986 = vmatpush1.bf16.msra.mxu0 0
      %2987 = vmatprep.subr.bf16.mxu0 0
      %2988 = vmatpush1.bf16.msra.mxu0 0
      %2989 = vmatprep.subr.bf16.mxu0 0
      %2990 = vmatpush1.bf16.msra.mxu0 0
      %2991 = vmatprep.subr.bf16.mxu0 0
      %2992 = vmatpush1.bf16.msra.mxu0 0
      %2993 = vmatprep.mubr.bf16.mxu0 0
      %2994 = vmatmul.mubr.bf16.gmra.mrb[0].mxu0 %v2959
      %v2995 = vpop.f32.mrb[0].mxu0
      %v2996 = vadd.f32 0.0, %v2995
      %v2997 = vpop.f32.mrb[0].mxu0
      %v2998 = vpop.f32.mrb[0].mxu0
      %v2999 = vadd.f32 0.0, %v2998
      %v3000 = vpop.f32.mrb[0].mxu0
      %3001 = vdwg.mxu0
      %v3003 = vsel %vm2169, %v2470, 0
      %3005 = vmatprep.subr.bf16.mxu0 0
      %3006 = vmatpush1.bf16.msra.mxu0 %v755
      %3007 = vmatprep.subr.bf16.mxu0 0
      %3008 = vmatpush1.bf16.msra.mxu0 0
      %3009 = vmatprep.subr.bf16.mxu0 0
      %3010 = vmatpush1.bf16.msra.mxu0 0
      %3011 = vmatprep.subr.bf16.mxu0 0
      %3012 = vmatpush1.bf16.msra.mxu0 0
      %3013 = vmatprep.subr.bf16.mxu0 0
      %3014 = vmatpush1.bf16.msra.mxu0 0
      %3015 = vmatprep.subr.bf16.mxu0 0
      %3016 = vmatpush1.bf16.msra.mxu0 0
      %3017 = vmatprep.subr.bf16.mxu0 0
      %3018 = vmatpush1.bf16.msra.mxu0 0
      %3019 = vmatprep.subr.bf16.mxu0 0
      %3020 = vmatpush1.bf16.msra.mxu0 0
      %3021 = vmatprep.subr.bf16.mxu0 0
      %3022 = vmatpush1.bf16.msra.mxu0 0
      %3023 = vmatprep.subr.bf16.mxu0 0
      %3024 = vmatpush1.bf16.msra.mxu0 0
      %3025 = vmatprep.subr.bf16.mxu0 0
      %3026 = vmatpush1.bf16.msra.mxu0 0
      %3027 = vmatprep.subr.bf16.mxu0 0
      %3028 = vmatpush1.bf16.msra.mxu0 0
      %3029 = vmatprep.subr.bf16.mxu0 0
      %3030 = vmatpush1.bf16.msra.mxu0 0
      %3031 = vmatprep.subr.bf16.mxu0 0
      %3032 = vmatpush1.bf16.msra.mxu0 0
      %3033 = vmatprep.subr.bf16.mxu0 0
      %3034 = vmatpush1.bf16.msra.mxu0 0
      %3035 = vmatprep.subr.bf16.mxu0 0
      %3036 = vmatpush1.bf16.msra.mxu0 0
      %3037 = vmatprep.mubr.bf16.mxu0 0
      %3038 = vmatmul.mubr.bf16.gmra.mrb[0].mxu0 %v3003
      %v3039 = vpop.f32.mrb[0].mxu0
      %v3040 = vadd.f32 0.0, %v3039
      %v3041 = vpop.f32.mrb[0].mxu0
      %v3042 = vpop.f32.mrb[0].mxu0
      %v3043 = vadd.f32 0.0, %v3042
      %v3044 = vpop.f32.mrb[0].mxu0
      %3045 = vdwg.mxu0
      %v3047 = vsel %vm2169, %v2471, 0
      %3049 = vmatprep.subr.bf16.mxu0 0
      %3050 = vmatpush1.bf16.msra.mxu0 %v756
      %3051 = vmatprep.subr.bf16.mxu0 0
      %3052 = vmatpush1.bf16.msra.mxu0 0
      %3053 = vmatprep.subr.bf16.mxu0 0
      %3054 = vmatpush1.bf16.msra.mxu0 0
      %3055 = vmatprep.subr.bf16.mxu0 0
      %3056 = vmatpush1.bf16.msra.mxu0 0
      %3057 = vmatprep.subr.bf16.mxu0 0
      %3058 = vmatpush1.bf16.msra.mxu0 0
      %3059 = vmatprep.subr.bf16.mxu0 0
      %3060 = vmatpush1.bf16.msra.mxu0 0
      %3061 = vmatprep.subr.bf16.mxu0 0
      %3062 = vmatpush1.bf16.msra.mxu0 0
      %3063 = vmatprep.subr.bf16.mxu0 0
      %3064 = vmatpush1.bf16.msra.mxu0 0
      %3065 = vmatprep.subr.bf16.mxu0 0
      %3066 = vmatpush1.bf16.msra.mxu0 0
      %3067 = vmatprep.subr.bf16.mxu0 0
      %3068 = vmatpush1.bf16.msra.mxu0 0
      %3069 = vmatprep.subr.bf16.mxu0 0
      %3070 = vmatpush1.bf16.msra.mxu0 0
      %3071 = vmatprep.subr.bf16.mxu0 0
      %3072 = vmatpush1.bf16.msra.mxu0 0
      %3073 = vmatprep.subr.bf16.mxu0 0
      %3074 = vmatpush1.bf16.msra.mxu0 0
      %3075 = vmatprep.subr.bf16.mxu0 0
      %3076 = vmatpush1.bf16.msra.mxu0 0
      %3077 = vmatprep.subr.bf16.mxu0 0
      %3078 = vmatpush1.bf16.msra.mxu0 0
      %3079 = vmatprep.subr.bf16.mxu0 0
      %3080 = vmatpush1.bf16.msra.mxu0 0
      %3081 = vmatprep.mubr.bf16.mxu0 0
      %3082 = vmatmul.mubr.bf16.gmra.mrb[0].mxu0 %v3047
      %v3083 = vpop.f32.mrb[0].mxu0
      %v3084 = vadd.f32 0.0, %v3083
      %v3085 = vpop.f32.mrb[0].mxu0
      %v3086 = vpop.f32.mrb[0].mxu0
      %v3087 = vadd.f32 0.0, %v3086
      %v3088 = vpop.f32.mrb[0].mxu0
      %3089 = vdwg.mxu0
      %v3091 = vsel %vm2169, %v2472, 0
      %3093 = vmatprep.subr.bf16.mxu0 0
      %3094 = vmatpush1.bf16.msra.mxu0 %v757
      %3095 = vmatprep.subr.bf16.mxu0 0
      %3096 = vmatpush1.bf16.msra.mxu0 0
      %3097 = vmatprep.subr.bf16.mxu0 0
      %3098 = vmatpush1.bf16.msra.mxu0 0
      %3099 = vmatprep.subr.bf16.mxu0 0
      %3100 = vmatpush1.bf16.msra.mxu0 0
      %3101 = vmatprep.subr.bf16.mxu0 0
      %3102 = vmatpush1.bf16.msra.mxu0 0
      %3103 = vmatprep.subr.bf16.mxu0 0
      %3104 = vmatpush1.bf16.msra.mxu0 0
      %3105 = vmatprep.subr.bf16.mxu0 0
      %3106 = vmatpush1.bf16.msra.mxu0 0
      %3107 = vmatprep.subr.bf16.mxu0 0
      %3108 = vmatpush1.bf16.msra.mxu0 0
      %3109 = vmatprep.subr.bf16.mxu0 0
      %3110 = vmatpush1.bf16.msra.mxu0 0
      %3111 = vmatprep.subr.bf16.mxu0 0
      %3112 = vmatpush1.bf16.msra.mxu0 0
      %3113 = vmatprep.subr.bf16.mxu0 0
      %3114 = vmatpush1.bf16.msra.mxu0 0
      %3115 = vmatprep.subr.bf16.mxu0 0
      %3116 = vmatpush1.bf16.msra.mxu0 0
      %3117 = vmatprep.subr.bf16.mxu0 0
      %3118 = vmatpush1.bf16.msra.mxu0 0
      %3119 = vmatprep.subr.bf16.mxu0 0
      %3120 = vmatpush1.bf16.msra.mxu0 0
      %3121 = vmatprep.subr.bf16.mxu0 0
      %3122 = vmatpush1.bf16.msra.mxu0 0
      %3123 = vmatprep.subr.bf16.mxu0 0
      %3124 = vmatpush1.bf16.msra.mxu0 0
      %3125 = vmatprep.mubr.bf16.mxu0 0
      %3126 = vmatmul.mubr.bf16.gmra.mrb[0].mxu0 %v3091
      %v3127 = vpop.f32.mrb[0].mxu0
      %v3128 = vadd.f32 0.0, %v3127
      %v3129 = vpop.f32.mrb[0].mxu0
      %v3130 = vpop.f32.mrb[0].mxu0
      %v3131 = vadd.f32 0.0, %v3130
      %v3132 = vpop.f32.mrb[0].mxu0
      %3133 = vdwg.mxu0
      %v3135 = vsel %vm2169, %v2473, 0
      %3137 = vmatprep.subr.bf16.mxu0 0
      %3138 = vmatpush1.bf16.msra.mxu0 %v758
      %3139 = vmatprep.subr.bf16.mxu0 0
      %3140 = vmatpush1.bf16.msra.mxu0 0
      %3141 = vmatprep.subr.bf16.mxu0 0
      %3142 = vmatpush1.bf16.msra.mxu0 0
      %3143 = vmatprep.subr.bf16.mxu0 0
      %3144 = vmatpush1.bf16.msra.mxu0 0
      %3145 = vmatprep.subr.bf16.mxu0 0
      %3146 = vmatpush1.bf16.msra.mxu0 0
      %3147 = vmatprep.subr.bf16.mxu0 0
      %3148 = vmatpush1.bf16.msra.mxu0 0
      %3149 = vmatprep.subr.bf16.mxu0 0
      %3150 = vmatpush1.bf16.msra.mxu0 0
      %3151 = vmatprep.subr.bf16.mxu0 0
      %3152 = vmatpush1.bf16.msra.mxu0 0
      %3153 = vmatprep.subr.bf16.mxu0 0
      %3154 = vmatpush1.bf16.msra.mxu0 0
      %3155 = vmatprep.subr.bf16.mxu0 0
      %3156 = vmatpush1.bf16.msra.mxu0 0
      %3157 = vmatprep.subr.bf16.mxu0 0
      %3158 = vmatpush1.bf16.msra.mxu0 0
      %3159 = vmatprep.subr.bf16.mxu0 0
      %3160 = vmatpush1.bf16.msra.mxu0 0
      %3161 = vmatprep.subr.bf16.mxu0 0
      %3162 = vmatpush1.bf16.msra.mxu0 0
      %3163 = vmatprep.subr.bf16.mxu0 0
      %3164 = vmatpush1.bf16.msra.mxu0 0
      %3165 = vmatprep.subr.bf16.mxu0 0
      %3166 = vmatpush1.bf16.msra.mxu0 0
      %3167 = vmatprep.subr.bf16.mxu0 0
      %3168 = vmatpush1.bf16.msra.mxu0 0
      %3169 = vmatprep.mubr.bf16.mxu0 0
      %3170 = vmatmul.mubr.bf16.gmra.mrb[0].mxu0 %v3135
      %v3171 = vpop.f32.mrb[0].mxu0
      %v3172 = vadd.f32 0.0, %v3171
      %v3173 = vpop.f32.mrb[0].mxu0
      %v3174 = vpop.f32.mrb[0].mxu0
      %v3175 = vadd.f32 0.0, %v3174
      %v3176 = vpop.f32.mrb[0].mxu0
      %3177 = vdwg.mxu0
      %v3178 = vrcp.pop %v2364
      %v3179 = vrcp.pop %v2367
      %v3180 = vrcp.pop %v2370
      %v3181 = vrcp.pop %v2373
      %v3182 = vrcp.pop %v2376
      %v3183 = vrcp.pop %v2379
      %v3184 = vrcp.pop %v2382
      %v3185 = vrcp.pop %v2385
      %v3186 = vrcp.pop %v2388
      %v3187 = vrcp.pop %v2391
      %v3188 = vrcp.pop %v2394
      %v3189 = vrcp.pop %v2397
      %v3190 = vrcp.pop %v2400
      %v3191 = vrcp.pop %v2403
      %v3192 = vrcp.pop %v2406
      %v3193 = vrcp.pop %v2409
      %v3194 = vrcp.pop %v2412
      %v3195 = vrcp.pop %v2415
      %v3196 = vrcp.pop %v2418
      %v3197 = vrcp.pop %v2421
      %v3198 = vrcp.pop %v2424
      %v3199 = vrcp.pop %v2427
      %v3200 = vrcp.pop %v2430
      %v3201 = vrcp.pop %v2433
      %v3202 = vrcp.pop %v2436
      %v3203 = vrcp.pop %v2439
      %v3204 = vrcp.pop %v2442
      %v3205 = vrcp.pop %v2445
      %v3206 = vrcp.pop %v2448
      %v3207 = vrcp.pop %v2451
      %v3208 = vrcp.pop %v2454
      %v3209 = vrcp.pop %v2457
      %v3210 = vmul.f32 %v2512, %v3178
      %v3211 = vmul.f32 %v2515, %v3179
      %v3212 = vmul.f32 %v2556, %v3180
      %v3213 = vmul.f32 %v2559, %v3181
      %v3214 = vmul.f32 %v2600, %v3182
      %v3215 = vmul.f32 %v2603, %v3183
      %v3216 = vmul.f32 %v2644, %v3184
      %v3217 = vmul.f32 %v2647, %v3185
      %v3218 = vmul.f32 %v2688, %v3186
      %v3219 = vmul.f32 %v2691, %v3187
      %v3220 = vmul.f32 %v2732, %v3188
      %v3221 = vmul.f32 %v2735, %v3189
      %v3222 = vmul.f32 %v2776, %v3190
      %v3223 = vmul.f32 %v2779, %v3191
      %v3224 = vmul.f32 %v2820, %v3192
      %v3225 = vmul.f32 %v2823, %v3193
      %v3226 = vmul.f32 %v2864, %v3194
      %v3227 = vmul.f32 %v2867, %v3195
      %v3228 = vmul.f32 %v2908, %v3196
      %v3229 = vmul.f32 %v2911, %v3197
      %v3230 = vmul.f32 %v2952, %v3198
      %v3231 = vmul.f32 %v2955, %v3199
      %v3232 = vmul.f32 %v2996, %v3200
      %v3233 = vmul.f32 %v2999, %v3201
      %v3234 = vmul.f32 %v3040, %v3202
      %v3235 = vmul.f32 %v3043, %v3203
      %v3236 = vmul.f32 %v3084, %v3204
      %v3237 = vmul.f32 %v3087, %v3205
      %v3238 = vmul.f32 %v3128, %v3206
      %v3239 = vmul.f32 %v3131, %v3207
      %v3240 = vmul.f32 %v3172, %v3208
      %v3241 = vmul.f32 %v3175, %v3209
      %v3242 = vld [vmem:[%s6] sm:$0x1]
      %v3244 = vlaneseq
      %v3245 = vshrl.u32 %v3244, 7
      %v3246 = vsub.s32 0, %v3245
      %v3247 = vrot.slane %v3242, %v3246
      %v3249 = vadd.f32 %v3210, %v3247
      %v3250 = vadd.f32 %v3211, %v3247
      %v3251 = vadd.f32 %v3212, %v3247
      %v3252 = vadd.f32 %v3213, %v3247
      %v3253 = vadd.f32 %v3214, %v3247
      %v3254 = vadd.f32 %v3215, %v3247
      %v3255 = vadd.f32 %v3216, %v3247
      %v3256 = vadd.f32 %v3217, %v3247
      %v3257 = vadd.f32 %v3218, %v3247
      %v3258 = vadd.f32 %v3219, %v3247
      %v3259 = vadd.f32 %v3220, %v3247
      %v3260 = vadd.f32 %v3221, %v3247
      %v3261 = vadd.f32 %v3222, %v3247
      %v3262 = vadd.f32 %v3223, %v3247
      %v3263 = vadd.f32 %v3224, %v3247
      %v3264 = vadd.f32 %v3225, %v3247
      %v3265 = vadd.f32 %v3226, %v3247
      %v3266 = vadd.f32 %v3227, %v3247
      %v3267 = vadd.f32 %v3228, %v3247
      %v3268 = vadd.f32 %v3229, %v3247
      %v3269 = vadd.f32 %v3230, %v3247
      %v3270 = vadd.f32 %v3231, %v3247
      %v3271 = vadd.f32 %v3232, %v3247
      %v3272 = vadd.f32 %v3233, %v3247
      %v3273 = vadd.f32 %v3234, %v3247
      %v3274 = vadd.f32 %v3235, %v3247
      %v3275 = vadd.f32 %v3236, %v3247
      %v3276 = vadd.f32 %v3237, %v3247
      %v3277 = vadd.f32 %v3238, %v3247
      %v3278 = vadd.f32 %v3239, %v3247
      %v3279 = vadd.f32 %v3240, %v3247
      %v3280 = vadd.f32 %v3241, %v3247
      %v3281 = vld [vmem:[%s405] sm:$0xf]
      %v3282 = vld [vmem:[%s405 + $0x4] sm:$0xf]
      %v3283 = vld [vmem:[%s405 + $0x8] sm:$0xf]
      %v3284 = vld [vmem:[%s405 + $0xc] sm:$0xf]
      %v3285 = vld [vmem:[%s405 + $0x10] sm:$0xf]
      %v3286 = vld [vmem:[%s405 + $0x14] sm:$0xf]
      %v3287 = vld [vmem:[%s405 + $0x18] sm:$0xf]
      %v3288 = vld [vmem:[%s405 + $0x1c] sm:$0xf]
      %v3289 = vld [vmem:[%s405 + $0x20] sm:$0xf]
      %v3290 = vld [vmem:[%s405 + $0x24] sm:$0xf]
      %v3291 = vld [vmem:[%s405 + $0x28] sm:$0xf]
      %v3292 = vld [vmem:[%s405 + $0x2c] sm:$0xf]
      %v3293 = vld [vmem:[%s405 + $0x30] sm:$0xf]
      %v3294 = vld [vmem:[%s405 + $0x34] sm:$0xf]
      %v3295 = vld [vmem:[%s405 + $0x38] sm:$0xf]
      %v3296 = vld [vmem:[%s405 + $0x3c] sm:$0xf]
      %v3297 = vpack.c.bf16 %v3250, %v3249
      %v3298 = vpack.c.bf16 %v3252, %v3251
      %v3299 = vpack.c.bf16 %v3254, %v3253
      %v3300 = vpack.c.bf16 %v3256, %v3255
      %v3301 = vpack.c.bf16 %v3258, %v3257
      %v3302 = vpack.c.bf16 %v3260, %v3259
      %v3303 = vpack.c.bf16 %v3262, %v3261
      %v3304 = vpack.c.bf16 %v3264, %v3263
      %v3305 = vpack.c.bf16 %v3266, %v3265
      %v3306 = vpack.c.bf16 %v3268, %v3267
      %v3307 = vpack.c.bf16 %v3270, %v3269
      %v3308 = vpack.c.bf16 %v3272, %v3271
      %v3309 = vpack.c.bf16 %v3274, %v3273
      %v3310 = vpack.c.bf16 %v3276, %v3275
      %v3311 = vpack.c.bf16 %v3278, %v3277
      %v3312 = vpack.c.bf16 %v3280, %v3279
      %v3314 = vsel %vm2169, %v3281, 0
      %3316 = vmatprep.subr.bf16.mxu0 0
      %3317 = vmatpush1.bf16.msra.mxu0 %v3297
      %3318 = vmatprep.subr.bf16.mxu0 0
      %3319 = vmatpush1.bf16.msra.mxu0 0
      %3320 = vmatprep.subr.bf16.mxu0 0
      %3321 = vmatpush1.bf16.msra.mxu0 0
      %3322 = vmatprep.subr.bf16.mxu0 0
      %3323 = vmatpush1.bf16.msra.mxu0 0
      %3324 = vmatprep.subr.bf16.mxu0 0
      %3325 = vmatpush1.bf16.msra.mxu0 0
      %3326 = vmatprep.subr.bf16.mxu0 0
      %3327 = vmatpush1.bf16.msra.mxu0 0
      %3328 = vmatprep.subr.bf16.mxu0 0
      %3329 = vmatpush1.bf16.msra.mxu0 0
      %3330 = vmatprep.subr.bf16.mxu0 0
      %3331 = vmatpush1.bf16.msra.mxu0 0
      %3332 = vmatprep.subr.bf16.mxu0 0
      %3333 = vmatpush1.bf16.msra.mxu0 0
      %3334 = vmatprep.subr.bf16.mxu0 0
      %3335 = vmatpush1.bf16.msra.mxu0 0
      %3336 = vmatprep.subr.bf16.mxu0 0
      %3337 = vmatpush1.bf16.msra.mxu0 0
      %3338 = vmatprep.subr.bf16.mxu0 0
      %3339 = vmatpush1.bf16.msra.mxu0 0
      %3340 = vmatprep.subr.bf16.mxu0 0
      %3341 = vmatpush1.bf16.msra.mxu0 0
      %3342 = vmatprep.subr.bf16.mxu0 0
      %3343 = vmatpush1.bf16.msra.mxu0 0
      %3344 = vmatprep.subr.bf16.mxu0 0
      %3345 = vmatpush1.bf16.msra.mxu0 0
      %3346 = vmatprep.subr.bf16.mxu0 0
      %3347 = vmatpush1.bf16.msra.mxu0 0
      %3348 = vmatprep.mubr.bf16.mxu0 0
      %3349 = vmatmul.mubr.bf16.gmra.mrb[0].mxu0 %v3314
      %v3350 = vpop.f32.mrb[0].mxu0
      %v3351 = vadd.f32 0.0, %v3350
      %v3352 = vpop.f32.mrb[0].mxu0
      %v3353 = vpop.f32.mrb[0].mxu0
      %v3354 = vpop.f32.mrb[0].mxu0
      %3355 = vdwg.mxu0
      %v3357 = vsel %vm2169, %v3282, 0
      %3359 = vmatprep.subr.bf16.mxu0 0
      %3360 = vmatpush1.bf16.msra.mxu0 %v3298
      %3361 = vmatprep.subr.bf16.mxu0 0
      %3362 = vmatpush1.bf16.msra.mxu0 0
      %3363 = vmatprep.subr.bf16.mxu0 0
      %3364 = vmatpush1.bf16.msra.mxu0 0
      %3365 = vmatprep.subr.bf16.mxu0 0
      %3366 = vmatpush1.bf16.msra.mxu0 0
      %3367 = vmatprep.subr.bf16.mxu0 0
      %3368 = vmatpush1.bf16.msra.mxu0 0
      %3369 = vmatprep.subr.bf16.mxu0 0
      %3370 = vmatpush1.bf16.msra.mxu0 0
      %3371 = vmatprep.subr.bf16.mxu0 0
      %3372 = vmatpush1.bf16.msra.mxu0 0
      %3373 = vmatprep.subr.bf16.mxu0 0
      %3374 = vmatpush1.bf16.msra.mxu0 0
      %3375 = vmatprep.subr.bf16.mxu0 0
      %3376 = vmatpush1.bf16.msra.mxu0 0
      %3377 = vmatprep.subr.bf16.mxu0 0
      %3378 = vmatpush1.bf16.msra.mxu0 0
      %3379 = vmatprep.subr.bf16.mxu0 0
      %3380 = vmatpush1.bf16.msra.mxu0 0
      %3381 = vmatprep.subr.bf16.mxu0 0
      %3382 = vmatpush1.bf16.msra.mxu0 0
      %3383 = vmatprep.subr.bf16.mxu0 0
      %3384 = vmatpush1.bf16.msra.mxu0 0
      %3385 = vmatprep.subr.bf16.mxu0 0
      %3386 = vmatpush1.bf16.msra.mxu0 0
      %3387 = vmatprep.subr.bf16.mxu0 0
      %3388 = vmatpush1.bf16.msra.mxu0 0
      %3389 = vmatprep.subr.bf16.mxu0 0
      %3390 = vmatpush1.bf16.msra.mxu0 0
      %3391 = vmatprep.mubr.bf16.mxu0 0
      %3392 = vmatmul.mubr.bf16.gmra.mrb[0].mxu0 %v3357
      %v3393 = vpop.f32.mrb[0].mxu0
      %v3394 = vadd.f32 0.0, %v3393
      %v3395 = vpop.f32.mrb[0].mxu0
      %v3396 = vpop.f32.mrb[0].mxu0
      %v3397 = vpop.f32.mrb[0].mxu0
      %3398 = vdwg.mxu0
      %v3400 = vsel %vm2169, %v3283, 0
      %3402 = vmatprep.subr.bf16.mxu0 0
      %3403 = vmatpush1.bf16.msra.mxu0 %v3299
      %3404 = vmatprep.subr.bf16.mxu0 0
      %3405 = vmatpush1.bf16.msra.mxu0 0
      %3406 = vmatprep.subr.bf16.mxu0 0
      %3407 = vmatpush1.bf16.msra.mxu0 0
      %3408 = vmatprep.subr.bf16.mxu0 0
      %3409 = vmatpush1.bf16.msra.mxu0 0
      %3410 = vmatprep.subr.bf16.mxu0 0
      %3411 = vmatpush1.bf16.msra.mxu0 0
      %3412 = vmatprep.subr.bf16.mxu0 0
      %3413 = vmatpush1.bf16.msra.mxu0 0
      %3414 = vmatprep.subr.bf16.mxu0 0
      %3415 = vmatpush1.bf16.msra.mxu0 0
      %3416 = vmatprep.subr.bf16.mxu0 0
      %3417 = vmatpush1.bf16.msra.mxu0 0
      %3418 = vmatprep.subr.bf16.mxu0 0
      %3419 = vmatpush1.bf16.msra.mxu0 0
      %3420 = vmatprep.subr.bf16.mxu0 0
      %3421 = vmatpush1.bf16.msra.mxu0 0
      %3422 = vmatprep.subr.bf16.mxu0 0
      %3423 = vmatpush1.bf16.msra.mxu0 0
      %3424 = vmatprep.subr.bf16.mxu0 0
      %3425 = vmatpush1.bf16.msra.mxu0 0
      %3426 = vmatprep.subr.bf16.mxu0 0
      %3427 = vmatpush1.bf16.msra.mxu0 0
      %3428 = vmatprep.subr.bf16.mxu0 0
      %3429 = vmatpush1.bf16.msra.mxu0 0
      %3430 = vmatprep.subr.bf16.mxu0 0
      %3431 = vmatpush1.bf16.msra.mxu0 0
      %3432 = vmatprep.subr.bf16.mxu0 0
      %3433 = vmatpush1.bf16.msra.mxu0 0
      %3434 = vmatprep.mubr.bf16.mxu0 0
      %3435 = vmatmul.mubr.bf16.gmra.mrb[0].mxu0 %v3400
      %v3436 = vpop.f32.mrb[0].mxu0
      %v3437 = vadd.f32 0.0, %v3436
      %v3438 = vpop.f32.mrb[0].mxu0
      %v3439 = vpop.f32.mrb[0].mxu0
      %v3440 = vpop.f32.mrb[0].mxu0
      %3441 = vdwg.mxu0
      %v3443 = vsel %vm2169, %v3284, 0
      %3445 = vmatprep.subr.bf16.mxu0 0
      %3446 = vmatpush1.bf16.msra.mxu0 %v3300
      %3447 = vmatprep.subr.bf16.mxu0 0
      %3448 = vmatpush1.bf16.msra.mxu0 0
      %3449 = vmatprep.subr.bf16.mxu0 0
      %3450 = vmatpush1.bf16.msra.mxu0 0
      %3451 = vmatprep.subr.bf16.mxu0 0
      %3452 = vmatpush1.bf16.msra.mxu0 0
      %3453 = vmatprep.subr.bf16.mxu0 0
      %3454 = vmatpush1.bf16.msra.mxu0 0
      %3455 = vmatprep.subr.bf16.mxu0 0
      %3456 = vmatpush1.bf16.msra.mxu0 0
      %3457 = vmatprep.subr.bf16.mxu0 0
      %3458 = vmatpush1.bf16.msra.mxu0 0
      %3459 = vmatprep.subr.bf16.mxu0 0
      %3460 = vmatpush1.bf16.msra.mxu0 0
      %3461 = vmatprep.subr.bf16.mxu0 0
      %3462 = vmatpush1.bf16.msra.mxu0 0
      %3463 = vmatprep.subr.bf16.mxu0 0
      %3464 = vmatpush1.bf16.msra.mxu0 0
      %3465 = vmatprep.subr.bf16.mxu0 0
      %3466 = vmatpush1.bf16.msra.mxu0 0
      %3467 = vmatprep.subr.bf16.mxu0 0
      %3468 = vmatpush1.bf16.msra.mxu0 0
      %3469 = vmatprep.subr.bf16.mxu0 0
      %3470 = vmatpush1.bf16.msra.mxu0 0
      %3471 = vmatprep.subr.bf16.mxu0 0
      %3472 = vmatpush1.bf16.msra.mxu0 0
      %3473 = vmatprep.subr.bf16.mxu0 0
      %3474 = vmatpush1.bf16.msra.mxu0 0
      %3475 = vmatprep.subr.bf16.mxu0 0
      %3476 = vmatpush1.bf16.msra.mxu0 0
      %3477 = vmatprep.mubr.bf16.mxu0 0
      %3478 = vmatmul.mubr.bf16.gmra.mrb[0].mxu0 %v3443
      %v3479 = vpop.f32.mrb[0].mxu0
      %v3480 = vadd.f32 0.0, %v3479
      %v3481 = vpop.f32.mrb[0].mxu0
      %v3482 = vpop.f32.mrb[0].mxu0
      %v3483 = vpop.f32.mrb[0].mxu0
      %3484 = vdwg.mxu0
      %v3486 = vsel %vm2169, %v3285, 0
      %3488 = vmatprep.subr.bf16.mxu0 0
      %3489 = vmatpush1.bf16.msra.mxu0 %v3301
      %3490 = vmatprep.subr.bf16.mxu0 0
      %3491 = vmatpush1.bf16.msra.mxu0 0
      %3492 = vmatprep.subr.bf16.mxu0 0
      %3493 = vmatpush1.bf16.msra.mxu0 0
      %3494 = vmatprep.subr.bf16.mxu0 0
      %3495 = vmatpush1.bf16.msra.mxu0 0
      %3496 = vmatprep.subr.bf16.mxu0 0
      %3497 = vmatpush1.bf16.msra.mxu0 0
      %3498 = vmatprep.subr.bf16.mxu0 0
      %3499 = vmatpush1.bf16.msra.mxu0 0
      %3500 = vmatprep.subr.bf16.mxu0 0
      %3501 = vmatpush1.bf16.msra.mxu0 0
      %3502 = vmatprep.subr.bf16.mxu0 0
      %3503 = vmatpush1.bf16.msra.mxu0 0
      %3504 = vmatprep.subr.bf16.mxu0 0
      %3505 = vmatpush1.bf16.msra.mxu0 0
      %3506 = vmatprep.subr.bf16.mxu0 0
      %3507 = vmatpush1.bf16.msra.mxu0 0
      %3508 = vmatprep.subr.bf16.mxu0 0
      %3509 = vmatpush1.bf16.msra.mxu0 0
      %3510 = vmatprep.subr.bf16.mxu0 0
      %3511 = vmatpush1.bf16.msra.mxu0 0
      %3512 = vmatprep.subr.bf16.mxu0 0
      %3513 = vmatpush1.bf16.msra.mxu0 0
      %3514 = vmatprep.subr.bf16.mxu0 0
      %3515 = vmatpush1.bf16.msra.mxu0 0
      %3516 = vmatprep.subr.bf16.mxu0 0
      %3517 = vmatpush1.bf16.msra.mxu0 0
      %3518 = vmatprep.subr.bf16.mxu0 0
      %3519 = vmatpush1.bf16.msra.mxu0 0
      %3520 = vmatprep.mubr.bf16.mxu0 0
      %3521 = vmatmul.mubr.bf16.gmra.mrb[0].mxu0 %v3486
      %v3522 = vpop.f32.mrb[0].mxu0
      %v3523 = vadd.f32 0.0, %v3522
      %v3524 = vpop.f32.mrb[0].mxu0
      %v3525 = vpop.f32.mrb[0].mxu0
      %v3526 = vpop.f32.mrb[0].mxu0
      %3527 = vdwg.mxu0
      %v3529 = vsel %vm2169, %v3286, 0
      %3531 = vmatprep.subr.bf16.mxu0 0
      %3532 = vmatpush1.bf16.msra.mxu0 %v3302
      %3533 = vmatprep.subr.bf16.mxu0 0
      %3534 = vmatpush1.bf16.msra.mxu0 0
      %3535 = vmatprep.subr.bf16.mxu0 0
      %3536 = vmatpush1.bf16.msra.mxu0 0
      %3537 = vmatprep.subr.bf16.mxu0 0
      %3538 = vmatpush1.bf16.msra.mxu0 0
      %3539 = vmatprep.subr.bf16.mxu0 0
      %3540 = vmatpush1.bf16.msra.mxu0 0
      %3541 = vmatprep.subr.bf16.mxu0 0
      %3542 = vmatpush1.bf16.msra.mxu0 0
      %3543 = vmatprep.subr.bf16.mxu0 0
      %3544 = vmatpush1.bf16.msra.mxu0 0
      %3545 = vmatprep.subr.bf16.mxu0 0
      %3546 = vmatpush1.bf16.msra.mxu0 0
      %3547 = vmatprep.subr.bf16.mxu0 0
      %3548 = vmatpush1.bf16.msra.mxu0 0
      %3549 = vmatprep.subr.bf16.mxu0 0
      %3550 = vmatpush1.bf16.msra.mxu0 0
      %3551 = vmatprep.subr.bf16.mxu0 0
      %3552 = vmatpush1.bf16.msra.mxu0 0
      %3553 = vmatprep.subr.bf16.mxu0 0
      %3554 = vmatpush1.bf16.msra.mxu0 0
      %3555 = vmatprep.subr.bf16.mxu0 0
      %3556 = vmatpush1.bf16.msra.mxu0 0
      %3557 = vmatprep.subr.bf16.mxu0 0
      %3558 = vmatpush1.bf16.msra.mxu0 0
      %3559 = vmatprep.subr.bf16.mxu0 0
      %3560 = vmatpush1.bf16.msra.mxu0 0
      %3561 = vmatprep.subr.bf16.mxu0 0
      %3562 = vmatpush1.bf16.msra.mxu0 0
      %3563 = vmatprep.mubr.bf16.mxu0 0
      %3564 = vmatmul.mubr.bf16.gmra.mrb[0].mxu0 %v3529
      %v3565 = vpop.f32.mrb[0].mxu0
      %v3566 = vadd.f32 0.0, %v3565
      %v3567 = vpop.f32.mrb[0].mxu0
      %v3568 = vpop.f32.mrb[0].mxu0
      %v3569 = vpop.f32.mrb[0].mxu0
      %3570 = vdwg.mxu0
      %v3572 = vsel %vm2169, %v3287, 0
      %3574 = vmatprep.subr.bf16.mxu0 0
      %3575 = vmatpush1.bf16.msra.mxu0 %v3303
      %3576 = vmatprep.subr.bf16.mxu0 0
      %3577 = vmatpush1.bf16.msra.mxu0 0
      %3578 = vmatprep.subr.bf16.mxu0 0
      %3579 = vmatpush1.bf16.msra.mxu0 0
      %3580 = vmatprep.subr.bf16.mxu0 0
      %3581 = vmatpush1.bf16.msra.mxu0 0
      %3582 = vmatprep.subr.bf16.mxu0 0
      %3583 = vmatpush1.bf16.msra.mxu0 0
      %3584 = vmatprep.subr.bf16.mxu0 0
      %3585 = vmatpush1.bf16.msra.mxu0 0
      %3586 = vmatprep.subr.bf16.mxu0 0
      %3587 = vmatpush1.bf16.msra.mxu0 0
      %3588 = vmatprep.subr.bf16.mxu0 0
      %3589 = vmatpush1.bf16.msra.mxu0 0
      %3590 = vmatprep.subr.bf16.mxu0 0
      %3591 = vmatpush1.bf16.msra.mxu0 0
      %3592 = vmatprep.subr.bf16.mxu0 0
      %3593 = vmatpush1.bf16.msra.mxu0 0
      %3594 = vmatprep.subr.bf16.mxu0 0
      %3595 = vmatpush1.bf16.msra.mxu0 0
      %3596 = vmatprep.subr.bf16.mxu0 0
      %3597 = vmatpush1.bf16.msra.mxu0 0
      %3598 = vmatprep.subr.bf16.mxu0 0
      %3599 = vmatpush1.bf16.msra.mxu0 0
      %3600 = vmatprep.subr.bf16.mxu0 0
      %3601 = vmatpush1.bf16.msra.mxu0 0
      %3602 = vmatprep.subr.bf16.mxu0 0
      %3603 = vmatpush1.bf16.msra.mxu0 0
      %3604 = vmatprep.subr.bf16.mxu0 0
      %3605 = vmatpush1.bf16.msra.mxu0 0
      %3606 = vmatprep.mubr.bf16.mxu0 0
      %3607 = vmatmul.mubr.bf16.gmra.mrb[0].mxu0 %v3572
      %v3608 = vpop.f32.mrb[0].mxu0
      %v3609 = vadd.f32 0.0, %v3608
      %v3610 = vpop.f32.mrb[0].mxu0
      %v3611 = vpop.f32.mrb[0].mxu0
      %v3612 = vpop.f32.mrb[0].mxu0
      %3613 = vdwg.mxu0
      %v3615 = vsel %vm2169, %v3288, 0
      %3617 = vmatprep.subr.bf16.mxu0 0
      %3618 = vmatpush1.bf16.msra.mxu0 %v3304
      %3619 = vmatprep.subr.bf16.mxu0 0
      %3620 = vmatpush1.bf16.msra.mxu0 0
      %3621 = vmatprep.subr.bf16.mxu0 0
      %3622 = vmatpush1.bf16.msra.mxu0 0
      %3623 = vmatprep.subr.bf16.mxu0 0
      %3624 = vmatpush1.bf16.msra.mxu0 0
      %3625 = vmatprep.subr.bf16.mxu0 0
      %3626 = vmatpush1.bf16.msra.mxu0 0
      %3627 = vmatprep.subr.bf16.mxu0 0
      %3628 = vmatpush1.bf16.msra.mxu0 0
      %3629 = vmatprep.subr.bf16.mxu0 0
      %3630 = vmatpush1.bf16.msra.mxu0 0
      %3631 = vmatprep.subr.bf16.mxu0 0
      %3632 = vmatpush1.bf16.msra.mxu0 0
      %3633 = vmatprep.subr.bf16.mxu0 0
      %3634 = vmatpush1.bf16.msra.mxu0 0
      %3635 = vmatprep.subr.bf16.mxu0 0
      %3636 = vmatpush1.bf16.msra.mxu0 0
      %3637 = vmatprep.subr.bf16.mxu0 0
      %3638 = vmatpush1.bf16.msra.mxu0 0
      %3639 = vmatprep.subr.bf16.mxu0 0
      %3640 = vmatpush1.bf16.msra.mxu0 0
      %3641 = vmatprep.subr.bf16.mxu0 0
      %3642 = vmatpush1.bf16.msra.mxu0 0
      %3643 = vmatprep.subr.bf16.mxu0 0
      %3644 = vmatpush1.bf16.msra.mxu0 0
      %3645 = vmatprep.subr.bf16.mxu0 0
      %3646 = vmatpush1.bf16.msra.mxu0 0
      %3647 = vmatprep.subr.bf16.mxu0 0
      %3648 = vmatpush1.bf16.msra.mxu0 0
      %3649 = vmatprep.mubr.bf16.mxu0 0
      %3650 = vmatmul.mubr.bf16.gmra.mrb[0].mxu0 %v3615
      %v3651 = vpop.f32.mrb[0].mxu0
      %v3652 = vadd.f32 0.0, %v3651
      %v3653 = vpop.f32.mrb[0].mxu0
      %v3654 = vpop.f32.mrb[0].mxu0
      %v3655 = vpop.f32.mrb[0].mxu0
      %3656 = vdwg.mxu0
      %v3658 = vsel %vm2169, %v3289, 0
      %3660 = vmatprep.subr.bf16.mxu0 0
      %3661 = vmatpush1.bf16.msra.mxu0 %v3305
      %3662 = vmatprep.subr.bf16.mxu0 0
      %3663 = vmatpush1.bf16.msra.mxu0 0
      %3664 = vmatprep.subr.bf16.mxu0 0
      %3665 = vmatpush1.bf16.msra.mxu0 0
      %3666 = vmatprep.subr.bf16.mxu0 0
      %3667 = vmatpush1.bf16.msra.mxu0 0
      %3668 = vmatprep.subr.bf16.mxu0 0
      %3669 = vmatpush1.bf16.msra.mxu0 0
      %3670 = vmatprep.subr.bf16.mxu0 0
      %3671 = vmatpush1.bf16.msra.mxu0 0
      %3672 = vmatprep.subr.bf16.mxu0 0
      %3673 = vmatpush1.bf16.msra.mxu0 0
      %3674 = vmatprep.subr.bf16.mxu0 0
      %3675 = vmatpush1.bf16.msra.mxu0 0
      %3676 = vmatprep.subr.bf16.mxu0 0
      %3677 = vmatpush1.bf16.msra.mxu0 0
      %3678 = vmatprep.subr.bf16.mxu0 0
      %3679 = vmatpush1.bf16.msra.mxu0 0
      %3680 = vmatprep.subr.bf16.mxu0 0
      %3681 = vmatpush1.bf16.msra.mxu0 0
      %3682 = vmatprep.subr.bf16.mxu0 0
      %3683 = vmatpush1.bf16.msra.mxu0 0
      %3684 = vmatprep.subr.bf16.mxu0 0
      %3685 = vmatpush1.bf16.msra.mxu0 0
      %3686 = vmatprep.subr.bf16.mxu0 0
      %3687 = vmatpush1.bf16.msra.mxu0 0
      %3688 = vmatprep.subr.bf16.mxu0 0
      %3689 = vmatpush1.bf16.msra.mxu0 0
      %3690 = vmatprep.subr.bf16.mxu0 0
      %3691 = vmatpush1.bf16.msra.mxu0 0
      %3692 = vmatprep.mubr.bf16.mxu0 0
      %3693 = vmatmul.mubr.bf16.gmra.mrb[0].mxu0 %v3658
      %v3694 = vpop.f32.mrb[0].mxu0
      %v3695 = vadd.f32 0.0, %v3694
      %v3696 = vpop.f32.mrb[0].mxu0
      %v3697 = vpop.f32.mrb[0].mxu0
      %v3698 = vpop.f32.mrb[0].mxu0
      %3699 = vdwg.mxu0
      %v3701 = vsel %vm2169, %v3290, 0
      %3703 = vmatprep.subr.bf16.mxu0 0
      %3704 = vmatpush1.bf16.msra.mxu0 %v3306
      %3705 = vmatprep.subr.bf16.mxu0 0
      %3706 = vmatpush1.bf16.msra.mxu0 0
      %3707 = vmatprep.subr.bf16.mxu0 0
      %3708 = vmatpush1.bf16.msra.mxu0 0
      %3709 = vmatprep.subr.bf16.mxu0 0
      %3710 = vmatpush1.bf16.msra.mxu0 0
      %3711 = vmatprep.subr.bf16.mxu0 0
      %3712 = vmatpush1.bf16.msra.mxu0 0
      %3713 = vmatprep.subr.bf16.mxu0 0
      %3714 = vmatpush1.bf16.msra.mxu0 0
      %3715 = vmatprep.subr.bf16.mxu0 0
      %3716 = vmatpush1.bf16.msra.mxu0 0
      %3717 = vmatprep.subr.bf16.mxu0 0
      %3718 = vmatpush1.bf16.msra.mxu0 0
      %3719 = vmatprep.subr.bf16.mxu0 0
      %3720 = vmatpush1.bf16.msra.mxu0 0
      %3721 = vmatprep.subr.bf16.mxu0 0
      %3722 = vmatpush1.bf16.msra.mxu0 0
      %3723 = vmatprep.subr.bf16.mxu0 0
      %3724 = vmatpush1.bf16.msra.mxu0 0
      %3725 = vmatprep.subr.bf16.mxu0 0
      %3726 = vmatpush1.bf16.msra.mxu0 0
      %3727 = vmatprep.subr.bf16.mxu0 0
      %3728 = vmatpush1.bf16.msra.mxu0 0
      %3729 = vmatprep.subr.bf16.mxu0 0
      %3730 = vmatpush1.bf16.msra.mxu0 0
      %3731 = vmatprep.subr.bf16.mxu0 0
      %3732 = vmatpush1.bf16.msra.mxu0 0
      %3733 = vmatprep.subr.bf16.mxu0 0
      %3734 = vmatpush1.bf16.msra.mxu0 0
      %3735 = vmatprep.mubr.bf16.mxu0 0
      %3736 = vmatmul.mubr.bf16.gmra.mrb[0].mxu0 %v3701
      %v3737 = vpop.f32.mrb[0].mxu0
      %v3738 = vadd.f32 0.0, %v3737
      %v3739 = vpop.f32.mrb[0].mxu0
      %v3740 = vpop.f32.mrb[0].mxu0
      %v3741 = vpop.f32.mrb[0].mxu0
      %3742 = vdwg.mxu0
      %v3744 = vsel %vm2169, %v3291, 0
      %3746 = vmatprep.subr.bf16.mxu0 0
      %3747 = vmatpush1.bf16.msra.mxu0 %v3307
      %3748 = vmatprep.subr.bf16.mxu0 0
      %3749 = vmatpush1.bf16.msra.mxu0 0
      %3750 = vmatprep.subr.bf16.mxu0 0
      %3751 = vmatpush1.bf16.msra.mxu0 0
      %3752 = vmatprep.subr.bf16.mxu0 0
      %3753 = vmatpush1.bf16.msra.mxu0 0
      %3754 = vmatprep.subr.bf16.mxu0 0
      %3755 = vmatpush1.bf16.msra.mxu0 0
      %3756 = vmatprep.subr.bf16.mxu0 0
      %3757 = vmatpush1.bf16.msra.mxu0 0
      %3758 = vmatprep.subr.bf16.mxu0 0
      %3759 = vmatpush1.bf16.msra.mxu0 0
      %3760 = vmatprep.subr.bf16.mxu0 0
      %3761 = vmatpush1.bf16.msra.mxu0 0
      %3762 = vmatprep.subr.bf16.mxu0 0
      %3763 = vmatpush1.bf16.msra.mxu0 0
      %3764 = vmatprep.subr.bf16.mxu0 0
      %3765 = vmatpush1.bf16.msra.mxu0 0
      %3766 = vmatprep.subr.bf16.mxu0 0
      %3767 = vmatpush1.bf16.msra.mxu0 0
      %3768 = vmatprep.subr.bf16.mxu0 0
      %3769 = vmatpush1.bf16.msra.mxu0 0
      %3770 = vmatprep.subr.bf16.mxu0 0
      %3771 = vmatpush1.bf16.msra.mxu0 0
      %3772 = vmatprep.subr.bf16.mxu0 0
      %3773 = vmatpush1.bf16.msra.mxu0 0
      %3774 = vmatprep.subr.bf16.mxu0 0
      %3775 = vmatpush1.bf16.msra.mxu0 0
      %3776 = vmatprep.subr.bf16.mxu0 0
      %3777 = vmatpush1.bf16.msra.mxu0 0
      %3778 = vmatprep.mubr.bf16.mxu0 0
      %3779 = vmatmul.mubr.bf16.gmra.mrb[0].mxu0 %v3744
      %v3780 = vpop.f32.mrb[0].mxu0
      %v3781 = vadd.f32 0.0, %v3780
      %v3782 = vpop.f32.mrb[0].mxu0
      %v3783 = vpop.f32.mrb[0].mxu0
      %v3784 = vpop.f32.mrb[0].mxu0
      %3785 = vdwg.mxu0
      %v3787 = vsel %vm2169, %v3292, 0
      %3789 = vmatprep.subr.bf16.mxu0 0
      %3790 = vmatpush1.bf16.msra.mxu0 %v3308
      %3791 = vmatprep.subr.bf16.mxu0 0
      %3792 = vmatpush1.bf16.msra.mxu0 0
      %3793 = vmatprep.subr.bf16.mxu0 0
      %3794 = vmatpush1.bf16.msra.mxu0 0
      %3795 = vmatprep.subr.bf16.mxu0 0
      %3796 = vmatpush1.bf16.msra.mxu0 0
      %3797 = vmatprep.subr.bf16.mxu0 0
      %3798 = vmatpush1.bf16.msra.mxu0 0
      %3799 = vmatprep.subr.bf16.mxu0 0
      %3800 = vmatpush1.bf16.msra.mxu0 0
      %3801 = vmatprep.subr.bf16.mxu0 0
      %3802 = vmatpush1.bf16.msra.mxu0 0
      %3803 = vmatprep.subr.bf16.mxu0 0
      %3804 = vmatpush1.bf16.msra.mxu0 0
      %3805 = vmatprep.subr.bf16.mxu0 0
      %3806 = vmatpush1.bf16.msra.mxu0 0
      %3807 = vmatprep.subr.bf16.mxu0 0
      %3808 = vmatpush1.bf16.msra.mxu0 0
      %3809 = vmatprep.subr.bf16.mxu0 0
      %3810 = vmatpush1.bf16.msra.mxu0 0
      %3811 = vmatprep.subr.bf16.mxu0 0
      %3812 = vmatpush1.bf16.msra.mxu0 0
      %3813 = vmatprep.subr.bf16.mxu0 0
      %3814 = vmatpush1.bf16.msra.mxu0 0
      %3815 = vmatprep.subr.bf16.mxu0 0
      %3816 = vmatpush1.bf16.msra.mxu0 0
      %3817 = vmatprep.subr.bf16.mxu0 0
      %3818 = vmatpush1.bf16.msra.mxu0 0
      %3819 = vmatprep.subr.bf16.mxu0 0
      %3820 = vmatpush1.bf16.msra.mxu0 0
      %3821 = vmatprep.mubr.bf16.mxu0 0
      %3822 = vmatmul.mubr.bf16.gmra.mrb[0].mxu0 %v3787
      %v3823 = vpop.f32.mrb[0].mxu0
      %v3824 = vadd.f32 0.0, %v3823
      %v3825 = vpop.f32.mrb[0].mxu0
      %v3826 = vpop.f32.mrb[0].mxu0
      %v3827 = vpop.f32.mrb[0].mxu0
      %3828 = vdwg.mxu0
      %v3830 = vsel %vm2169, %v3293, 0
      %3832 = vmatprep.subr.bf16.mxu0 0
      %3833 = vmatpush1.bf16.msra.mxu0 %v3309
      %3834 = vmatprep.subr.bf16.mxu0 0
      %3835 = vmatpush1.bf16.msra.mxu0 0
      %3836 = vmatprep.subr.bf16.mxu0 0
      %3837 = vmatpush1.bf16.msra.mxu0 0
      %3838 = vmatprep.subr.bf16.mxu0 0
      %3839 = vmatpush1.bf16.msra.mxu0 0
      %3840 = vmatprep.subr.bf16.mxu0 0
      %3841 = vmatpush1.bf16.msra.mxu0 0
      %3842 = vmatprep.subr.bf16.mxu0 0
      %3843 = vmatpush1.bf16.msra.mxu0 0
      %3844 = vmatprep.subr.bf16.mxu0 0
      %3845 = vmatpush1.bf16.msra.mxu0 0
      %3846 = vmatprep.subr.bf16.mxu0 0
      %3847 = vmatpush1.bf16.msra.mxu0 0
      %3848 = vmatprep.subr.bf16.mxu0 0
      %3849 = vmatpush1.bf16.msra.mxu0 0
      %3850 = vmatprep.subr.bf16.mxu0 0
      %3851 = vmatpush1.bf16.msra.mxu0 0
      %3852 = vmatprep.subr.bf16.mxu0 0
      %3853 = vmatpush1.bf16.msra.mxu0 0
      %3854 = vmatprep.subr.bf16.mxu0 0
      %3855 = vmatpush1.bf16.msra.mxu0 0
      %3856 = vmatprep.subr.bf16.mxu0 0
      %3857 = vmatpush1.bf16.msra.mxu0 0
      %3858 = vmatprep.subr.bf16.mxu0 0
      %3859 = vmatpush1.bf16.msra.mxu0 0
      %3860 = vmatprep.subr.bf16.mxu0 0
      %3861 = vmatpush1.bf16.msra.mxu0 0
      %3862 = vmatprep.subr.bf16.mxu0 0
      %3863 = vmatpush1.bf16.msra.mxu0 0
      %3864 = vmatprep.mubr.bf16.mxu0 0
      %3865 = vmatmul.mubr.bf16.gmra.mrb[0].mxu0 %v3830
      %v3866 = vpop.f32.mrb[0].mxu0
      %v3867 = vadd.f32 0.0, %v3866
      %v3868 = vpop.f32.mrb[0].mxu0
      %v3869 = vpop.f32.mrb[0].mxu0
      %v3870 = vpop.f32.mrb[0].mxu0
      %3871 = vdwg.mxu0
      %v3873 = vsel %vm2169, %v3294, 0
      %3875 = vmatprep.subr.bf16.mxu0 0
      %3876 = vmatpush1.bf16.msra.mxu0 %v3310
      %3877 = vmatprep.subr.bf16.mxu0 0
      %3878 = vmatpush1.bf16.msra.mxu0 0
      %3879 = vmatprep.subr.bf16.mxu0 0
      %3880 = vmatpush1.bf16.msra.mxu0 0
      %3881 = vmatprep.subr.bf16.mxu0 0
      %3882 = vmatpush1.bf16.msra.mxu0 0
      %3883 = vmatprep.subr.bf16.mxu0 0
      %3884 = vmatpush1.bf16.msra.mxu0 0
      %3885 = vmatprep.subr.bf16.mxu0 0
      %3886 = vmatpush1.bf16.msra.mxu0 0
      %3887 = vmatprep.subr.bf16.mxu0 0
      %3888 = vmatpush1.bf16.msra.mxu0 0
      %3889 = vmatprep.subr.bf16.mxu0 0
      %3890 = vmatpush1.bf16.msra.mxu0 0
      %3891 = vmatprep.subr.bf16.mxu0 0
      %3892 = vmatpush1.bf16.msra.mxu0 0
      %3893 = vmatprep.subr.bf16.mxu0 0
      %3894 = vmatpush1.bf16.msra.mxu0 0
      %3895 = vmatprep.subr.bf16.mxu0 0
      %3896 = vmatpush1.bf16.msra.mxu0 0
      %3897 = vmatprep.subr.bf16.mxu0 0
      %3898 = vmatpush1.bf16.msra.mxu0 0
      %3899 = vmatprep.subr.bf16.mxu0 0
      %3900 = vmatpush1.bf16.msra.mxu0 0
      %3901 = vmatprep.subr.bf16.mxu0 0
      %3902 = vmatpush1.bf16.msra.mxu0 0
      %3903 = vmatprep.subr.bf16.mxu0 0
      %3904 = vmatpush1.bf16.msra.mxu0 0
      %3905 = vmatprep.subr.bf16.mxu0 0
      %3906 = vmatpush1.bf16.msra.mxu0 0
      %3907 = vmatprep.mubr.bf16.mxu0 0
      %3908 = vmatmul.mubr.bf16.gmra.mrb[0].mxu0 %v3873
      %v3909 = vpop.f32.mrb[0].mxu0
      %v3910 = vadd.f32 0.0, %v3909
      %v3911 = vpop.f32.mrb[0].mxu0
      %v3912 = vpop.f32.mrb[0].mxu0
      %v3913 = vpop.f32.mrb[0].mxu0
      %3914 = vdwg.mxu0
      %v3916 = vsel %vm2169, %v3295, 0
      %3918 = vmatprep.subr.bf16.mxu0 0
      %3919 = vmatpush1.bf16.msra.mxu0 %v3311
      %3920 = vmatprep.subr.bf16.mxu0 0
      %3921 = vmatpush1.bf16.msra.mxu0 0
      %3922 = vmatprep.subr.bf16.mxu0 0
      %3923 = vmatpush1.bf16.msra.mxu0 0
      %3924 = vmatprep.subr.bf16.mxu0 0
      %3925 = vmatpush1.bf16.msra.mxu0 0
      %3926 = vmatprep.subr.bf16.mxu0 0
      %3927 = vmatpush1.bf16.msra.mxu0 0
      %3928 = vmatprep.subr.bf16.mxu0 0
      %3929 = vmatpush1.bf16.msra.mxu0 0
      %3930 = vmatprep.subr.bf16.mxu0 0
      %3931 = vmatpush1.bf16.msra.mxu0 0
      %3932 = vmatprep.subr.bf16.mxu0 0
      %3933 = vmatpush1.bf16.msra.mxu0 0
      %3934 = vmatprep.subr.bf16.mxu0 0
      %3935 = vmatpush1.bf16.msra.mxu0 0
      %3936 = vmatprep.subr.bf16.mxu0 0
      %3937 = vmatpush1.bf16.msra.mxu0 0
      %3938 = vmatprep.subr.bf16.mxu0 0
      %3939 = vmatpush1.bf16.msra.mxu0 0
      %3940 = vmatprep.subr.bf16.mxu0 0
      %3941 = vmatpush1.bf16.msra.mxu0 0
      %3942 = vmatprep.subr.bf16.mxu0 0
      %3943 = vmatpush1.bf16.msra.mxu0 0
      %3944 = vmatprep.subr.bf16.mxu0 0
      %3945 = vmatpush1.bf16.msra.mxu0 0
      %3946 = vmatprep.subr.bf16.mxu0 0
      %3947 = vmatpush1.bf16.msra.mxu0 0
      %3948 = vmatprep.subr.bf16.mxu0 0
      %3949 = vmatpush1.bf16.msra.mxu0 0
      %3950 = vmatprep.mubr.bf16.mxu0 0
      %3951 = vmatmul.mubr.bf16.gmra.mrb[0].mxu0 %v3916
      %v3952 = vpop.f32.mrb[0].mxu0
      %v3953 = vadd.f32 0.0, %v3952
      %v3954 = vpop.f32.mrb[0].mxu0
      %v3955 = vpop.f32.mrb[0].mxu0
      %v3956 = vpop.f32.mrb[0].mxu0
      %3957 = vdwg.mxu0
      %v3959 = vsel %vm2169, %v3296, 0
      %3961 = vmatprep.subr.bf16.mxu0 0
      %3962 = vmatpush1.bf16.msra.mxu0 %v3312
      %3963 = vmatprep.subr.bf16.mxu0 0
      %3964 = vmatpush1.bf16.msra.mxu0 0
      %3965 = vmatprep.subr.bf16.mxu0 0
      %3966 = vmatpush1.bf16.msra.mxu0 0
      %3967 = vmatprep.subr.bf16.mxu0 0
      %3968 = vmatpush1.bf16.msra.mxu0 0
      %3969 = vmatprep.subr.bf16.mxu0 0
      %3970 = vmatpush1.bf16.msra.mxu0 0
      %3971 = vmatprep.subr.bf16.mxu0 0
      %3972 = vmatpush1.bf16.msra.mxu0 0
      %3973 = vmatprep.subr.bf16.mxu0 0
      %3974 = vmatpush1.bf16.msra.mxu0 0
      %3975 = vmatprep.subr.bf16.mxu0 0
      %3976 = vmatpush1.bf16.msra.mxu0 0
      %3977 = vmatprep.subr.bf16.mxu0 0
      %3978 = vmatpush1.bf16.msra.mxu0 0
      %3979 = vmatprep.subr.bf16.mxu0 0
      %3980 = vmatpush1.bf16.msra.mxu0 0
      %3981 = vmatprep.subr.bf16.mxu0 0
      %3982 = vmatpush1.bf16.msra.mxu0 0
      %3983 = vmatprep.subr.bf16.mxu0 0
      %3984 = vmatpush1.bf16.msra.mxu0 0
      %3985 = vmatprep.subr.bf16.mxu0 0
      %3986 = vmatpush1.bf16.msra.mxu0 0
      %3987 = vmatprep.subr.bf16.mxu0 0
      %3988 = vmatpush1.bf16.msra.mxu0 0
      %3989 = vmatprep.subr.bf16.mxu0 0
      %3990 = vmatpush1.bf16.msra.mxu0 0
      %3991 = vmatprep.subr.bf16.mxu0 0
      %3992 = vmatpush1.bf16.msra.mxu0 0
      %3993 = vmatprep.mubr.bf16.mxu0 0
      %3994 = vmatmul.mubr.bf16.gmra.mrb[0].mxu0 %v3959
      %v3995 = vpop.f32.mrb[0].mxu0
      %v3996 = vadd.f32 0.0, %v3995
      %v3997 = vpop.f32.mrb[0].mxu0
      %v3998 = vpop.f32.mrb[0].mxu0
      %v3999 = vpop.f32.mrb[0].mxu0
      %4000 = vdwg.mxu0
      %v4001 = vpack.c.bf16 %v3394, %v3351
      %v4002 = vpack.c.bf16 %v3480, %v3437
      %v4003 = vpack.c.bf16 %v3566, %v3523
      %v4004 = vpack.c.bf16 %v3652, %v3609
      %v4005 = vpack.c.bf16 %v3738, %v3695
      %v4006 = vpack.c.bf16 %v3824, %v3781
      %v4007 = vpack.c.bf16 %v3910, %v3867
      %v4008 = vpack.c.bf16 %v3996, %v3953
      %v4009 = vld [vmem:[%s7] sm:$0xf]
      %v4010 = vld [vmem:[%s7 + $0x4] sm:$0xf]
      %v4011 = vld [vmem:[%s7 + $0x8] sm:$0xf]
      %v4012 = vld [vmem:[%s7 + $0xc] sm:$0xf]
      %v4013 = vld [vmem:[%s7 + $0x10] sm:$0xf]
      %v4014 = vld [vmem:[%s7 + $0x14] sm:$0xf]
      %v4015 = vld [vmem:[%s7 + $0x18] sm:$0xf]
      %v4016 = vld [vmem:[%s7 + $0x1c] sm:$0xf]
      %v4017 = vld [vmem:[%s7 + $0x20] sm:$0xf]
      %v4018 = vld [vmem:[%s7 + $0x24] sm:$0xf]
      %v4019 = vld [vmem:[%s7 + $0x28] sm:$0xf]
      %v4020 = vld [vmem:[%s7 + $0x2c] sm:$0xf]
      %v4021 = vld [vmem:[%s7 + $0x30] sm:$0xf]
      %v4022 = vld [vmem:[%s7 + $0x34] sm:$0xf]
      %v4023 = vld [vmem:[%s7 + $0x38] sm:$0xf]
      %v4024 = vld [vmem:[%s7 + $0x3c] sm:$0xf]
      %v4025 = vld [vmem:[%s8] sm:$0x1]
      %v4027 = vlaneseq
      %v4028 = vshrl.u32 %v4027, 7
      %v4029 = vsub.s32 0, %v4028
      %v4030 = vrot.slane %v4025, %v4029
      %v4048 = vunpack.c.l.b16 %v4009
      %v4049 = vunpack.c.l.b16 %v4010
      %v4050 = vunpack.c.l.b16 %v4011
      %v4051 = vunpack.c.l.b16 %v4012
      %v4052 = vunpack.c.l.b16 %v4013
      %v4053 = vunpack.c.l.b16 %v4014
      %v4054 = vunpack.c.l.b16 %v4015
      %v4055 = vunpack.c.l.b16 %v4016
      %v4056 = vunpack.c.l.b16 %v4017
      %v4057 = vunpack.c.l.b16 %v4018
      %v4058 = vunpack.c.l.b16 %v4019
      %v4059 = vunpack.c.l.b16 %v4020
      %v4060 = vunpack.c.l.b16 %v4021
      %v4061 = vunpack.c.l.b16 %v4022
      %v4062 = vunpack.c.l.b16 %v4023
      %v4063 = vunpack.c.l.b16 %v4024
      %v4064 = vpack.c.b16 %v4049, %v4048
      %v4065 = vpack.c.b16 %v4051, %v4050
      %v4066 = vpack.c.b16 %v4053, %v4052
      %v4067 = vpack.c.b16 %v4055, %v4054
      %v4068 = vpack.c.b16 %v4057, %v4056
      %v4069 = vpack.c.b16 %v4059, %v4058
      %v4070 = vpack.c.b16 %v4061, %v4060
      %v4071 = vpack.c.b16 %v4063, %v4062
      %4080 = vmatprep.subr.bf16.mxu0 0
      %4081 = vmatpush1.bf16.msra.mxu0 %v4064
      %4082 = vmatprep.subr.bf16.mxu0 0
      %4083 = vmatpush1.bf16.msra.mxu0 %v4065
      %4084 = vmatprep.subr.bf16.mxu0 0
      %4085 = vmatpush1.bf16.msra.mxu0 %v4066
      %4086 = vmatprep.subr.bf16.mxu0 0
      %4087 = vmatpush1.bf16.msra.mxu0 %v4067
      %4088 = vmatprep.subr.bf16.mxu0 0
      %4089 = vmatpush1.bf16.msra.mxu0 %v4068
      %4090 = vmatprep.subr.bf16.mxu0 0
      %4091 = vmatpush1.bf16.msra.mxu0 %v4069
      %4092 = vmatprep.subr.bf16.mxu0 0
      %4093 = vmatpush1.bf16.msra.mxu0 %v4070
      %4094 = vmatprep.subr.bf16.mxu0 0
      %4095 = vmatpush1.bf16.msra.mxu0 %v4071
      %4096 = vmatprep.subr.bf16.mxu0 0
      %4097 = vmatpush1.bf16.msra.mxu0 0
      %4098 = vmatprep.subr.bf16.mxu0 0
      %4099 = vmatpush1.bf16.msra.mxu0 0
      %4100 = vmatprep.subr.bf16.mxu0 0
      %4101 = vmatpush1.bf16.msra.mxu0 0
      %4102 = vmatprep.subr.bf16.mxu0 0
      %4103 = vmatpush1.bf16.msra.mxu0 0
      %4104 = vmatprep.subr.bf16.mxu0 0
      %4105 = vmatpush1.bf16.msra.mxu0 0
      %4106 = vmatprep.subr.bf16.mxu0 0
      %4107 = vmatpush1.bf16.msra.mxu0 0
      %4108 = vmatprep.subr.bf16.mxu0 0
      %4109 = vmatpush1.bf16.msra.mxu0 0
      %4110 = vmatprep.subr.bf16.mxu0 0
      %4111 = vmatpush1.bf16.msra.mxu0 0
      %4112 = vmatprep.mubr.bf16.mxu0 0
      %4113 = vmatmul.mubr.bf16.gmra.mrb[0].mxu0 %v4001
      %v4114 = vpop.f32.mrb[0].mxu0
      %v4115 = vadd.f32 %v4030, %v4114
      %v4116 = vpop.f32.mrb[0].mxu0
      %v4117 = vpop.f32.mrb[0].mxu0
      %v4118 = vadd.f32 %v4030, %v4117
      %v4119 = vpop.f32.mrb[0].mxu0
      %4120 = vmatprep.mubr.bf16.mxu0 0
      %4121 = vmatmul.mubr.bf16.gmra.mrb[0].mxu0 %v4002
      %v4122 = vpop.f32.mrb[0].mxu0
      %v4123 = vadd.f32 %v4030, %v4122
      %v4124 = vpop.f32.mrb[0].mxu0
      %v4125 = vpop.f32.mrb[0].mxu0
      %v4126 = vadd.f32 %v4030, %v4125
      %v4127 = vpop.f32.mrb[0].mxu0
      %4128 = vmatprep.mubr.bf16.mxu0 0
      %4129 = vmatmul.mubr.bf16.gmra.mrb[0].mxu0 %v4003
      %v4130 = vpop.f32.mrb[0].mxu0
      %v4131 = vadd.f32 %v4030, %v4130
      %v4132 = vpop.f32.mrb[0].mxu0
      %v4133 = vpop.f32.mrb[0].mxu0
      %v4134 = vadd.f32 %v4030, %v4133
      %v4135 = vpop.f32.mrb[0].mxu0
      %4136 = vmatprep.mubr.bf16.mxu0 0
      %4137 = vmatmul.mubr.bf16.gmra.mrb[0].mxu0 %v4004
      %v4138 = vpop.f32.mrb[0].mxu0
      %v4139 = vadd.f32 %v4030, %v4138
      %v4140 = vpop.f32.mrb[0].mxu0
      %v4141 = vpop.f32.mrb[0].mxu0
      %v4142 = vadd.f32 %v4030, %v4141
      %v4143 = vpop.f32.mrb[0].mxu0
      %4144 = vmatprep.mubr.bf16.mxu0 0
      %4145 = vmatmul.mubr.bf16.gmra.mrb[0].mxu0 %v4005
      %v4146 = vpop.f32.mrb[0].mxu0
      %v4147 = vadd.f32 %v4030, %v4146
      %v4148 = vpop.f32.mrb[0].mxu0
      %v4149 = vpop.f32.mrb[0].mxu0
      %v4150 = vadd.f32 %v4030, %v4149
      %v4151 = vpop.f32.mrb[0].mxu0
      %4152 = vmatprep.mubr.bf16.mxu0 0
      %4153 = vmatmul.mubr.bf16.gmra.mrb[0].mxu0 %v4006
      %v4154 = vpop.f32.mrb[0].mxu0
      %v4155 = vadd.f32 %v4030, %v4154
      %v4156 = vpop.f32.mrb[0].mxu0
      %v4157 = vpop.f32.mrb[0].mxu0
      %v4158 = vadd.f32 %v4030, %v4157
      %v4159 = vpop.f32.mrb[0].mxu0
      %4160 = vmatprep.mubr.bf16.mxu0 0
      %4161 = vmatmul.mubr.bf16.gmra.mrb[0].mxu0 %v4007
      %v4162 = vpop.f32.mrb[0].mxu0
      %v4163 = vadd.f32 %v4030, %v4162
      %v4164 = vpop.f32.mrb[0].mxu0
      %v4165 = vpop.f32.mrb[0].mxu0
      %v4166 = vadd.f32 %v4030, %v4165
      %v4167 = vpop.f32.mrb[0].mxu0
      %4168 = vmatprep.mubr.bf16.mxu0 0
      %4169 = vmatmul.mubr.bf16.gmra.mrb[0].mxu0 %v4008
      %v4170 = vpop.f32.mrb[0].mxu0
      %v4171 = vadd.f32 %v4030, %v4170
      %v4172 = vpop.f32.mrb[0].mxu0
      %v4173 = vpop.f32.mrb[0].mxu0
      %v4174 = vadd.f32 %v4030, %v4173
      %v4175 = vpop.f32.mrb[0].mxu0
      %4176 = vdwg.mxu0
      %vm4177 = vcmp.ge.f32.partialorder %v4115, 0.0
      %vm4178 = vcmp.ge.f32.partialorder %v4118, 0.0
      %vm4179 = vcmp.ge.f32.partialorder %v4123, 0.0
      %vm4180 = vcmp.ge.f32.partialorder %v4126, 0.0
      %vm4181 = vcmp.ge.f32.partialorder %v4131, 0.0
      %vm4182 = vcmp.ge.f32.partialorder %v4134, 0.0
      %vm4183 = vcmp.ge.f32.partialorder %v4139, 0.0
      %vm4184 = vcmp.ge.f32.partialorder %v4142, 0.0
      %vm4185 = vcmp.ge.f32.partialorder %v4147, 0.0
      %vm4186 = vcmp.ge.f32.partialorder %v4150, 0.0
      %vm4187 = vcmp.ge.f32.partialorder %v4155, 0.0
      %vm4188 = vcmp.ge.f32.partialorder %v4158, 0.0
      %vm4189 = vcmp.ge.f32.partialorder %v4163, 0.0
      %vm4190 = vcmp.ge.f32.partialorder %v4166, 0.0
      %vm4191 = vcmp.ge.f32.partialorder %v4171, 0.0
      %vm4192 = vcmp.ge.f32.partialorder %v4174, 0.0
      %v4193 = vmul.f32 %v4115, 0.2
      %v4194 = vmul.f32 %v4118, 0.2
      %v4195 = vmul.f32 %v4123, 0.2
      %v4196 = vmul.f32 %v4126, 0.2
      %v4197 = vmul.f32 %v4131, 0.2
      %v4198 = vmul.f32 %v4134, 0.2
      %v4199 = vmul.f32 %v4139, 0.2
      %v4200 = vmul.f32 %v4142, 0.2
      %v4201 = vmul.f32 %v4147, 0.2
      %v4202 = vmul.f32 %v4150, 0.2
      %v4203 = vmul.f32 %v4155, 0.2
      %v4204 = vmul.f32 %v4158, 0.2
      %v4205 = vmul.f32 %v4163, 0.2
      %v4206 = vmul.f32 %v4166, 0.2
      %v4207 = vmul.f32 %v4171, 0.2
      %v4208 = vmul.f32 %v4174, 0.2
      %v4209 = vsel %vm4177, %v4115, %v4193
      %v4210 = vsel %vm4178, %v4118, %v4194
      %v4211 = vsel %vm4179, %v4123, %v4195
      %v4212 = vsel %vm4180, %v4126, %v4196
      %v4213 = vsel %vm4181, %v4131, %v4197
      %v4214 = vsel %vm4182, %v4134, %v4198
      %v4215 = vsel %vm4183, %v4139, %v4199
      %v4216 = vsel %vm4184, %v4142, %v4200
      %v4217 = vsel %vm4185, %v4147, %v4201
      %v4218 = vsel %vm4186, %v4150, %v4202
      %v4219 = vsel %vm4187, %v4155, %v4203
      %v4220 = vsel %vm4188, %v4158, %v4204
      %v4221 = vsel %vm4189, %v4163, %v4205
      %v4222 = vsel %vm4190, %v4166, %v4206
      %v4223 = vsel %vm4191, %v4171, %v4207
      %v4224 = vsel %vm4192, %v4174, %v4208
      %v4225 = vpack.c.bf16 %v4210, %v4209
      %v4226 = vpack.c.bf16 %v4212, %v4211
      %v4227 = vpack.c.bf16 %v4214, %v4213
      %v4228 = vpack.c.bf16 %v4216, %v4215
      %v4229 = vpack.c.bf16 %v4218, %v4217
      %v4230 = vpack.c.bf16 %v4220, %v4219
      %v4231 = vpack.c.bf16 %v4222, %v4221
      %v4232 = vpack.c.bf16 %v4224, %v4223
      %v4233 = vld [vmem:[%s9] sm:$0xf]
      %v4234 = vld [vmem:[%s9 + $0x4] sm:$0xf]
      %v4235 = vld [vmem:[%s9 + $0x8] sm:$0xf]
      %v4236 = vld [vmem:[%s9 + $0xc] sm:$0xf]
      %v4237 = vld [vmem:[%s9 + $0x10] sm:$0xf]
      %v4238 = vld [vmem:[%s9 + $0x14] sm:$0xf]
      %v4239 = vld [vmem:[%s9 + $0x18] sm:$0xf]
      %v4240 = vld [vmem:[%s9 + $0x1c] sm:$0xf]
      %v4241 = vld [vmem:[%s9 + $0x20] sm:$0xf]
      %v4242 = vld [vmem:[%s9 + $0x24] sm:$0xf]
      %v4243 = vld [vmem:[%s9 + $0x28] sm:$0xf]
      %v4244 = vld [vmem:[%s9 + $0x2c] sm:$0xf]
      %v4245 = vld [vmem:[%s9 + $0x30] sm:$0xf]
      %v4246 = vld [vmem:[%s9 + $0x34] sm:$0xf]
      %v4247 = vld [vmem:[%s9 + $0x38] sm:$0xf]
      %v4248 = vld [vmem:[%s9 + $0x3c] sm:$0xf]
      %v4265 = vunpack.c.l.b16 %v4233
      %v4266 = vunpack.c.l.b16 %v4234
      %v4267 = vunpack.c.l.b16 %v4235
      %v4268 = vunpack.c.l.b16 %v4236
      %v4269 = vunpack.c.l.b16 %v4237
      %v4270 = vunpack.c.l.b16 %v4238
      %v4271 = vunpack.c.l.b16 %v4239
      %v4272 = vunpack.c.l.b16 %v4240
      %v4273 = vunpack.c.l.b16 %v4241
      %v4274 = vunpack.c.l.b16 %v4242
      %v4275 = vunpack.c.l.b16 %v4243
      %v4276 = vunpack.c.l.b16 %v4244
      %v4277 = vunpack.c.l.b16 %v4245
      %v4278 = vunpack.c.l.b16 %v4246
      %v4279 = vunpack.c.l.b16 %v4247
      %v4280 = vunpack.c.l.b16 %v4248
      %v4281 = vpack.c.b16 %v4266, %v4265
      %v4282 = vpack.c.b16 %v4268, %v4267
      %v4283 = vpack.c.b16 %v4270, %v4269
      %v4284 = vpack.c.b16 %v4272, %v4271
      %v4285 = vpack.c.b16 %v4274, %v4273
      %v4286 = vpack.c.b16 %v4276, %v4275
      %v4287 = vpack.c.b16 %v4278, %v4277
      %v4288 = vpack.c.b16 %v4280, %v4279
      %4297 = vmatprep.subr.bf16.mxu0 0
      %4298 = vmatpush1.bf16.msra.mxu0 %v4281
      %4299 = vmatprep.subr.bf16.mxu0 0
      %4300 = vmatpush1.bf16.msra.mxu0 %v4282
      %4301 = vmatprep.subr.bf16.mxu0 0
      %4302 = vmatpush1.bf16.msra.mxu0 %v4283
      %4303 = vmatprep.subr.bf16.mxu0 0
      %4304 = vmatpush1.bf16.msra.mxu0 %v4284
      %4305 = vmatprep.subr.bf16.mxu0 0
      %4306 = vmatpush1.bf16.msra.mxu0 %v4285
      %4307 = vmatprep.subr.bf16.mxu0 0
      %4308 = vmatpush1.bf16.msra.mxu0 %v4286
      %4309 = vmatprep.subr.bf16.mxu0 0
      %4310 = vmatpush1.bf16.msra.mxu0 %v4287
      %4311 = vmatprep.subr.bf16.mxu0 0
      %4312 = vmatpush1.bf16.msra.mxu0 %v4288
      %4313 = vmatprep.subr.bf16.mxu0 0
      %4314 = vmatpush1.bf16.msra.mxu0 0
      %4315 = vmatprep.subr.bf16.mxu0 0
      %4316 = vmatpush1.bf16.msra.mxu0 0
      %4317 = vmatprep.subr.bf16.mxu0 0
      %4318 = vmatpush1.bf16.msra.mxu0 0
      %4319 = vmatprep.subr.bf16.mxu0 0
      %4320 = vmatpush1.bf16.msra.mxu0 0
      %4321 = vmatprep.subr.bf16.mxu0 0
      %4322 = vmatpush1.bf16.msra.mxu0 0
      %4323 = vmatprep.subr.bf16.mxu0 0
      %4324 = vmatpush1.bf16.msra.mxu0 0
      %4325 = vmatprep.subr.bf16.mxu0 0
      %4326 = vmatpush1.bf16.msra.mxu0 0
      %4327 = vmatprep.subr.bf16.mxu0 0
      %4328 = vmatpush1.bf16.msra.mxu0 0
      %4329 = vmatprep.mubr.bf16.mxu0 0
      %4330 = vmatmul.mubr.bf16.gmra.mrb[0].mxu0 %v4225
      %v4331 = vpop.f32.mrb[0].mxu0
      %v4332 = vadd.f32 0.0, %v4331
      %v4333 = vpop.f32.mrb[0].mxu0
      %v4334 = vpop.f32.mrb[0].mxu0
      %v4335 = vadd.f32 0.0, %v4334
      %v4336 = vpop.f32.mrb[0].mxu0
      %4337 = vmatprep.mubr.bf16.mxu0 0
      %4338 = vmatmul.mubr.bf16.gmra.mrb[0].mxu0 %v4226
      %v4339 = vpop.f32.mrb[0].mxu0
      %v4340 = vadd.f32 0.0, %v4339
      %v4341 = vpop.f32.mrb[0].mxu0
      %v4342 = vpop.f32.mrb[0].mxu0
      %v4343 = vadd.f32 0.0, %v4342
      %v4344 = vpop.f32.mrb[0].mxu0
      %4345 = vmatprep.mubr.bf16.mxu0 0
      %4346 = vmatmul.mubr.bf16.gmra.mrb[0].mxu0 %v4227
      %v4347 = vpop.f32.mrb[0].mxu0
      %v4348 = vadd.f32 0.0, %v4347
      %v4349 = vpop.f32.mrb[0].mxu0
      %v4350 = vpop.f32.mrb[0].mxu0
      %v4351 = vadd.f32 0.0, %v4350
      %v4352 = vpop.f32.mrb[0].mxu0
      %4353 = vmatprep.mubr.bf16.mxu0 0
      %4354 = vmatmul.mubr.bf16.gmra.mrb[0].mxu0 %v4228
      %v4355 = vpop.f32.mrb[0].mxu0
      %v4356 = vadd.f32 0.0, %v4355
      %v4357 = vpop.f32.mrb[0].mxu0
      %v4358 = vpop.f32.mrb[0].mxu0
      %v4359 = vadd.f32 0.0, %v4358
      %v4360 = vpop.f32.mrb[0].mxu0
      %4361 = vmatprep.mubr.bf16.mxu0 0
      %4362 = vmatmul.mubr.bf16.gmra.mrb[0].mxu0 %v4229
      %v4363 = vpop.f32.mrb[0].mxu0
      %v4364 = vadd.f32 0.0, %v4363
      %v4365 = vpop.f32.mrb[0].mxu0
      %v4366 = vpop.f32.mrb[0].mxu0
      %v4367 = vadd.f32 0.0, %v4366
      %v4368 = vpop.f32.mrb[0].mxu0
      %4369 = vmatprep.mubr.bf16.mxu0 0
      %4370 = vmatmul.mubr.bf16.gmra.mrb[0].mxu0 %v4230
      %v4371 = vpop.f32.mrb[0].mxu0
      %v4372 = vadd.f32 0.0, %v4371
      %v4373 = vpop.f32.mrb[0].mxu0
      %v4374 = vpop.f32.mrb[0].mxu0
      %v4375 = vadd.f32 0.0, %v4374
      %v4376 = vpop.f32.mrb[0].mxu0
      %4377 = vmatprep.mubr.bf16.mxu0 0
      %4378 = vmatmul.mubr.bf16.gmra.mrb[0].mxu0 %v4231
      %v4379 = vpop.f32.mrb[0].mxu0
      %v4380 = vadd.f32 0.0, %v4379
      %v4381 = vpop.f32.mrb[0].mxu0
      %v4382 = vpop.f32.mrb[0].mxu0
      %v4383 = vadd.f32 0.0, %v4382
      %v4384 = vpop.f32.mrb[0].mxu0
      %4385 = vmatprep.mubr.bf16.mxu0 0
      %4386 = vmatmul.mubr.bf16.gmra.mrb[0].mxu0 %v4232
      %v4387 = vpop.f32.mrb[0].mxu0
      %v4388 = vadd.f32 0.0, %v4387
      %v4389 = vpop.f32.mrb[0].mxu0
      %v4390 = vpop.f32.mrb[0].mxu0
      %v4391 = vadd.f32 0.0, %v4390
      %v4392 = vpop.f32.mrb[0].mxu0
      %4393 = vdwg.mxu0
      %4394 = vst [vmem:[%s411] sm:$0xff] %v4332
      %4395 = vst [vmem:[%s411 + $0x8] sm:$0xff] %v4335
      %4396 = vst [vmem:[%s411 + $0x10] sm:$0xff] %v4340
      %4397 = vst [vmem:[%s411 + $0x18] sm:$0xff] %v4343
      %4398 = vst [vmem:[%s411 + $0x20] sm:$0xff] %v4348
      %4399 = vst [vmem:[%s411 + $0x28] sm:$0xff] %v4351
      %4400 = vst [vmem:[%s411 + $0x30] sm:$0xff] %v4356
      %4401 = vst [vmem:[%s411 + $0x38] sm:$0xff] %v4359
      %4402 = vst [vmem:[%s411 + $0x40] sm:$0xff] %v4364
      %4403 = vst [vmem:[%s411 + $0x48] sm:$0xff] %v4367
      %4404 = vst [vmem:[%s411 + $0x50] sm:$0xff] %v4372
      %4405 = vst [vmem:[%s411 + $0x58] sm:$0xff] %v4375
      %4406 = vst [vmem:[%s411 + $0x60] sm:$0xff] %v4380
      %4407 = vst [vmem:[%s411 + $0x68] sm:$0xff] %v4383
      %4408 = vst [vmem:[%s411 + $0x70] sm:$0xff] %v4388
      %4409 = vst [vmem:[%s411 + $0x78] sm:$0xff] %v4391
      %s4410 = smul.u32 16, %s21
      %p4411 = scmp.lt.s32.totalorder %s4410, 31
      %s4412 = scalar_select %p4411, %s4410, 31
      %s4413 = smul.addr %s4412, 8
      %s4414 = scalar_lea.vmem %s10, %s4413
      // Predicated region
      $region61: #{edge_gcn_v2.1} parent=59 // pred_check
        %p4415 = pneg %p264
      $region62: #{edge_gcn_v2.1} parent=59 // pred_check_branch
        %4417 = sbr.rel (%p4415) target = $region64
      $region63: #{edge_gcn_v2.1} parent=59 // pred_region
        %s4418 = smul.u32 16, %s21
      $region64: #{edge_gcn_v2.1} parent=59 // pred_fallthru
        _
    $region60: #{edge_gcn_v2.1} parent=5 // pred_fallthru
      _
    %p4419 = scmp.le.s32.totalorder 2, %s16
    // Predicated region
    $region65: #{edge_gcn_v2.1} parent=5 // pred_check
      %p4420 = pneg %p4419
    $region66: #{edge_gcn_v2.1} parent=5 // pred_check_branch
      %4422 = sbr.rel (%p4420) target = $region68
    $region67: #{edge_gcn_v2.1} parent=5 // pred_region
      %s4423 = ssub.s32 %s16, 2
      // Predicated region
      $region69: #{edge_gcn_v2.1} parent=67 // pred_check
        %p4424 = pneg %p270
      $region70: #{edge_gcn_v2.1} parent=67 // pred_check_branch
        %4426 = sbr.rel (%p4424) target = $region72
      $region71: #{edge_gcn_v2.1} parent=67 // pred_region
        %s4427 = smul.u32 16, %s22
        %p4428 = scmp.lt.s32.totalorder %s4427, 31
        %s4429 = scalar_select %p4428, %s4427, 31
        %s4430 = smul.addr %s4429, 8
        %s4431 = scalar_lea.vmem %s10, %s4430
      $region72: #{edge_gcn_v2.1} parent=67 // pred_fallthru
        _
    $region68: #{edge_gcn_v2.1} parent=5 // pred_fallthru
      _
  $region6: #{edge_gcn_v2.1} parent=0 // loop_footer
    %s20 = sadd.s32 1, %s16
  $region7: #{edge_gcn_v2.1} parent=0 // loop_footer_branch
    %15 = sbr.rel target = $region3
  $region8: #{edge_gcn_v2.1} parent=0 // loop_exit
    _

</llo_original>
